<compile_context>
chip_gen: v7x
topology: tpu7x:2x2x1
jax: 0.10.0
libtpu: 0.0.40
codegen_flags: <defaults>
</compile_context>

<pallas_src>
import functools

import jax
import jax.numpy as jnp
from jax.experimental import pallas as pl
from jax.experimental.pallas import tpu as pltpu


# ----------------------------- Pallas kernel -----------------------------
def _stage_encoder_kernel(
    x_ref,
    m1_ref, b1_ref,                  # DSC1: banded (3, WC, WC) weights + folded bias
    m2_ref, b2_ref,                  # DSC2
    ca1a_ref, ca1b_ref,              # CA of CAB_dsc (pool / channel-tile folded)
    m3a_ref, m3b_ref, b3_ref,        # inner S2FB_2 DSC (2C->C, two concat halves)
    ca2a_ref, ca2b_ref,
    m4a_ref, m4b_ref, b4_ref,        # outer S2FB_2 DSC
    ca3a_ref, ca3b_ref,
    out_ref,
    *, mxu_dtype,
):
    Bt, H, WC = x_ref.shape
    f32 = jnp.float32

    # Hoisted row masks for the vertical (h +/- 1) depthwise taps: the sublane
    # roll wraps, so the wrapped row is zeroed (== zero padding).
    row = jax.lax.broadcasted_iota(jnp.int32, (1, H, WC), 1)
    m_h_lo = (row >= 1).astype(f32)        # kills the wrapped row of an "h-1" shift
    m_h_hi = (row < H - 1).astype(f32)     # kills the wrapped row of an "h+1" shift

    def hshift(v):
        """(v[h-1], v[h], v[h+1]) with zero padding via XLU sublane rolls
        (no padded VMEM scratch, no store->load round trip)."""
        up = m_h_lo * pltpu.roll(v, 1, axis=1)
        dn = m_h_hi * pltpu.roll(v, H - 1, axis=1)
        return (up, v, dn)

    def dsc(pairs, b_ref_):
        """Depthwise 3x3 + pointwise 1x1 conv as accumulated banded MXU matmuls.

        The W-direction taps and the pointwise mix are folded wrapper-side into
        block-tridiagonal (WC, WC) matrices, one per vertical tap.  `pairs` is a
        list of (h-shifted taps, (3, WC, WC) weight ref); 2C->C convs pass two
        pairs so the channel concat is never materialised."""
        acc = jnp.zeros((Bt * H, WC), f32)
        for taps, m_ref_ in pairs:
            for dh in range(3):
                a = taps[dh].reshape(Bt * H, WC).astype(mxu_dtype)
                acc = acc + jnp.dot(a, m_ref_[dh],
                                    preferred_element_type=jnp.float32)
        return acc.reshape(Bt, H, WC) + b_ref_[...]

    def ca(act, a_ref_, s_ref_):
        """CALayer: avg-pool -> 1x1 -> ReLU -> 1x1 -> sigmoid -> scale.
        Pooling over (H, W) and the channel re-tiling are folded into the FC
        weights wrapper-side, so everything stays lane-dense."""
        pooled = jnp.sum(act, axis=1)                                # (Bt, WC)
        z = jnp.maximum(jnp.dot(pooled, a_ref_[...],
                                preferred_element_type=jnp.float32), 0.0)
        logits = jnp.dot(z, s_ref_[...], preferred_element_type=jnp.float32)
        scale = 0.5 * (jnp.tanh(0.5 * logits) + 1.0)                 # exact sigmoid
        return act * scale[:, None, :]

    x = x_ref[...]                     # (Bt, H, W*C), lane-dense
    xs = hshift(x)                     # shared by DSC1 and both S2FB_2 concat halves

    # ---- CAB_dsc body: DSC1 -> ReLU -> DSC2 ----
    act1 = jnp.maximum(dsc([(xs, m1_ref)], b1_ref), 0.0)
    body = dsc([(hshift(act1), m2_ref)], b2_ref)

    # ---- CA on the body output ----
    r1 = ca(body, ca1a_ref, ca1b_ref)

    # ---- inner S2FB_2: DSC(cat[r1, x]) -> CA -> + r1 ----
    p3 = dsc([(hshift(r1), m3a_ref), (xs, m3b_ref)], b3_ref)
    r2 = ca(p3, ca2a_ref, ca2b_ref) + r1                 # en_CAB1_FEA

    # ---- outer S2FB_2: DSC(cat[x, r2]) -> CA -> + x ----
    p4 = dsc([(xs, m4a_ref), (hshift(r2), m4b_ref)], b4_ref)
    out_ref[...] = ca(p4, ca3a_ref, ca3b_ref) + x


# --------------------------- wrapper / packing ---------------------------
def pack_stage_encoder_params(params, H, W, *, mxu_dtype=jnp.float32):
    """Precompute the banded / folded MXU weights outside the kernel.

    Call once and reuse: the kron expansion must not sit on the per-call path.
    `mxu_dtype=jnp.bfloat16` is recommended on v6e/v7x (bf16-native MXU, half
    the weight DMA bytes); keep f32 on v5e or when bit-accuracy matters."""
    f32 = jnp.float32
    C = params["dw1"].shape[-1]
    WC = W * C

    # Horizontal-shift matrices for the three W-direction taps; boundary zero
    # padding is implicit (the out-of-range blocks are simply absent).
    shift = [jnp.eye(W, k=1, dtype=f32),      # dw = 0 : input column w-1
             jnp.eye(W, dtype=f32),           # dw = 1 : input column w
             jnp.eye(W, k=-1, dtype=f32)]     # dw = 2 : input column w+1
    eye_c = jnp.eye(C, dtype=f32)
    pool = jnp.tile(eye_c, (W, 1)) / float(H * W)   # folds the (h, w) mean

    def banded(dw_k, pw):
        """(3,3,Cg) depthwise taps + (Cg,C) pointwise -> (3, W*Cg, W*C) banded
        block-tridiagonal matrices (one per vertical tap dh):
        M[dh][w_in*Cg + ci, w*C + co] = k[dh, w_in - w + 1, ci] * pw[ci, co]."""
        dw_k = dw_k.astype(f32)
        pw = pw.astype(f32)
        mats = []
        for dh in range(3):
            m = jnp.zeros((W * dw_k.shape[-1], WC), f32)
            for dwi in range(3):
                m = m + jnp.kron(shift[dwi], dw_k[dh, dwi][:, None] * pw)
            mats.append(m)
        return jnp.stack(mats).astype(mxu_dtype)

    def tile_row(v):                        # (C,) -> (1, W*C) lane-tiled bias
        return jnp.tile(v.astype(f32), W).reshape(1, WC)

    def dsc_c(dw, db, pw, pb):              # C -> C DSC (depthwise bias folded)
        return banded(dw, pw), tile_row(db @ pw + pb)

    def dsc_2c(dw, db, pw, pb):             # 2C -> C DSC, split into concat halves
        ma = banded(dw[:, :, :C], pw[:C, :])
        mb = banded(dw[:, :, C:], pw[C:, :])
        return ma, mb, tile_row(db @ pw + pb)

    def ca_w(wa, wb):                       # fold pool / channel-tile matrices
        return pool @ wa.astype(f32), jnp.tile(wb.astype(f32), (1, W))

    m1, b1 = dsc_c(params["dw1"], params["db1"], params["pw1"], params["pb1"])
    m2, b2 = dsc_c(params["dw2"], params["db2"], params["pw2"], params["pb2"])
    ca1a, ca1b = ca_w(params["ca1a"], params["ca1b"])
    m3a, m3b, b3 = dsc_2c(params["dw3"], params["db3"], params["pw3"], params["pb3"])
    ca2a, ca2b = ca_w(params["ca2a"], params["ca2b"])
    m4a, m4b, b4 = dsc_2c(params["dw4"], params["db4"], params["pw4"], params["pb4"])
    ca3a, ca3b = ca_w(params["ca3a"], params["ca3b"])

    return (m1, b1, m2, b2, ca1a, ca1b,
            m3a, m3b, b3, ca2a, ca2b,
            m4a, m4b, b4, ca3a, ca3b)


def stage_encoder_forward(x, packed, *, batch_block=None):
    """x: (B, H, W, C) NHWC float32; packed: pack_stage_encoder_params(...)."""
    B, H, W, C = x.shape
    WC = W * C
    if batch_block is None:
        # >= 2 "parallel" grid steps by default so dual-TensorCore parts (v7x)
        # can shard the batch; every step still has full-lane (WC) tiles.
        batch_block = max(1, B // 2)
    assert B % batch_block == 0, (B, batch_block)
    n_blocks = B // batch_block

    mxu_dtype = packed[0].dtype
    x_ld = x.reshape(B, H, WC)                   # lane-dense activation layout

    kernel = functools.partial(_stage_encoder_kernel, mxu_dtype=mxu_dtype)

    act_spec = pl.BlockSpec((batch_block, H, WC), lambda b: (b, 0, 0))

    def const_spec(p):                           # whole-array weight block
        return pl.BlockSpec(p.shape, lambda b, _nd=p.ndim: (0,) * _nd)

    # Advisory cost estimate so XLA schedules this small custom call sensibly.
    n_matmuls = 18                               # 3 per C->C DSC, 6 per 2C->C DSC
    flops = 2 * B * H * WC * WC * n_matmuls
    bytes_accessed = (2 * int(x_ld.size) * x_ld.dtype.itemsize
                      + sum(int(p.size) * p.dtype.itemsize for p in packed))
    cost = pl.CostEstimate(flops=flops, transcendentals=3 * B * WC,
                           bytes_accessed=bytes_accessed)

    out_ld = pl.pallas_call(
        kernel,
        out_shape=jax.ShapeDtypeStruct((B, H, WC), jnp.float32),
        grid=(n_blocks,),
        in_specs=[act_spec] + [const_spec(p) for p in packed],
        out_specs=act_spec,
        compiler_params=pltpu.CompilerParams(
            dimension_semantics=("parallel",),
            vmem_limit_bytes=32 * 1024 * 1024,
        ),
        cost_estimate=cost,
    )(x_ld, *packed)

    return out_ld.reshape(B, H, W, C)


# --------------------------- plain-JAX reference ---------------------------
def _dsc_ref(x, dw, db, pw, pb):
    cg = x.shape[-1]
    y = jax.lax.conv_general_dilated(
        x, dw.reshape(3, 3, 1, cg), (1, 1), [(1, 1), (1, 1)],
        dimension_numbers=("NHWC", "HWIO", "NHWC"), feature_group_count=cg)
    y = y + db.reshape(1, 1, 1, cg)
    return jnp.einsum("bhwc,cd->bhwd", y, pw) + pb.reshape(1, 1, 1, -1)


def _ca_ref(x, wa, wb):
    y = jnp.mean(x, axis=(1, 2))
    z = jnp.maximum(y @ wa, 0.0)
    s = jax.nn.sigmoid(z @ wb)
    return x * s[:, None, None, :]


def _s2fb_ref(x1, x2, dw, db, pw, pb, wa, wb):
    fea = _dsc_ref(jnp.concatenate([x1, x2], axis=-1), dw, db, pw, pb)
    return _ca_ref(fea, wa, wb) + x1


def stage_encoder_reference(x, p):
    r = _dsc_ref(x, p["dw1"], p["db1"], p["pw1"], p["pb1"])
    r = jnp.maximum(r, 0.0)
    r = _dsc_ref(r, p["dw2"], p["db2"], p["pw2"], p["pb2"])
    r = _ca_ref(r, p["ca1a"], p["ca1b"])
    cab = _s2fb_ref(r, x, p["dw3"], p["db3"], p["pw3"], p["pb3"],
                    p["ca2a"], p["ca2b"])
    return _s2fb_ref(x, cab, p["dw4"], p["db4"], p["pw4"], p["pb4"],
                     p["ca3a"], p["ca3b"])


# --------------------------------- main ---------------------------------
if __name__ == "__main__":
    n_feat, reduction, B, H, W = 16, 4, 2, 8, 8
    C, C2, Cm = n_feat, 2 * n_feat, n_feat // reduction

    key = jax.random.PRNGKey(0)
    ks = jax.random.split(key, 24)

    def init(k, shape, scale=0.1):
        return scale * jax.random.normal(k, shape, jnp.float32)

    params = dict(
        dw1=init(ks[0], (3, 3, C)), db1=init(ks[1], (C,)),
        pw1=init(ks[2], (C, C)), pb1=init(ks[3], (C,)),
        dw2=init(ks[4], (3, 3, C)), db2=init(ks[5], (C,)),
        pw2=init(ks[6], (C, C)), pb2=init(ks[7], (C,)),
        ca1a=init(ks[8], (C, Cm)), ca1b=init(ks[9], (Cm, C)),
        dw3=init(ks[10], (3, 3, C2)), db3=init(ks[11], (C2,)),
        pw3=init(ks[12], (C2, C)), pb3=init(ks[13], (C,)),
        ca2a=init(ks[14], (C, Cm)), ca2b=init(ks[15], (Cm, C)),
        dw4=init(ks[16], (3, 3, C2)), db4=init(ks[17], (C2,)),
        pw4=init(ks[18], (C2, C)), pb4=init(ks[19], (C,)),
        ca3a=init(ks[20], (C, Cm)), ca3b=init(ks[21], (Cm, C)),
    )
    x = jax.random.normal(ks[22], (B, H, W, C), jnp.float32)

    ref = stage_encoder_reference(x, params)

    # f32 matmul operands (portable default, v5e-safe).  Pack once, reuse.
    packed_f32 = pack_stage_encoder_params(params, H, W)
    out = stage_encoder_forward(x, packed_f32)
    jax.block_until_ready(out)
    assert out.shape == ref.shape, (out.shape, ref.shape)
    # Sigmoid is exact now; the remaining tolerance covers default-precision
    # MXU/conv operand rounding present in both the kernel and the reference.
    if not jnp.allclose(out, ref, rtol=2e-3, atol=2e-3):
        raise AssertionError(
            f"f32 mismatch, max abs err = {float(jnp.max(jnp.abs(out - ref)))}")

    # bf16 matmul operands (recommended for v6e/v7x: bf16-native MXU, half the
    # weight DMA bytes); accumulation stays f32 -> looser numeric check.
    packed_bf16 = pack_stage_encoder_params(params, H, W, mxu_dtype=jnp.bfloat16)
    out_bf16 = stage_encoder_forward(x, packed_bf16)
    jax.block_until_ready(out_bf16)
    if not jnp.allclose(out_bf16, ref, rtol=5e-2, atol=5e-2):
        raise AssertionError(
            f"bf16 mismatch, max abs err = {float(jnp.max(jnp.abs(out_bf16 - ref)))}")

    print("KERNEL_OK")
</pallas_src>

<mosaic_0001>
module attributes {stable_mosaic.version = 11 : i64} {
  func.func @_stage_encoder_kernel(%arg0: i32, %arg1: memref<1x8x128xf32, #tpu.memory_space<vmem>>, %arg2: memref<3x128x128xf32, #tpu.memory_space<vmem>>, %arg3: memref<1x128xf32, #tpu.memory_space<vmem>>, %arg4: memref<3x128x128xf32, #tpu.memory_space<vmem>>, %arg5: memref<1x128xf32, #tpu.memory_space<vmem>>, %arg6: memref<128x4xf32, #tpu.memory_space<vmem>>, %arg7: memref<4x128xf32, #tpu.memory_space<vmem>>, %arg8: memref<3x128x128xf32, #tpu.memory_space<vmem>>, %arg9: memref<3x128x128xf32, #tpu.memory_space<vmem>>, %arg10: memref<1x128xf32, #tpu.memory_space<vmem>>, %arg11: memref<128x4xf32, #tpu.memory_space<vmem>>, %arg12: memref<4x128xf32, #tpu.memory_space<vmem>>, %arg13: memref<3x128x128xf32, #tpu.memory_space<vmem>>, %arg14: memref<3x128x128xf32, #tpu.memory_space<vmem>>, %arg15: memref<1x128xf32, #tpu.memory_space<vmem>>, %arg16: memref<128x4xf32, #tpu.memory_space<vmem>>, %arg17: memref<4x128xf32, #tpu.memory_space<vmem>>, %arg18: memref<1x8x128xf32, #tpu.memory_space<vmem>>) attributes {dimension_semantics = [#tpu.dimension_semantics<parallel>], iteration_bounds = array<i64: 2>, scalar_prefetch = 0 : i64, scratch_operands = 0 : i64, tpu.core_type = #tpu.core_type<tc>, window_params = [{transform_indices = @transform_0, window_bounds = array<i64: 1, 8, 128>}, {pipeline_mode = #tpu.pipeline_mode<synchronous>, transform_indices = @transform_1, window_bounds = array<i64: 3, 128, 128>}, {pipeline_mode = #tpu.pipeline_mode<synchronous>, transform_indices = @transform_2, window_bounds = array<i64: 1, 128>}, {pipeline_mode = #tpu.pipeline_mode<synchronous>, transform_indices = @transform_3, window_bounds = array<i64: 3, 128, 128>}, {pipeline_mode = #tpu.pipeline_mode<synchronous>, transform_indices = @transform_4, window_bounds = array<i64: 1, 128>}, {pipeline_mode = #tpu.pipeline_mode<synchronous>, transform_indices = @transform_5, window_bounds = array<i64: 128, 4>}, {pipeline_mode = #tpu.pipeline_mode<synchronous>, transform_indices = @transform_6, window_bounds = array<i64: 4, 128>}, {pipeline_mode = #tpu.pipeline_mode<synchronous>, transform_indices = @transform_7, window_bounds = array<i64: 3, 128, 128>}, {pipeline_mode = #tpu.pipeline_mode<synchronous>, transform_indices = @transform_8, window_bounds = array<i64: 3, 128, 128>}, {pipeline_mode = #tpu.pipeline_mode<synchronous>, transform_indices = @transform_9, window_bounds = array<i64: 1, 128>}, {pipeline_mode = #tpu.pipeline_mode<synchronous>, transform_indices = @transform_10, window_bounds = array<i64: 128, 4>}, {pipeline_mode = #tpu.pipeline_mode<synchronous>, transform_indices = @transform_11, window_bounds = array<i64: 4, 128>}, {pipeline_mode = #tpu.pipeline_mode<synchronous>, transform_indices = @transform_12, window_bounds = array<i64: 3, 128, 128>}, {pipeline_mode = #tpu.pipeline_mode<synchronous>, transform_indices = @transform_13, window_bounds = array<i64: 3, 128, 128>}, {pipeline_mode = #tpu.pipeline_mode<synchronous>, transform_indices = @transform_14, window_bounds = array<i64: 1, 128>}, {pipeline_mode = #tpu.pipeline_mode<synchronous>, transform_indices = @transform_15, window_bounds = array<i64: 128, 4>}, {pipeline_mode = #tpu.pipeline_mode<synchronous>, transform_indices = @transform_16, window_bounds = array<i64: 4, 128>}, {transform_indices = @transform_17, window_bounds = array<i64: 1, 8, 128>}]} {
    %0 = tpu.iota {dimensions = array<i32: 1>} : vector<1x8x128xi32>
    %c1_i32 = arith.constant 1 : i32
    %1 = vector.broadcast %c1_i32 : i32 to vector<1x8x128xi32>
    %2 = arith.cmpi sge, %0, %1 : vector<1x8x128xi32>
    %3 = arith.extui %2 : vector<1x8x128xi1> to vector<1x8x128xi32>
    %4 = arith.sitofp %3 : vector<1x8x128xi32> to vector<1x8x128xf32>
    %c7_i32 = arith.constant 7 : i32
    %5 = vector.broadcast %c7_i32 : i32 to vector<1x8x128xi32>
    %6 = arith.cmpi slt, %0, %5 : vector<1x8x128xi32>
    %7 = arith.extui %6 : vector<1x8x128xi1> to vector<1x8x128xi32>
    %8 = arith.sitofp %7 : vector<1x8x128xi32> to vector<1x8x128xf32>
    %c0 = arith.constant 0 : index
    %c0_0 = arith.constant 0 : index
    %c0_1 = arith.constant 0 : index
    %9 = vector.load %arg1[%c0, %c0_0, %c0_1] : memref<1x8x128xf32, #tpu.memory_space<vmem>>, vector<1x8x128xf32>
    %c1_i32_2 = arith.constant 1 : i32
    %10 = tpu.dynamic_rotate %9 by %c1_i32_2 dim 1 : vector<1x8x128xf32>, i32 -> vector<1x8x128xf32>
    %11 = arith.mulf %4, %10 : vector<1x8x128xf32>
    %c7_i32_3 = arith.constant 7 : i32
    %12 = tpu.dynamic_rotate %9 by %c7_i32_3 dim 1 : vector<1x8x128xf32>, i32 -> vector<1x8x128xf32>
    %13 = arith.mulf %8, %12 : vector<1x8x128xf32>
    %cst = arith.constant 0.000000e+00 : f32
    %14 = vector.broadcast %cst : f32 to vector<8x128xf32>
    %15 = vector.shape_cast %11 : vector<1x8x128xf32> to vector<8x128xf32>
    %c0_4 = arith.constant 0 : index
    %c0_5 = arith.constant 0 : index
    %c0_6 = arith.constant 0 : index
    %16 = vector.load %arg2[%c0_4, %c0_5, %c0_6] : memref<3x128x128xf32, #tpu.memory_space<vmem>>, vector<1x128x128xf32>
    %17 = vector.shape_cast %16 : vector<1x128x128xf32> to vector<128x128xf32>
    %cst_7 = arith.constant dense<0.000000e+00> : vector<8x128xf32>
    %18 = tpu.matmul %15, %17, %cst_7 {dimension_numbers = #tpu.dot_dimension_numbers<[1], [0], [0], [1], [0, 0, 1, 1], [], []>} : vector<8x128xf32>, vector<128x128xf32>, vector<8x128xf32> -> vector<8x128xf32>
    %19 = arith.addf %14, %18 : vector<8x128xf32>
    %20 = vector.shape_cast %9 : vector<1x8x128xf32> to vector<8x128xf32>
    %c1 = arith.constant 1 : index
    %c0_8 = arith.constant 0 : index
    %c0_9 = arith.constant 0 : index
    %21 = vector.load %arg2[%c1, %c0_8, %c0_9] : memref<3x128x128xf32, #tpu.memory_space<vmem>>, vector<1x128x128xf32>
    %22 = vector.shape_cast %21 : vector<1x128x128xf32> to vector<128x128xf32>
    %cst_10 = arith.constant dense<0.000000e+00> : vector<8x128xf32>
    %23 = tpu.matmul %20, %22, %cst_10 {dimension_numbers = #tpu.dot_dimension_numbers<[1], [0], [0], [1], [0, 0, 1, 1], [], []>} : vector<8x128xf32>, vector<128x128xf32>, vector<8x128xf32> -> vector<8x128xf32>
    %24 = arith.addf %19, %23 : vector<8x128xf32>
    %25 = vector.shape_cast %13 : vector<1x8x128xf32> to vector<8x128xf32>
    %c2 = arith.constant 2 : index
    %c0_11 = arith.constant 0 : index
    %c0_12 = arith.constant 0 : index
    %26 = vector.load %arg2[%c2, %c0_11, %c0_12] : memref<3x128x128xf32, #tpu.memory_space<vmem>>, vector<1x128x128xf32>
    %27 = vector.shape_cast %26 : vector<1x128x128xf32> to vector<128x128xf32>
    %cst_13 = arith.constant dense<0.000000e+00> : vector<8x128xf32>
    %28 = tpu.matmul %25, %27, %cst_13 {dimension_numbers = #tpu.dot_dimension_numbers<[1], [0], [0], [1], [0, 0, 1, 1], [], []>} : vector<8x128xf32>, vector<128x128xf32>, vector<8x128xf32> -> vector<8x128xf32>
    %29 = arith.addf %24, %28 : vector<8x128xf32>
    %30 = vector.shape_cast %29 : vector<8x128xf32> to vector<1x8x128xf32>
    %c0_14 = arith.constant 0 : index
    %c0_15 = arith.constant 0 : index
    %31 = vector.load %arg3[%c0_14, %c0_15] : memref<1x128xf32, #tpu.memory_space<vmem>>, vector<1x128xf32>
    %32 = vector.shape_cast %31 : vector<1x128xf32> to vector<1x1x128xf32>
    %33 = vector.broadcast %32 : vector<1x1x128xf32> to vector<1x8x128xf32>
    %34 = arith.addf %30, %33 : vector<1x8x128xf32>
    %cst_16 = arith.constant 0.000000e+00 : f32
    %35 = vector.broadcast %cst_16 : f32 to vector<1x8x128xf32>
    %36 = arith.maximumf %34, %35 : vector<1x8x128xf32>
    %c1_i32_17 = arith.constant 1 : i32
    %37 = tpu.dynamic_rotate %36 by %c1_i32_17 dim 1 : vector<1x8x128xf32>, i32 -> vector<1x8x128xf32>
    %38 = arith.mulf %4, %37 : vector<1x8x128xf32>
    %c7_i32_18 = arith.constant 7 : i32
    %39 = tpu.dynamic_rotate %36 by %c7_i32_18 dim 1 : vector<1x8x128xf32>, i32 -> vector<1x8x128xf32>
    %40 = arith.mulf %8, %39 : vector<1x8x128xf32>
    %cst_19 = arith.constant 0.000000e+00 : f32
    %41 = vector.broadcast %cst_19 : f32 to vector<8x128xf32>
    %42 = vector.shape_cast %38 : vector<1x8x128xf32> to vector<8x128xf32>
    %c0_20 = arith.constant 0 : index
    %c0_21 = arith.constant 0 : index
    %c0_22 = arith.constant 0 : index
    %43 = vector.load %arg4[%c0_20, %c0_21, %c0_22] : memref<3x128x128xf32, #tpu.memory_space<vmem>>, vector<1x128x128xf32>
    %44 = vector.shape_cast %43 : vector<1x128x128xf32> to vector<128x128xf32>
    %cst_23 = arith.constant dense<0.000000e+00> : vector<8x128xf32>
    %45 = tpu.matmul %42, %44, %cst_23 {dimension_numbers = #tpu.dot_dimension_numbers<[1], [0], [0], [1], [0, 0, 1, 1], [], []>} : vector<8x128xf32>, vector<128x128xf32>, vector<8x128xf32> -> vector<8x128xf32>
    %46 = arith.addf %41, %45 : vector<8x128xf32>
    %47 = vector.shape_cast %36 : vector<1x8x128xf32> to vector<8x128xf32>
    %c1_24 = arith.constant 1 : index
    %c0_25 = arith.constant 0 : index
    %c0_26 = arith.constant 0 : index
    %48 = vector.load %arg4[%c1_24, %c0_25, %c0_26] : memref<3x128x128xf32, #tpu.memory_space<vmem>>, vector<1x128x128xf32>
    %49 = vector.shape_cast %48 : vector<1x128x128xf32> to vector<128x128xf32>
    %cst_27 = arith.constant dense<0.000000e+00> : vector<8x128xf32>
    %50 = tpu.matmul %47, %49, %cst_27 {dimension_numbers = #tpu.dot_dimension_numbers<[1], [0], [0], [1], [0, 0, 1, 1], [], []>} : vector<8x128xf32>, vector<128x128xf32>, vector<8x128xf32> -> vector<8x128xf32>
    %51 = arith.addf %46, %50 : vector<8x128xf32>
    %52 = vector.shape_cast %40 : vector<1x8x128xf32> to vector<8x128xf32>
    %c2_28 = arith.constant 2 : index
    %c0_29 = arith.constant 0 : index
    %c0_30 = arith.constant 0 : index
    %53 = vector.load %arg4[%c2_28, %c0_29, %c0_30] : memref<3x128x128xf32, #tpu.memory_space<vmem>>, vector<1x128x128xf32>
    %54 = vector.shape_cast %53 : vector<1x128x128xf32> to vector<128x128xf32>
    %cst_31 = arith.constant dense<0.000000e+00> : vector<8x128xf32>
    %55 = tpu.matmul %52, %54, %cst_31 {dimension_numbers = #tpu.dot_dimension_numbers<[1], [0], [0], [1], [0, 0, 1, 1], [], []>} : vector<8x128xf32>, vector<128x128xf32>, vector<8x128xf32> -> vector<8x128xf32>
    %56 = arith.addf %51, %55 : vector<8x128xf32>
    %57 = vector.shape_cast %56 : vector<8x128xf32> to vector<1x8x128xf32>
    %c0_32 = arith.constant 0 : index
    %c0_33 = arith.constant 0 : index
    %58 = vector.load %arg5[%c0_32, %c0_33] : memref<1x128xf32, #tpu.memory_space<vmem>>, vector<1x128xf32>
    %59 = vector.shape_cast %58 : vector<1x128xf32> to vector<1x1x128xf32>
    %60 = vector.broadcast %59 : vector<1x1x128xf32> to vector<1x8x128xf32>
    %61 = arith.addf %57, %60 : vector<1x8x128xf32>
    %cst_34 = arith.constant dense<0.000000e+00> : vector<1x128xf32>
    %62 = vector.multi_reduction <add>, %61, %cst_34 [1] : vector<1x8x128xf32> to vector<1x128xf32>
    %c0_35 = arith.constant 0 : index
    %c0_36 = arith.constant 0 : index
    %63 = vector.load %arg6[%c0_35, %c0_36] : memref<128x4xf32, #tpu.memory_space<vmem>>, vector<128x4xf32>
    %cst_37 = arith.constant dense<0.000000e+00> : vector<1x4xf32>
    %64 = tpu.matmul %62, %63, %cst_37 {dimension_numbers = #tpu.dot_dimension_numbers<[1], [0], [0], [1], [0, 0, 1, 1], [], []>} : vector<1x128xf32>, vector<128x4xf32>, vector<1x4xf32> -> vector<1x4xf32>
    %cst_38 = arith.constant 0.000000e+00 : f32
    %65 = vector.broadcast %cst_38 : f32 to vector<1x4xf32>
    %66 = arith.maximumf %64, %65 : vector<1x4xf32>
    %c0_39 = arith.constant 0 : index
    %c0_40 = arith.constant 0 : index
    %67 = vector.load %arg7[%c0_39, %c0_40] : memref<4x128xf32, #tpu.memory_space<vmem>>, vector<4x128xf32>
    %cst_41 = arith.constant dense<0.000000e+00> : vector<1x128xf32>
    %68 = tpu.matmul %66, %67, %cst_41 {dimension_numbers = #tpu.dot_dimension_numbers<[1], [0], [0], [1], [0, 0, 1, 1], [], []>} : vector<1x4xf32>, vector<4x128xf32>, vector<1x128xf32> -> vector<1x128xf32>
    %cst_42 = arith.constant 5.000000e-01 : f32
    %69 = vector.broadcast %cst_42 : f32 to vector<1x128xf32>
    %70 = arith.mulf %69, %68 : vector<1x128xf32>
    %71 = math.tanh %70 : vector<1x128xf32>
    %cst_43 = arith.constant 1.000000e+00 : f32
    %72 = vector.broadcast %cst_43 : f32 to vector<1x128xf32>
    %73 = arith.addf %71, %72 : vector<1x128xf32>
    %cst_44 = arith.constant 5.000000e-01 : f32
    %74 = vector.broadcast %cst_44 : f32 to vector<1x128xf32>
    %75 = arith.mulf %74, %73 : vector<1x128xf32>
    %76 = vector.shape_cast %75 : vector<1x128xf32> to vector<1x1x128xf32>
    %77 = vector.broadcast %76 : vector<1x1x128xf32> to vector<1x8x128xf32>
    %78 = arith.mulf %61, %77 : vector<1x8x128xf32>
    %c1_i32_45 = arith.constant 1 : i32
    %79 = tpu.dynamic_rotate %78 by %c1_i32_45 dim 1 : vector<1x8x128xf32>, i32 -> vector<1x8x128xf32>
    %80 = arith.mulf %4, %79 : vector<1x8x128xf32>
    %c7_i32_46 = arith.constant 7 : i32
    %81 = tpu.dynamic_rotate %78 by %c7_i32_46 dim 1 : vector<1x8x128xf32>, i32 -> vector<1x8x128xf32>
    %82 = arith.mulf %8, %81 : vector<1x8x128xf32>
    %cst_47 = arith.constant 0.000000e+00 : f32
    %83 = vector.broadcast %cst_47 : f32 to vector<8x128xf32>
    %84 = vector.shape_cast %80 : vector<1x8x128xf32> to vector<8x128xf32>
    %c0_48 = arith.constant 0 : index
    %c0_49 = arith.constant 0 : index
    %c0_50 = arith.constant 0 : index
    %85 = vector.load %arg8[%c0_48, %c0_49, %c0_50] : memref<3x128x128xf32, #tpu.memory_space<vmem>>, vector<1x128x128xf32>
    %86 = vector.shape_cast %85 : vector<1x128x128xf32> to vector<128x128xf32>
    %cst_51 = arith.constant dense<0.000000e+00> : vector<8x128xf32>
    %87 = tpu.matmul %84, %86, %cst_51 {dimension_numbers = #tpu.dot_dimension_numbers<[1], [0], [0], [1], [0, 0, 1, 1], [], []>} : vector<8x128xf32>, vector<128x128xf32>, vector<8x128xf32> -> vector<8x128xf32>
    %88 = arith.addf %83, %87 : vector<8x128xf32>
    %89 = vector.shape_cast %78 : vector<1x8x128xf32> to vector<8x128xf32>
    %c1_52 = arith.constant 1 : index
    %c0_53 = arith.constant 0 : index
    %c0_54 = arith.constant 0 : index
    %90 = vector.load %arg8[%c1_52, %c0_53, %c0_54] : memref<3x128x128xf32, #tpu.memory_space<vmem>>, vector<1x128x128xf32>
    %91 = vector.shape_cast %90 : vector<1x128x128xf32> to vector<128x128xf32>
    %cst_55 = arith.constant dense<0.000000e+00> : vector<8x128xf32>
    %92 = tpu.matmul %89, %91, %cst_55 {dimension_numbers = #tpu.dot_dimension_numbers<[1], [0], [0], [1], [0, 0, 1, 1], [], []>} : vector<8x128xf32>, vector<128x128xf32>, vector<8x128xf32> -> vector<8x128xf32>
    %93 = arith.addf %88, %92 : vector<8x128xf32>
    %94 = vector.shape_cast %82 : vector<1x8x128xf32> to vector<8x128xf32>
    %c2_56 = arith.constant 2 : index
    %c0_57 = arith.constant 0 : index
    %c0_58 = arith.constant 0 : index
    %95 = vector.load %arg8[%c2_56, %c0_57, %c0_58] : memref<3x128x128xf32, #tpu.memory_space<vmem>>, vector<1x128x128xf32>
    %96 = vector.shape_cast %95 : vector<1x128x128xf32> to vector<128x128xf32>
    %cst_59 = arith.constant dense<0.000000e+00> : vector<8x128xf32>
    %97 = tpu.matmul %94, %96, %cst_59 {dimension_numbers = #tpu.dot_dimension_numbers<[1], [0], [0], [1], [0, 0, 1, 1], [], []>} : vector<8x128xf32>, vector<128x128xf32>, vector<8x128xf32> -> vector<8x128xf32>
    %98 = arith.addf %93, %97 : vector<8x128xf32>
    %99 = vector.shape_cast %11 : vector<1x8x128xf32> to vector<8x128xf32>
    %c0_60 = arith.constant 0 : index
    %c0_61 = arith.constant 0 : index
    %c0_62 = arith.constant 0 : index
    %100 = vector.load %arg9[%c0_60, %c0_61, %c0_62] : memref<3x128x128xf32, #tpu.memory_space<vmem>>, vector<1x128x128xf32>
    %101 = vector.shape_cast %100 : vector<1x128x128xf32> to vector<128x128xf32>
    %cst_63 = arith.constant dense<0.000000e+00> : vector<8x128xf32>
    %102 = tpu.matmul %99, %101, %cst_63 {dimension_numbers = #tpu.dot_dimension_numbers<[1], [0], [0], [1], [0, 0, 1, 1], [], []>} : vector<8x128xf32>, vector<128x128xf32>, vector<8x128xf32> -> vector<8x128xf32>
    %103 = arith.addf %98, %102 : vector<8x128xf32>
    %104 = vector.shape_cast %9 : vector<1x8x128xf32> to vector<8x128xf32>
    %c1_64 = arith.constant 1 : index
    %c0_65 = arith.constant 0 : index
    %c0_66 = arith.constant 0 : index
    %105 = vector.load %arg9[%c1_64, %c0_65, %c0_66] : memref<3x128x128xf32, #tpu.memory_space<vmem>>, vector<1x128x128xf32>
    %106 = vector.shape_cast %105 : vector<1x128x128xf32> to vector<128x128xf32>
    %cst_67 = arith.constant dense<0.000000e+00> : vector<8x128xf32>
    %107 = tpu.matmul %104, %106, %cst_67 {dimension_numbers = #tpu.dot_dimension_numbers<[1], [0], [0], [1], [0, 0, 1, 1], [], []>} : vector<8x128xf32>, vector<128x128xf32>, vector<8x128xf32> -> vector<8x128xf32>
    %108 = arith.addf %103, %107 : vector<8x128xf32>
    %109 = vector.shape_cast %13 : vector<1x8x128xf32> to vector<8x128xf32>
    %c2_68 = arith.constant 2 : index
    %c0_69 = arith.constant 0 : index
    %c0_70 = arith.constant 0 : index
    %110 = vector.load %arg9[%c2_68, %c0_69, %c0_70] : memref<3x128x128xf32, #tpu.memory_space<vmem>>, vector<1x128x128xf32>
    %111 = vector.shape_cast %110 : vector<1x128x128xf32> to vector<128x128xf32>
    %cst_71 = arith.constant dense<0.000000e+00> : vector<8x128xf32>
    %112 = tpu.matmul %109, %111, %cst_71 {dimension_numbers = #tpu.dot_dimension_numbers<[1], [0], [0], [1], [0, 0, 1, 1], [], []>} : vector<8x128xf32>, vector<128x128xf32>, vector<8x128xf32> -> vector<8x128xf32>
    %113 = arith.addf %108, %112 : vector<8x128xf32>
    %114 = vector.shape_cast %113 : vector<8x128xf32> to vector<1x8x128xf32>
    %c0_72 = arith.constant 0 : index
    %c0_73 = arith.constant 0 : index
    %115 = vector.load %arg10[%c0_72, %c0_73] : memref<1x128xf32, #tpu.memory_space<vmem>>, vector<1x128xf32>
    %116 = vector.shape_cast %115 : vector<1x128xf32> to vector<1x1x128xf32>
    %117 = vector.broadcast %116 : vector<1x1x128xf32> to vector<1x8x128xf32>
    %118 = arith.addf %114, %117 : vector<1x8x128xf32>
    %cst_74 = arith.constant dense<0.000000e+00> : vector<1x128xf32>
    %119 = vector.multi_reduction <add>, %118, %cst_74 [1] : vector<1x8x128xf32> to vector<1x128xf32>
    %c0_75 = arith.constant 0 : index
    %c0_76 = arith.constant 0 : index
    %120 = vector.load %arg11[%c0_75, %c0_76] : memref<128x4xf32, #tpu.memory_space<vmem>>, vector<128x4xf32>
    %cst_77 = arith.constant dense<0.000000e+00> : vector<1x4xf32>
    %121 = tpu.matmul %119, %120, %cst_77 {dimension_numbers = #tpu.dot_dimension_numbers<[1], [0], [0], [1], [0, 0, 1, 1], [], []>} : vector<1x128xf32>, vector<128x4xf32>, vector<1x4xf32> -> vector<1x4xf32>
    %cst_78 = arith.constant 0.000000e+00 : f32
    %122 = vector.broadcast %cst_78 : f32 to vector<1x4xf32>
    %123 = arith.maximumf %121, %122 : vector<1x4xf32>
    %c0_79 = arith.constant 0 : index
    %c0_80 = arith.constant 0 : index
    %124 = vector.load %arg12[%c0_79, %c0_80] : memref<4x128xf32, #tpu.memory_space<vmem>>, vector<4x128xf32>
    %cst_81 = arith.constant dense<0.000000e+00> : vector<1x128xf32>
    %125 = tpu.matmul %123, %124, %cst_81 {dimension_numbers = #tpu.dot_dimension_numbers<[1], [0], [0], [1], [0, 0, 1, 1], [], []>} : vector<1x4xf32>, vector<4x128xf32>, vector<1x128xf32> -> vector<1x128xf32>
    %cst_82 = arith.constant 5.000000e-01 : f32
    %126 = vector.broadcast %cst_82 : f32 to vector<1x128xf32>
    %127 = arith.mulf %126, %125 : vector<1x128xf32>
    %128 = math.tanh %127 : vector<1x128xf32>
    %cst_83 = arith.constant 1.000000e+00 : f32
    %129 = vector.broadcast %cst_83 : f32 to vector<1x128xf32>
    %130 = arith.addf %128, %129 : vector<1x128xf32>
    %cst_84 = arith.constant 5.000000e-01 : f32
    %131 = vector.broadcast %cst_84 : f32 to vector<1x128xf32>
    %132 = arith.mulf %131, %130 : vector<1x128xf32>
    %133 = vector.shape_cast %132 : vector<1x128xf32> to vector<1x1x128xf32>
    %134 = vector.broadcast %133 : vector<1x1x128xf32> to vector<1x8x128xf32>
    %135 = arith.mulf %118, %134 : vector<1x8x128xf32>
    %136 = arith.addf %135, %78 : vector<1x8x128xf32>
    %c1_i32_85 = arith.constant 1 : i32
    %137 = tpu.dynamic_rotate %136 by %c1_i32_85 dim 1 : vector<1x8x128xf32>, i32 -> vector<1x8x128xf32>
    %138 = arith.mulf %4, %137 : vector<1x8x128xf32>
    %c7_i32_86 = arith.constant 7 : i32
    %139 = tpu.dynamic_rotate %136 by %c7_i32_86 dim 1 : vector<1x8x128xf32>, i32 -> vector<1x8x128xf32>
    %140 = arith.mulf %8, %139 : vector<1x8x128xf32>
    %cst_87 = arith.constant 0.000000e+00 : f32
    %141 = vector.broadcast %cst_87 : f32 to vector<8x128xf32>
    %142 = vector.shape_cast %11 : vector<1x8x128xf32> to vector<8x128xf32>
    %c0_88 = arith.constant 0 : index
    %c0_89 = arith.constant 0 : index
    %c0_90 = arith.constant 0 : index
    %143 = vector.load %arg13[%c0_88, %c0_89, %c0_90] : memref<3x128x128xf32, #tpu.memory_space<vmem>>, vector<1x128x128xf32>
    %144 = vector.shape_cast %143 : vector<1x128x128xf32> to vector<128x128xf32>
    %cst_91 = arith.constant dense<0.000000e+00> : vector<8x128xf32>
    %145 = tpu.matmul %142, %144, %cst_91 {dimension_numbers = #tpu.dot_dimension_numbers<[1], [0], [0], [1], [0, 0, 1, 1], [], []>} : vector<8x128xf32>, vector<128x128xf32>, vector<8x128xf32> -> vector<8x128xf32>
    %146 = arith.addf %141, %145 : vector<8x128xf32>
    %147 = vector.shape_cast %9 : vector<1x8x128xf32> to vector<8x128xf32>
    %c1_92 = arith.constant 1 : index
    %c0_93 = arith.constant 0 : index
    %c0_94 = arith.constant 0 : index
    %148 = vector.load %arg13[%c1_92, %c0_93, %c0_94] : memref<3x128x128xf32, #tpu.memory_space<vmem>>, vector<1x128x128xf32>
    %149 = vector.shape_cast %148 : vector<1x128x128xf32> to vector<128x128xf32>
    %cst_95 = arith.constant dense<0.000000e+00> : vector<8x128xf32>
    %150 = tpu.matmul %147, %149, %cst_95 {dimension_numbers = #tpu.dot_dimension_numbers<[1], [0], [0], [1], [0, 0, 1, 1], [], []>} : vector<8x128xf32>, vector<128x128xf32>, vector<8x128xf32> -> vector<8x128xf32>
    %151 = arith.addf %146, %150 : vector<8x128xf32>
    %152 = vector.shape_cast %13 : vector<1x8x128xf32> to vector<8x128xf32>
    %c2_96 = arith.constant 2 : index
    %c0_97 = arith.constant 0 : index
    %c0_98 = arith.constant 0 : index
    %153 = vector.load %arg13[%c2_96, %c0_97, %c0_98] : memref<3x128x128xf32, #tpu.memory_space<vmem>>, vector<1x128x128xf32>
    %154 = vector.shape_cast %153 : vector<1x128x128xf32> to vector<128x128xf32>
    %cst_99 = arith.constant dense<0.000000e+00> : vector<8x128xf32>
    %155 = tpu.matmul %152, %154, %cst_99 {dimension_numbers = #tpu.dot_dimension_numbers<[1], [0], [0], [1], [0, 0, 1, 1], [], []>} : vector<8x128xf32>, vector<128x128xf32>, vector<8x128xf32> -> vector<8x128xf32>
    %156 = arith.addf %151, %155 : vector<8x128xf32>
    %157 = vector.shape_cast %138 : vector<1x8x128xf32> to vector<8x128xf32>
    %c0_100 = arith.constant 0 : index
    %c0_101 = arith.constant 0 : index
    %c0_102 = arith.constant 0 : index
    %158 = vector.load %arg14[%c0_100, %c0_101, %c0_102] : memref<3x128x128xf32, #tpu.memory_space<vmem>>, vector<1x128x128xf32>
    %159 = vector.shape_cast %158 : vector<1x128x128xf32> to vector<128x128xf32>
    %cst_103 = arith.constant dense<0.000000e+00> : vector<8x128xf32>
    %160 = tpu.matmul %157, %159, %cst_103 {dimension_numbers = #tpu.dot_dimension_numbers<[1], [0], [0], [1], [0, 0, 1, 1], [], []>} : vector<8x128xf32>, vector<128x128xf32>, vector<8x128xf32> -> vector<8x128xf32>
    %161 = arith.addf %156, %160 : vector<8x128xf32>
    %162 = vector.shape_cast %136 : vector<1x8x128xf32> to vector<8x128xf32>
    %c1_104 = arith.constant 1 : index
    %c0_105 = arith.constant 0 : index
    %c0_106 = arith.constant 0 : index
    %163 = vector.load %arg14[%c1_104, %c0_105, %c0_106] : memref<3x128x128xf32, #tpu.memory_space<vmem>>, vector<1x128x128xf32>
    %164 = vector.shape_cast %163 : vector<1x128x128xf32> to vector<128x128xf32>
    %cst_107 = arith.constant dense<0.000000e+00> : vector<8x128xf32>
    %165 = tpu.matmul %162, %164, %cst_107 {dimension_numbers = #tpu.dot_dimension_numbers<[1], [0], [0], [1], [0, 0, 1, 1], [], []>} : vector<8x128xf32>, vector<128x128xf32>, vector<8x128xf32> -> vector<8x128xf32>
    %166 = arith.addf %161, %165 : vector<8x128xf32>
    %167 = vector.shape_cast %140 : vector<1x8x128xf32> to vector<8x128xf32>
    %c2_108 = arith.constant 2 : index
    %c0_109 = arith.constant 0 : index
    %c0_110 = arith.constant 0 : index
    %168 = vector.load %arg14[%c2_108, %c0_109, %c0_110] : memref<3x128x128xf32, #tpu.memory_space<vmem>>, vector<1x128x128xf32>
    %169 = vector.shape_cast %168 : vector<1x128x128xf32> to vector<128x128xf32>
    %cst_111 = arith.constant dense<0.000000e+00> : vector<8x128xf32>
    %170 = tpu.matmul %167, %169, %cst_111 {dimension_numbers = #tpu.dot_dimension_numbers<[1], [0], [0], [1], [0, 0, 1, 1], [], []>} : vector<8x128xf32>, vector<128x128xf32>, vector<8x128xf32> -> vector<8x128xf32>
    %171 = arith.addf %166, %170 : vector<8x128xf32>
    %172 = vector.shape_cast %171 : vector<8x128xf32> to vector<1x8x128xf32>
    %c0_112 = arith.constant 0 : index
    %c0_113 = arith.constant 0 : index
    %173 = vector.load %arg15[%c0_112, %c0_113] : memref<1x128xf32, #tpu.memory_space<vmem>>, vector<1x128xf32>
    %174 = vector.shape_cast %173 : vector<1x128xf32> to vector<1x1x128xf32>
    %175 = vector.broadcast %174 : vector<1x1x128xf32> to vector<1x8x128xf32>
    %176 = arith.addf %172, %175 : vector<1x8x128xf32>
    %cst_114 = arith.constant dense<0.000000e+00> : vector<1x128xf32>
    %177 = vector.multi_reduction <add>, %176, %cst_114 [1] : vector<1x8x128xf32> to vector<1x128xf32>
    %c0_115 = arith.constant 0 : index
    %c0_116 = arith.constant 0 : index
    %178 = vector.load %arg16[%c0_115, %c0_116] : memref<128x4xf32, #tpu.memory_space<vmem>>, vector<128x4xf32>
    %cst_117 = arith.constant dense<0.000000e+00> : vector<1x4xf32>
    %179 = tpu.matmul %177, %178, %cst_117 {dimension_numbers = #tpu.dot_dimension_numbers<[1], [0], [0], [1], [0, 0, 1, 1], [], []>} : vector<1x128xf32>, vector<128x4xf32>, vector<1x4xf32> -> vector<1x4xf32>
    %cst_118 = arith.constant 0.000000e+00 : f32
    %180 = vector.broadcast %cst_118 : f32 to vector<1x4xf32>
    %181 = arith.maximumf %179, %180 : vector<1x4xf32>
    %c0_119 = arith.constant 0 : index
    %c0_120 = arith.constant 0 : index
    %182 = vector.load %arg17[%c0_119, %c0_120] : memref<4x128xf32, #tpu.memory_space<vmem>>, vector<4x128xf32>
    %cst_121 = arith.constant dense<0.000000e+00> : vector<1x128xf32>
    %183 = tpu.matmul %181, %182, %cst_121 {dimension_numbers = #tpu.dot_dimension_numbers<[1], [0], [0], [1], [0, 0, 1, 1], [], []>} : vector<1x4xf32>, vector<4x128xf32>, vector<1x128xf32> -> vector<1x128xf32>
    %cst_122 = arith.constant 5.000000e-01 : f32
    %184 = vector.broadcast %cst_122 : f32 to vector<1x128xf32>
    %185 = arith.mulf %184, %183 : vector<1x128xf32>
    %186 = math.tanh %185 : vector<1x128xf32>
    %cst_123 = arith.constant 1.000000e+00 : f32
    %187 = vector.broadcast %cst_123 : f32 to vector<1x128xf32>
    %188 = arith.addf %186, %187 : vector<1x128xf32>
    %cst_124 = arith.constant 5.000000e-01 : f32
    %189 = vector.broadcast %cst_124 : f32 to vector<1x128xf32>
    %190 = arith.mulf %189, %188 : vector<1x128xf32>
    %191 = vector.shape_cast %190 : vector<1x128xf32> to vector<1x1x128xf32>
    %192 = vector.broadcast %191 : vector<1x1x128xf32> to vector<1x8x128xf32>
    %193 = arith.mulf %176, %192 : vector<1x8x128xf32>
    %194 = arith.addf %193, %9 : vector<1x8x128xf32>
    %c0_125 = arith.constant 0 : index
    %c0_126 = arith.constant 0 : index
    %c0_127 = arith.constant 0 : index
    %195 = vector.load %arg18[%c0_125, %c0_126, %c0_127] : memref<1x8x128xf32, #tpu.memory_space<vmem>>, vector<1x8x128xf32>
    tpu.vector_store %arg18[%c0_125, %c0_126, %c0_127], %194 {strides = array<i32>} : memref<1x8x128xf32, #tpu.memory_space<vmem>>, vector<1x8x128xf32>,
    return
  }
  func.func @transform_0(%arg0: i32) -> (i32, i32, i32) {
    %c0_i32 = arith.constant 0 : i32
    %c0_i32_0 = arith.constant 0 : i32
    %c0_i32_1 = arith.constant 0 : i32
    return %arg0, %c0_i32, %c0_i32_0 : i32, i32, i32
  }
  func.func @transform_1(%arg0: i32) -> (i32, i32, i32) {
    %c0_i32 = arith.constant 0 : i32
    %c0_i32_0 = arith.constant 0 : i32
    %c0_i32_1 = arith.constant 0 : i32
    %c0_i32_2 = arith.constant 0 : i32
    return %c0_i32, %c0_i32_0, %c0_i32_1 : i32, i32, i32
  }
  func.func @transform_2(%arg0: i32) -> (i32, i32) {
    %c0_i32 = arith.constant 0 : i32
    %c0_i32_0 = arith.constant 0 : i32
    %c0_i32_1 = arith.constant 0 : i32
    return %c0_i32, %c0_i32_0 : i32, i32
  }
  func.func @transform_3(%arg0: i32) -> (i32, i32, i32) {
    %c0_i32 = arith.constant 0 : i32
    %c0_i32_0 = arith.constant 0 : i32
    %c0_i32_1 = arith.constant 0 : i32
    %c0_i32_2 = arith.constant 0 : i32
    return %c0_i32, %c0_i32_0, %c0_i32_1 : i32, i32, i32
  }
  func.func @transform_4(%arg0: i32) -> (i32, i32) {
    %c0_i32 = arith.constant 0 : i32
    %c0_i32_0 = arith.constant 0 : i32
    %c0_i32_1 = arith.constant 0 : i32
    return %c0_i32, %c0_i32_0 : i32, i32
  }
  func.func @transform_5(%arg0: i32) -> (i32, i32) {
    %c0_i32 = arith.constant 0 : i32
    %c0_i32_0 = arith.constant 0 : i32
    %c0_i32_1 = arith.constant 0 : i32
    return %c0_i32, %c0_i32_0 : i32, i32
  }
  func.func @transform_6(%arg0: i32) -> (i32, i32) {
    %c0_i32 = arith.constant 0 : i32
    %c0_i32_0 = arith.constant 0 : i32
    %c0_i32_1 = arith.constant 0 : i32
    return %c0_i32, %c0_i32_0 : i32, i32
  }
  func.func @transform_7(%arg0: i32) -> (i32, i32, i32) {
    %c0_i32 = arith.constant 0 : i32
    %c0_i32_0 = arith.constant 0 : i32
    %c0_i32_1 = arith.constant 0 : i32
    %c0_i32_2 = arith.constant 0 : i32
    return %c0_i32, %c0_i32_0, %c0_i32_1 : i32, i32, i32
  }
  func.func @transform_8(%arg0: i32) -> (i32, i32, i32) {
    %c0_i32 = arith.constant 0 : i32
    %c0_i32_0 = arith.constant 0 : i32
    %c0_i32_1 = arith.constant 0 : i32
    %c0_i32_2 = arith.constant 0 : i32
    return %c0_i32, %c0_i32_0, %c0_i32_1 : i32, i32, i32
  }
  func.func @transform_9(%arg0: i32) -> (i32, i32) {
    %c0_i32 = arith.constant 0 : i32
    %c0_i32_0 = arith.constant 0 : i32
    %c0_i32_1 = arith.constant 0 : i32
    return %c0_i32, %c0_i32_0 : i32, i32
  }
  func.func @transform_10(%arg0: i32) -> (i32, i32) {
    %c0_i32 = arith.constant 0 : i32
    %c0_i32_0 = arith.constant 0 : i32
    %c0_i32_1 = arith.constant 0 : i32
    return %c0_i32, %c0_i32_0 : i32, i32
  }
  func.func @transform_11(%arg0: i32) -> (i32, i32) {
    %c0_i32 = arith.constant 0 : i32
    %c0_i32_0 = arith.constant 0 : i32
    %c0_i32_1 = arith.constant 0 : i32
    return %c0_i32, %c0_i32_0 : i32, i32
  }
  func.func @transform_12(%arg0: i32) -> (i32, i32, i32) {
    %c0_i32 = arith.constant 0 : i32
    %c0_i32_0 = arith.constant 0 : i32
    %c0_i32_1 = arith.constant 0 : i32
    %c0_i32_2 = arith.constant 0 : i32
    return %c0_i32, %c0_i32_0, %c0_i32_1 : i32, i32, i32
  }
  func.func @transform_13(%arg0: i32) -> (i32, i32, i32) {
    %c0_i32 = arith.constant 0 : i32
    %c0_i32_0 = arith.constant 0 : i32
    %c0_i32_1 = arith.constant 0 : i32
    %c0_i32_2 = arith.constant 0 : i32
    return %c0_i32, %c0_i32_0, %c0_i32_1 : i32, i32, i32
  }
  func.func @transform_14(%arg0: i32) -> (i32, i32) {
    %c0_i32 = arith.constant 0 : i32
    %c0_i32_0 = arith.constant 0 : i32
    %c0_i32_1 = arith.constant 0 : i32
    return %c0_i32, %c0_i32_0 : i32, i32
  }
  func.func @transform_15(%arg0: i32) -> (i32, i32) {
    %c0_i32 = arith.constant 0 : i32
    %c0_i32_0 = arith.constant 0 : i32
    %c0_i32_1 = arith.constant 0 : i32
    return %c0_i32, %c0_i32_0 : i32, i32
  }
  func.func @transform_16(%arg0: i32) -> (i32, i32) {
    %c0_i32 = arith.constant 0 : i32
    %c0_i32_0 = arith.constant 0 : i32
    %c0_i32_1 = arith.constant 0 : i32
    return %c0_i32, %c0_i32_0 : i32, i32
  }
  func.func @transform_17(%arg0: i32) -> (i32, i32, i32) {
    %c0_i32 = arith.constant 0 : i32
    %c0_i32_0 = arith.constant 0 : i32
    %c0_i32_1 = arith.constant 0 : i32
    return %arg0, %c0_i32, %c0_i32_0 : i32, i32, i32
  }
}

</mosaic_0001>

<llo_original>
// kernel: tpu_custom_call.1
$region0: #{tpu_custom_call.1}
  #allocation0 [shape = 'u32[]', space=smem, size = 0x4, offset = 0x4, fixed_abs, tag = 'smem constant byte address 0x4 - core index']
  #allocation1 [shape = 'u32[144,128]{1,0:T(1,128)}', space=vmem, size = 0x12000, scoped, tag = 'internal scratch']
  %s0 = inlined_call_operand.hbm [shape: f32[2,8,128], index: 0, kind: input, shape index: {}]
  %s1 = inlined_call_operand.vmem [shape: f32[3,128,128], index: 1, kind: input, shape index: {}]
  %s2 = inlined_call_operand.vmem [shape: f32[1,128], index: 2, kind: input, shape index: {}]
  %s3 = inlined_call_operand.hbm [shape: f32[3,128,128], index: 3, kind: input, shape index: {}]
  %s4 = inlined_call_operand.vmem [shape: f32[1,128], index: 4, kind: input, shape index: {}]
  %s5 = inlined_call_operand.vmem [shape: f32[128,4], index: 5, kind: input, shape index: {}]
  %s6 = inlined_call_operand.vmem [shape: f32[4,128], index: 6, kind: input, shape index: {}]
  %s7 = inlined_call_operand.hbm [shape: f32[3,128,128], index: 7, kind: input, shape index: {}]
  %s8 = inlined_call_operand.hbm [shape: f32[3,128,128], index: 8, kind: input, shape index: {}]
  %s9 = inlined_call_operand.vmem [shape: f32[1,128], index: 9, kind: input, shape index: {}]
  %s10 = inlined_call_operand.vmem [shape: f32[128,4], index: 10, kind: input, shape index: {}]
  %s11 = inlined_call_operand.vmem [shape: f32[4,128], index: 11, kind: input, shape index: {}]
  %s12 = inlined_call_operand.hbm [shape: f32[3,128,128], index: 12, kind: input, shape index: {}]
  %s13 = inlined_call_operand.hbm [shape: f32[3,128,128], index: 13, kind: input, shape index: {}]
  %s14 = inlined_call_operand.vmem [shape: f32[1,128], index: 14, kind: input, shape index: {}]
  %s15 = inlined_call_operand.vmem [shape: f32[128,4], index: 15, kind: input, shape index: {}]
  %s16 = inlined_call_operand.vmem [shape: f32[4,128], index: 16, kind: input, shape index: {}]
  %s17 = inlined_call_operand.hbm [shape: f32[2,8,128], index: 17, kind: output, shape index: {}]
  %s18 = sld [smem:[#allocation0]]
  $region125: #{tpu_custom_call.1} parent=0
    _
  %s20 = ssub.s32 1, %s18
  %s21 = scalar_select 0, %s20, %s18
  $region1: #{tpu_custom_call.1} parent=0
    #allocation2 [shape = 'u8[8192]{0}', space=vmem, size = 0x2000, scoped, tag = 'input window, operand 0']
    #allocation3 [shape = 's32[2]{0}', space=sflag, size = 0x8, scoped, tag = 'scoped memory for tpu_custom_call.1']
    #allocation4 [shape = 's32[2]{0}', space=sflag, size = 0x8, scoped, tag = 'scoped memory for tpu_custom_call.1']
    #allocation5 [shape = 'u8[196608]{0}', space=vmem, size = 0x30000, scoped, tag = 'input window, operand 3, single buffered']
    #allocation6 [shape = 's32[1]{0}', space=sflag, size = 0x4, scoped, tag = 'scoped memory for tpu_custom_call.1']
    #allocation7 [shape = 'u8[196608]{0}', space=vmem, size = 0x30000, scoped, tag = 'input window, operand 7, single buffered']
    #allocation8 [shape = 'u8[196608]{0}', space=vmem, size = 0x30000, scoped, tag = 'input window, operand 8, single buffered']
    #allocation9 [shape = 's32[1]{0}', space=sflag, size = 0x4, scoped, tag = 'scoped memory for tpu_custom_call.1']
    #allocation10 [shape = 'u8[196608]{0}', space=vmem, size = 0x30000, scoped, tag = 'input window, operand 12, single buffered']
    #allocation11 [shape = 'u8[196608]{0}', space=vmem, size = 0x30000, scoped, tag = 'input window, operand 13, single buffered']
    #allocation12 [shape = 's32[1]{0}', space=sflag, size = 0x4, scoped, tag = 'scoped memory for tpu_custom_call.1']
    #allocation13 [shape = 'u8[8192]{0}', space=vmem, size = 0x2000, scoped, tag = 'output window, operand 0']
    %22 = vsyncpa [#allocation3], 0
    %s23 = scalar_lea.sflag [#allocation3], 1
    %24 = vsyncpa %s23, 0
    %25 = vsyncpa [#allocation6], 0
    %26 = vsyncpa [#allocation9], 0
    %27 = vsyncpa [#allocation12], 0
    %28 = vsyncpa [#allocation4], 0
    %s29 = scalar_lea.sflag [#allocation4], 1
    %30 = vsyncpa %s29, 0
    loop: start=0, step=1, limit=4
    $region2: #{tpu_custom_call.1} parent=1 // loop_pre_header
      _
    $region3: #{tpu_custom_call.1} parent=1 // loop_header
      %s32 = sphi 0, %s36
      %p33 = scmp.ge.s32.totalorder %s32, 4
      %s42 = sphi 0, %s44
      %s45 = sphi 0, %s42
      %s46 = sphi 0, %s45
      %s62 = sphi 0, %s46
      %s66 = sphi 0, %s66
      %s68 = sphi 0, %s66
      %s69 = sphi 0, %s68
      %s83 = sphi 0, %s69
      %s87 = sphi 0, %s87
      %s89 = sphi 0, %s87
      %s90 = sphi 0, %s89
      %s104 = sphi 0, %s90
      %s108 = sphi 0, %s108
      %s110 = sphi 0, %s108
      %s111 = sphi 0, %s110
      %s125 = sphi 0, %s111
      %s129 = sphi 0, %s129
      %s131 = sphi 0, %s129
      %s132 = sphi 0, %s131
      %s146 = sphi 0, %s132
      %s150 = sphi 0, %s150
      %s152 = sphi 0, %s150
      %s153 = sphi 0, %s152
      %s167 = sphi 0, %s153
      %s171 = sphi 0, %s171
      %s173 = sphi 0, %s171
      %s174 = sphi 0, %s173
      %s188 = sphi 0, %s174
      %s192 = sphi 0, %s192
      %s194 = sphi 0, %s192
      %s195 = sphi 0, %s194
      %s209 = sphi 0, %s195
      %s213 = sphi 0, %s213
      %s215 = sphi 0, %s213
      %s216 = sphi 0, %s215
      %s230 = sphi 0, %s216
      %s234 = sphi 0, %s234
      %s236 = sphi 0, %s234
      %s237 = sphi 0, %s236
      %s251 = sphi 0, %s237
      %s255 = sphi 0, %s255
      %s257 = sphi 0, %s255
      %s258 = sphi 0, %s257
      %s272 = sphi 0, %s258
      %s276 = sphi 0, %s276
      %s278 = sphi 0, %s276
      %s279 = sphi 0, %s278
      %s293 = sphi 0, %s279
      %s297 = sphi 0, %s297
      %s299 = sphi 0, %s297
      %s300 = sphi 0, %s299
      %s314 = sphi 0, %s300
      %s318 = sphi 0, %s318
      %s320 = sphi 0, %s318
      %s321 = sphi 0, %s320
      %s335 = sphi 0, %s321
      %s339 = sphi 0, %s339
      %s341 = sphi 0, %s339
      %s342 = sphi 0, %s341
      %s356 = sphi 0, %s342
      %s360 = sphi 0, %s360
      %s362 = sphi 0, %s360
      %s363 = sphi 0, %s362
      %s377 = sphi 0, %s363
      %s381 = sphi 0, %s381
      %s383 = sphi 0, %s381
      %s384 = sphi 0, %s383
      %s398 = sphi 0, %s384
      %s404 = sphi 0, %s406
      %s407 = sphi 0, %s404
      %s408 = sphi 0, %s407
      %s424 = sphi 0, %s408
    $region4: #{tpu_custom_call.1} parent=1 // loop_header_branch
      %35 = sbr.rel (%p33) target = $region8
    $region5: #{tpu_custom_call.1} parent=1 // loop_body
      %s37 = ssub.s32 %s32, 1
      %s38 = ssub.s32 %s32, 2
      %s39 = sadd.s32 %s32, 1
      %s40 = ssub.s32 %s32, %s39
      %p41 = scmp.eq.s32.totalorder %s40, 0
      %s43 = sadd.s32 %s42, 1
      %s44 = scalar_select %p41, %s42, %s43
      %p47 = pneg %p41
      %p48 = scmp.eq.s32.totalorder %s32, 1
      %p49 = por %p47, %p48
      %p50 = scmp.ne.s32.totalorder %s42, %s45
      %p51 = scmp.eq.s32.totalorder %s32, 0
      %p52 = por %p50, %p51
      %p53 = scmp.ne.s32.totalorder %s42, %s45
      %p54 = scmp.eq.s32.totalorder %s37, 1
      %p55 = por %p53, %p54
      %p56 = scmp.ne.s32.totalorder %s45, %s46
      %p57 = scmp.eq.s32.totalorder %s37, 0
      %p58 = por %p56, %p57
      %p59 = scmp.ne.s32.totalorder %s45, %s46
      %p60 = scmp.eq.s32.totalorder %s38, 1
      %p61 = por %p59, %p60
      %p63 = scmp.ne.s32.totalorder %s46, %s62
      %p64 = scmp.eq.s32.totalorder %s38, 0
      %p65 = por %p63, %p64
      %s67 = sadd.s32 %s66, 1
      %p70 = scmp.eq.s32.totalorder %s32, 1
      %p71 = scmp.ne.s32.totalorder %s66, %s68
      %p72 = scmp.eq.s32.totalorder %s32, 0
      %p73 = por %p71, %p72
      %p74 = scmp.ne.s32.totalorder %s66, %s68
      %p75 = scmp.eq.s32.totalorder %s37, 1
      %p76 = por %p74, %p75
      %p77 = scmp.ne.s32.totalorder %s68, %s69
      %p78 = scmp.eq.s32.totalorder %s37, 0
      %p79 = por %p77, %p78
      %p80 = scmp.ne.s32.totalorder %s68, %s69
      %p81 = scmp.eq.s32.totalorder %s38, 1
      %p82 = por %p80, %p81
      %p84 = scmp.ne.s32.totalorder %s69, %s83
      %p85 = scmp.eq.s32.totalorder %s38, 0
      %p86 = por %p84, %p85
      %s88 = sadd.s32 %s87, 1
      %p91 = scmp.eq.s32.totalorder %s32, 1
      %p92 = scmp.ne.s32.totalorder %s87, %s89
      %p93 = scmp.eq.s32.totalorder %s32, 0
      %p94 = por %p92, %p93
      %p95 = scmp.ne.s32.totalorder %s87, %s89
      %p96 = scmp.eq.s32.totalorder %s37, 1
      %p97 = por %p95, %p96
      %p98 = scmp.ne.s32.totalorder %s89, %s90
      %p99 = scmp.eq.s32.totalorder %s37, 0
      %p100 = por %p98, %p99
      %p101 = scmp.ne.s32.totalorder %s89, %s90
      %p102 = scmp.eq.s32.totalorder %s38, 1
      %p103 = por %p101, %p102
      %p105 = scmp.ne.s32.totalorder %s90, %s104
      %p106 = scmp.eq.s32.totalorder %s38, 0
      %p107 = por %p105, %p106
      %s109 = sadd.s32 %s108, 1
      %p112 = scmp.eq.s32.totalorder %s32, 1
      %p113 = scmp.ne.s32.totalorder %s108, %s110
      %p114 = scmp.eq.s32.totalorder %s32, 0
      %p115 = por %p113, %p114
      %p116 = scmp.ne.s32.totalorder %s108, %s110
      %p117 = scmp.eq.s32.totalorder %s37, 1
      %p118 = por %p116, %p117
      %p119 = scmp.ne.s32.totalorder %s110, %s111
      %p120 = scmp.eq.s32.totalorder %s37, 0
      %p121 = por %p119, %p120
      %p122 = scmp.ne.s32.totalorder %s110, %s111
      %p123 = scmp.eq.s32.totalorder %s38, 1
      %p124 = por %p122, %p123
      %p126 = scmp.ne.s32.totalorder %s111, %s125
      %p127 = scmp.eq.s32.totalorder %s38, 0
      %p128 = por %p126, %p127
      %s130 = sadd.s32 %s129, 1
      %p133 = scmp.eq.s32.totalorder %s32, 1
      %p134 = scmp.ne.s32.totalorder %s129, %s131
      %p135 = scmp.eq.s32.totalorder %s32, 0
      %p136 = por %p134, %p135
      %p137 = scmp.ne.s32.totalorder %s129, %s131
      %p138 = scmp.eq.s32.totalorder %s37, 1
      %p139 = por %p137, %p138
      %p140 = scmp.ne.s32.totalorder %s131, %s132
      %p141 = scmp.eq.s32.totalorder %s37, 0
      %p142 = por %p140, %p141
      %p143 = scmp.ne.s32.totalorder %s131, %s132
      %p144 = scmp.eq.s32.totalorder %s38, 1
      %p145 = por %p143, %p144
      %p147 = scmp.ne.s32.totalorder %s132, %s146
      %p148 = scmp.eq.s32.totalorder %s38, 0
      %p149 = por %p147, %p148
      %s151 = sadd.s32 %s150, 1
      %p154 = scmp.eq.s32.totalorder %s32, 1
      %p155 = scmp.ne.s32.totalorder %s150, %s152
      %p156 = scmp.eq.s32.totalorder %s32, 0
      %p157 = por %p155, %p156
      %p158 = scmp.ne.s32.totalorder %s150, %s152
      %p159 = scmp.eq.s32.totalorder %s37, 1
      %p160 = por %p158, %p159
      %p161 = scmp.ne.s32.totalorder %s152, %s153
      %p162 = scmp.eq.s32.totalorder %s37, 0
      %p163 = por %p161, %p162
      %p164 = scmp.ne.s32.totalorder %s152, %s153
      %p165 = scmp.eq.s32.totalorder %s38, 1
      %p166 = por %p164, %p165
      %p168 = scmp.ne.s32.totalorder %s153, %s167
      %p169 = scmp.eq.s32.totalorder %s38, 0
      %p170 = por %p168, %p169
      %s172 = sadd.s32 %s171, 1
      %p175 = scmp.eq.s32.totalorder %s32, 1
      %p176 = scmp.ne.s32.totalorder %s171, %s173
      %p177 = scmp.eq.s32.totalorder %s32, 0
      %p178 = por %p176, %p177
      %p179 = scmp.ne.s32.totalorder %s171, %s173
      %p180 = scmp.eq.s32.totalorder %s37, 1
      %p181 = por %p179, %p180
      %p182 = scmp.ne.s32.totalorder %s173, %s174
      %p183 = scmp.eq.s32.totalorder %s37, 0
      %p184 = por %p182, %p183
      %p185 = scmp.ne.s32.totalorder %s173, %s174
      %p186 = scmp.eq.s32.totalorder %s38, 1
      %p187 = por %p185, %p186
      %p189 = scmp.ne.s32.totalorder %s174, %s188
      %p190 = scmp.eq.s32.totalorder %s38, 0
      %p191 = por %p189, %p190
      %s193 = sadd.s32 %s192, 1
      %p196 = scmp.eq.s32.totalorder %s32, 1
      %p197 = scmp.ne.s32.totalorder %s192, %s194
      %p198 = scmp.eq.s32.totalorder %s32, 0
      %p199 = por %p197, %p198
      %p200 = scmp.ne.s32.totalorder %s192, %s194
      %p201 = scmp.eq.s32.totalorder %s37, 1
      %p202 = por %p200, %p201
      %p203 = scmp.ne.s32.totalorder %s194, %s195
      %p204 = scmp.eq.s32.totalorder %s37, 0
      %p205 = por %p203, %p204
      %p206 = scmp.ne.s32.totalorder %s194, %s195
      %p207 = scmp.eq.s32.totalorder %s38, 1
      %p208 = por %p206, %p207
      %p210 = scmp.ne.s32.totalorder %s195, %s209
      %p211 = scmp.eq.s32.totalorder %s38, 0
      %p212 = por %p210, %p211
      %s214 = sadd.s32 %s213, 1
      %p217 = scmp.eq.s32.totalorder %s32, 1
      %p218 = scmp.ne.s32.totalorder %s213, %s215
      %p219 = scmp.eq.s32.totalorder %s32, 0
      %p220 = por %p218, %p219
      %p221 = scmp.ne.s32.totalorder %s213, %s215
      %p222 = scmp.eq.s32.totalorder %s37, 1
      %p223 = por %p221, %p222
      %p224 = scmp.ne.s32.totalorder %s215, %s216
      %p225 = scmp.eq.s32.totalorder %s37, 0
      %p226 = por %p224, %p225
      %p227 = scmp.ne.s32.totalorder %s215, %s216
      %p228 = scmp.eq.s32.totalorder %s38, 1
      %p229 = por %p227, %p228
      %p231 = scmp.ne.s32.totalorder %s216, %s230
      %p232 = scmp.eq.s32.totalorder %s38, 0
      %p233 = por %p231, %p232
      %s235 = sadd.s32 %s234, 1
      %p238 = scmp.eq.s32.totalorder %s32, 1
      %p239 = scmp.ne.s32.totalorder %s234, %s236
      %p240 = scmp.eq.s32.totalorder %s32, 0
      %p241 = por %p239, %p240
      %p242 = scmp.ne.s32.totalorder %s234, %s236
      %p243 = scmp.eq.s32.totalorder %s37, 1
      %p244 = por %p242, %p243
      %p245 = scmp.ne.s32.totalorder %s236, %s237
      %p246 = scmp.eq.s32.totalorder %s37, 0
      %p247 = por %p245, %p246
      %p248 = scmp.ne.s32.totalorder %s236, %s237
      %p249 = scmp.eq.s32.totalorder %s38, 1
      %p250 = por %p248, %p249
      %p252 = scmp.ne.s32.totalorder %s237, %s251
      %p253 = scmp.eq.s32.totalorder %s38, 0
      %p254 = por %p252, %p253
      %s256 = sadd.s32 %s255, 1
      %p259 = scmp.eq.s32.totalorder %s32, 1
      %p260 = scmp.ne.s32.totalorder %s255, %s257
      %p261 = scmp.eq.s32.totalorder %s32, 0
      %p262 = por %p260, %p261
      %p263 = scmp.ne.s32.totalorder %s255, %s257
      %p264 = scmp.eq.s32.totalorder %s37, 1
      %p265 = por %p263, %p264
      %p266 = scmp.ne.s32.totalorder %s257, %s258
      %p267 = scmp.eq.s32.totalorder %s37, 0
      %p268 = por %p266, %p267
      %p269 = scmp.ne.s32.totalorder %s257, %s258
      %p270 = scmp.eq.s32.totalorder %s38, 1
      %p271 = por %p269, %p270
      %p273 = scmp.ne.s32.totalorder %s258, %s272
      %p274 = scmp.eq.s32.totalorder %s38, 0
      %p275 = por %p273, %p274
      %s277 = sadd.s32 %s276, 1
      %p280 = scmp.eq.s32.totalorder %s32, 1
      %p281 = scmp.ne.s32.totalorder %s276, %s278
      %p282 = scmp.eq.s32.totalorder %s32, 0
      %p283 = por %p281, %p282
      %p284 = scmp.ne.s32.totalorder %s276, %s278
      %p285 = scmp.eq.s32.totalorder %s37, 1
      %p286 = por %p284, %p285
      %p287 = scmp.ne.s32.totalorder %s278, %s279
      %p288 = scmp.eq.s32.totalorder %s37, 0
      %p289 = por %p287, %p288
      %p290 = scmp.ne.s32.totalorder %s278, %s279
      %p291 = scmp.eq.s32.totalorder %s38, 1
      %p292 = por %p290, %p291
      %p294 = scmp.ne.s32.totalorder %s279, %s293
      %p295 = scmp.eq.s32.totalorder %s38, 0
      %p296 = por %p294, %p295
      %s298 = sadd.s32 %s297, 1
      %p301 = scmp.eq.s32.totalorder %s32, 1
      %p302 = scmp.ne.s32.totalorder %s297, %s299
      %p303 = scmp.eq.s32.totalorder %s32, 0
      %p304 = por %p302, %p303
      %p305 = scmp.ne.s32.totalorder %s297, %s299
      %p306 = scmp.eq.s32.totalorder %s37, 1
      %p307 = por %p305, %p306
      %p308 = scmp.ne.s32.totalorder %s299, %s300
      %p309 = scmp.eq.s32.totalorder %s37, 0
      %p310 = por %p308, %p309
      %p311 = scmp.ne.s32.totalorder %s299, %s300
      %p312 = scmp.eq.s32.totalorder %s38, 1
      %p313 = por %p311, %p312
      %p315 = scmp.ne.s32.totalorder %s300, %s314
      %p316 = scmp.eq.s32.totalorder %s38, 0
      %p317 = por %p315, %p316
      %s319 = sadd.s32 %s318, 1
      %p322 = scmp.eq.s32.totalorder %s32, 1
      %p323 = scmp.ne.s32.totalorder %s318, %s320
      %p324 = scmp.eq.s32.totalorder %s32, 0
      %p325 = por %p323, %p324
      %p326 = scmp.ne.s32.totalorder %s318, %s320
      %p327 = scmp.eq.s32.totalorder %s37, 1
      %p328 = por %p326, %p327
      %p329 = scmp.ne.s32.totalorder %s320, %s321
      %p330 = scmp.eq.s32.totalorder %s37, 0
      %p331 = por %p329, %p330
      %p332 = scmp.ne.s32.totalorder %s320, %s321
      %p333 = scmp.eq.s32.totalorder %s38, 1
      %p334 = por %p332, %p333
      %p336 = scmp.ne.s32.totalorder %s321, %s335
      %p337 = scmp.eq.s32.totalorder %s38, 0
      %p338 = por %p336, %p337
      %s340 = sadd.s32 %s339, 1
      %p343 = scmp.eq.s32.totalorder %s32, 1
      %p344 = scmp.ne.s32.totalorder %s339, %s341
      %p345 = scmp.eq.s32.totalorder %s32, 0
      %p346 = por %p344, %p345
      %p347 = scmp.ne.s32.totalorder %s339, %s341
      %p348 = scmp.eq.s32.totalorder %s37, 1
      %p349 = por %p347, %p348
      %p350 = scmp.ne.s32.totalorder %s341, %s342
      %p351 = scmp.eq.s32.totalorder %s37, 0
      %p352 = por %p350, %p351
      %p353 = scmp.ne.s32.totalorder %s341, %s342
      %p354 = scmp.eq.s32.totalorder %s38, 1
      %p355 = por %p353, %p354
      %p357 = scmp.ne.s32.totalorder %s342, %s356
      %p358 = scmp.eq.s32.totalorder %s38, 0
      %p359 = por %p357, %p358
      %s361 = sadd.s32 %s360, 1
      %p364 = scmp.eq.s32.totalorder %s32, 1
      %p365 = scmp.ne.s32.totalorder %s360, %s362
      %p366 = scmp.eq.s32.totalorder %s32, 0
      %p367 = por %p365, %p366
      %p368 = scmp.ne.s32.totalorder %s360, %s362
      %p369 = scmp.eq.s32.totalorder %s37, 1
      %p370 = por %p368, %p369
      %p371 = scmp.ne.s32.totalorder %s362, %s363
      %p372 = scmp.eq.s32.totalorder %s37, 0
      %p373 = por %p371, %p372
      %p374 = scmp.ne.s32.totalorder %s362, %s363
      %p375 = scmp.eq.s32.totalorder %s38, 1
      %p376 = por %p374, %p375
      %p378 = scmp.ne.s32.totalorder %s363, %s377
      %p379 = scmp.eq.s32.totalorder %s38, 0
      %p380 = por %p378, %p379
      %s382 = sadd.s32 %s381, 1
      %p385 = scmp.eq.s32.totalorder %s32, 1
      %p386 = scmp.ne.s32.totalorder %s381, %s383
      %p387 = scmp.eq.s32.totalorder %s32, 0
      %p388 = por %p386, %p387
      %p389 = scmp.ne.s32.totalorder %s381, %s383
      %p390 = scmp.eq.s32.totalorder %s37, 1
      %p391 = por %p389, %p390
      %p392 = scmp.ne.s32.totalorder %s383, %s384
      %p393 = scmp.eq.s32.totalorder %s37, 0
      %p394 = por %p392, %p393
      %p395 = scmp.ne.s32.totalorder %s383, %s384
      %p396 = scmp.eq.s32.totalorder %s38, 1
      %p397 = por %p395, %p396
      %p399 = scmp.ne.s32.totalorder %s384, %s398
      %p400 = scmp.eq.s32.totalorder %s38, 0
      %p401 = por %p399, %p400
      %s402 = ssub.s32 %s32, %s39
      %p403 = scmp.eq.s32.totalorder %s402, 0
      %s405 = sadd.s32 %s404, 1
      %s406 = scalar_select %p403, %s404, %s405
      %p409 = pneg %p403
      %p410 = scmp.eq.s32.totalorder %s32, 1
      %p411 = por %p409, %p410
      %p412 = scmp.ne.s32.totalorder %s404, %s407
      %p413 = scmp.eq.s32.totalorder %s32, 0
      %p414 = por %p412, %p413
      %p415 = scmp.ne.s32.totalorder %s404, %s407
      %p416 = scmp.eq.s32.totalorder %s37, 1
      %p417 = por %p415, %p416
      %p418 = scmp.ne.s32.totalorder %s407, %s408
      %p419 = scmp.eq.s32.totalorder %s37, 0
      %p420 = por %p418, %p419
      %p421 = scmp.ne.s32.totalorder %s407, %s408
      %p422 = scmp.eq.s32.totalorder %s38, 1
      %p423 = por %p421, %p422
      %p425 = scmp.ne.s32.totalorder %s408, %s424
      %p426 = scmp.eq.s32.totalorder %s38, 0
      %p427 = por %p425, %p426
      %p428 = scmp.le.s32.totalorder 1, %s32
      %p429 = scmp.lt.s32.totalorder %s32, 3
      %p430 = pnand %p428, %p429
      %p431 = pneg %p430
      // Predicated region
      $region9: #{tpu_custom_call.1} parent=5 // pred_check
        _
      $region10: #{tpu_custom_call.1} parent=5 // pred_check_branch
        %433 = sbr.rel (%p430) target = $region12
      $region11: #{tpu_custom_call.1} parent=5 // pred_region
        %s434 = ssub.s32 %s32, 1
        // Predicated region
        $region13: #{tpu_custom_call.1} parent=11 // pred_check
          %p435 = pneg %p79
        $region14: #{tpu_custom_call.1} parent=11 // pred_check_branch
          %437 = sbr.rel (%p435) target = $region16
        $region15: #{tpu_custom_call.1} parent=11 // pred_region
          _
        $region16: #{tpu_custom_call.1} parent=11 // pred_fallthru
          _
        // Predicated region
        $region17: #{tpu_custom_call.1} parent=11 // pred_check
          %p438 = pneg %p100
        $region18: #{tpu_custom_call.1} parent=11 // pred_check_branch
          %440 = sbr.rel (%p438) target = $region20
        $region19: #{tpu_custom_call.1} parent=11 // pred_region
          _
        $region20: #{tpu_custom_call.1} parent=11 // pred_fallthru
          _
        // Predicated region
        $region21: #{tpu_custom_call.1} parent=11 // pred_check
          %p441 = pneg %p121
        $region22: #{tpu_custom_call.1} parent=11 // pred_check_branch
          %443 = sbr.rel (%p441) target = $region24
        $region23: #{tpu_custom_call.1} parent=11 // pred_region
          %s445 = ssub.s32 6144, 6144
          %446 = vsyncadd [#allocation6], %s445
          %s447 = sshll.u32 [#allocation5], 4
          %s448 = int_to_ptr.vmem [resolvable:$true] %s447
          %453 = dma.hbm_to_vmem [thread:$0]  %s3, 6144, %s448, [#allocation6], 128, 128, 8
        $region24: #{tpu_custom_call.1} parent=11 // pred_fallthru
          _
        // Predicated region
        $region25: #{tpu_custom_call.1} parent=11 // pred_check
          %p454 = pneg %p142
        $region26: #{tpu_custom_call.1} parent=11 // pred_check_branch
          %456 = sbr.rel (%p454) target = $region28
        $region27: #{tpu_custom_call.1} parent=11 // pred_region
          _
        $region28: #{tpu_custom_call.1} parent=11 // pred_fallthru
          _
        // Predicated region
        $region29: #{tpu_custom_call.1} parent=11 // pred_check
          %p457 = pneg %p163
        $region30: #{tpu_custom_call.1} parent=11 // pred_check_branch
          %459 = sbr.rel (%p457) target = $region32
        $region31: #{tpu_custom_call.1} parent=11 // pred_region
          _
        $region32: #{tpu_custom_call.1} parent=11 // pred_fallthru
          _
        // Predicated region
        $region33: #{tpu_custom_call.1} parent=11 // pred_check
          %p460 = pneg %p184
        $region34: #{tpu_custom_call.1} parent=11 // pred_check_branch
          %462 = sbr.rel (%p460) target = $region36
        $region35: #{tpu_custom_call.1} parent=11 // pred_region
          _
        $region36: #{tpu_custom_call.1} parent=11 // pred_fallthru
          _
        // Predicated region
        $region37: #{tpu_custom_call.1} parent=11 // pred_check
          %p463 = pneg %p205
        $region38: #{tpu_custom_call.1} parent=11 // pred_check_branch
          %465 = sbr.rel (%p463) target = $region40
        $region39: #{tpu_custom_call.1} parent=11 // pred_region
          %s467 = ssub.s32 6144, 6144
          %468 = vsyncadd [#allocation6], %s467
          %s469 = sshll.u32 [#allocation7], 4
          %s470 = int_to_ptr.vmem [resolvable:$true] %s469
          %475 = dma.hbm_to_vmem [thread:$0]  %s7, 6144, %s470, [#allocation6], 128, 128, 8
        $region40: #{tpu_custom_call.1} parent=11 // pred_fallthru
          _
        // Predicated region
        $region41: #{tpu_custom_call.1} parent=11 // pred_check
          %p476 = pneg %p226
        $region42: #{tpu_custom_call.1} parent=11 // pred_check_branch
          %478 = sbr.rel (%p476) target = $region44
        $region43: #{tpu_custom_call.1} parent=11 // pred_region
          %s480 = ssub.s32 6144, 6144
          %481 = vsyncadd [#allocation9], %s480
          %s482 = sshll.u32 [#allocation8], 4
          %s483 = int_to_ptr.vmem [resolvable:$true] %s482
          %488 = dma.hbm_to_vmem [thread:$0]  %s8, 6144, %s483, [#allocation9], 128, 128, 8
        $region44: #{tpu_custom_call.1} parent=11 // pred_fallthru
          _
        // Predicated region
        $region45: #{tpu_custom_call.1} parent=11 // pred_check
          %p489 = pneg %p247
        $region46: #{tpu_custom_call.1} parent=11 // pred_check_branch
          %491 = sbr.rel (%p489) target = $region48
        $region47: #{tpu_custom_call.1} parent=11 // pred_region
          _
        $region48: #{tpu_custom_call.1} parent=11 // pred_fallthru
          _
        // Predicated region
        $region49: #{tpu_custom_call.1} parent=11 // pred_check
          %p492 = pneg %p268
        $region50: #{tpu_custom_call.1} parent=11 // pred_check_branch
          %494 = sbr.rel (%p492) target = $region52
        $region51: #{tpu_custom_call.1} parent=11 // pred_region
          _
        $region52: #{tpu_custom_call.1} parent=11 // pred_fallthru
          _
        // Predicated region
        $region53: #{tpu_custom_call.1} parent=11 // pred_check
          %p495 = pneg %p289
        $region54: #{tpu_custom_call.1} parent=11 // pred_check_branch
          %497 = sbr.rel (%p495) target = $region56
        $region55: #{tpu_custom_call.1} parent=11 // pred_region
          _
        $region56: #{tpu_custom_call.1} parent=11 // pred_fallthru
          _
        // Predicated region
        $region57: #{tpu_custom_call.1} parent=11 // pred_check
          %p498 = pneg %p310
        $region58: #{tpu_custom_call.1} parent=11 // pred_check_branch
          %500 = sbr.rel (%p498) target = $region60
        $region59: #{tpu_custom_call.1} parent=11 // pred_region
          %s502 = ssub.s32 6144, 6144
          %503 = vsyncadd [#allocation9], %s502
          %s504 = sshll.u32 [#allocation10], 4
          %s505 = int_to_ptr.vmem [resolvable:$true] %s504
          %510 = dma.hbm_to_vmem [thread:$0]  %s12, 6144, %s505, [#allocation9], 128, 128, 8
        $region60: #{tpu_custom_call.1} parent=11 // pred_fallthru
          _
        // Predicated region
        $region61: #{tpu_custom_call.1} parent=11 // pred_check
          %p511 = pneg %p331
        $region62: #{tpu_custom_call.1} parent=11 // pred_check_branch
          %513 = sbr.rel (%p511) target = $region64
        $region63: #{tpu_custom_call.1} parent=11 // pred_region
          %s515 = ssub.s32 6144, 6144
          %516 = vsyncadd [#allocation12], %s515
          %s517 = sshll.u32 [#allocation11], 4
          %s518 = int_to_ptr.vmem [resolvable:$true] %s517
          %523 = dma.hbm_to_vmem [thread:$0]  %s13, 6144, %s518, [#allocation12], 128, 128, 8
        $region64: #{tpu_custom_call.1} parent=11 // pred_fallthru
          _
        // Predicated region
        $region65: #{tpu_custom_call.1} parent=11 // pred_check
          %p524 = pneg %p352
        $region66: #{tpu_custom_call.1} parent=11 // pred_check_branch
          %526 = sbr.rel (%p524) target = $region68
        $region67: #{tpu_custom_call.1} parent=11 // pred_region
          _
        $region68: #{tpu_custom_call.1} parent=11 // pred_fallthru
          _
        // Predicated region
        $region69: #{tpu_custom_call.1} parent=11 // pred_check
          %p527 = pneg %p373
        $region70: #{tpu_custom_call.1} parent=11 // pred_check_branch
          %529 = sbr.rel (%p527) target = $region72
        $region71: #{tpu_custom_call.1} parent=11 // pred_region
          _
        $region72: #{tpu_custom_call.1} parent=11 // pred_fallthru
          _
        // Predicated region
        $region73: #{tpu_custom_call.1} parent=11 // pred_check
          %p530 = pneg %p394
        $region74: #{tpu_custom_call.1} parent=11 // pred_check_branch
          %532 = sbr.rel (%p530) target = $region76
        $region75: #{tpu_custom_call.1} parent=11 // pred_region
          _
        $region76: #{tpu_custom_call.1} parent=11 // pred_fallthru
          _
      $region12: #{tpu_custom_call.1} parent=5 // pred_fallthru
        _
      %p533 = scmp.lt.s32.totalorder %s32, 2
      // Predicated region
      $region77: #{tpu_custom_call.1} parent=5 // pred_check
        %p534 = pneg %p533
      $region78: #{tpu_custom_call.1} parent=5 // pred_check_branch
        %536 = sbr.rel (%p534) target = $region80
      $region79: #{tpu_custom_call.1} parent=5 // pred_region
        // Predicated region
        $region81: #{tpu_custom_call.1} parent=79 // pred_check
          %p537 = pneg %p52
        $region82: #{tpu_custom_call.1} parent=79 // pred_check_branch
          %539 = sbr.rel (%p537) target = $region84
        $region83: #{tpu_custom_call.1} parent=79 // pred_region
          %s540 = sand.u32 %s42, 1
          %s541 = scalar_lea.sflag [#allocation3], %s540
          %s542 = sand.u32 %s42, 1
          %s543 = smul.addr %s542, 8
          %s544 = scalar_lea.vmem [#allocation2], %s543
          %s546 = ssub.s32 128, 128
          %547 = vsyncadd %s541, %s546
          %s548 = smul.addr %s32, 128
          %s549 = scalar_lea.hbm %s0, %s548
          %s551 = sshll.u32 %s544, 4
          %s552 = int_to_ptr.vmem [resolvable:$true] %s551
          %554 = dma.hbm_to_vmem [thread:$0]  %s549, 128, %s552, %s541
        $region84: #{tpu_custom_call.1} parent=79 // pred_fallthru
          _
      $region80: #{tpu_custom_call.1} parent=5 // pred_fallthru
        _
      %p555 = scmp.le.s32.totalorder 1, %s32
      %p556 = scmp.lt.s32.totalorder %s32, 3
      %p557 = pnand %p555, %p556
      %p558 = pneg %p557
      // Predicated region
      $region85: #{tpu_custom_call.1} parent=5 // pred_check
        _
      $region86: #{tpu_custom_call.1} parent=5 // pred_check_branch
        %560 = sbr.rel (%p557) target = $region88
      $region87: #{tpu_custom_call.1} parent=5 // pred_region
        %s561 = ssub.s32 %s32, 1
        %s562 = sand.u32 %s45, 1
        %s563 = scalar_lea.sflag [#allocation3], %s562
        %s564 = sand.u32 %s45, 1
        %s565 = smul.addr %s564, 8
        %s566 = scalar_lea.vmem [#allocation2], %s565
        // Predicated region
        $region89: #{tpu_custom_call.1} parent=87 // pred_check
          %p567 = pneg %p58
        $region90: #{tpu_custom_call.1} parent=87 // pred_check_branch
          %569 = sbr.rel (%p567) target = $region92
        $region91: #{tpu_custom_call.1} parent=87 // pred_region
          %570 = dma.done %s563, 128
        $region92: #{tpu_custom_call.1} parent=87 // pred_fallthru
          _
        // Predicated region
        $region93: #{tpu_custom_call.1} parent=87 // pred_check
          %p571 = pneg %p121
        $region94: #{tpu_custom_call.1} parent=87 // pred_check_branch
          %573 = sbr.rel (%p571) target = $region96
        $region95: #{tpu_custom_call.1} parent=87 // pred_region
          %574 = dma.done [#allocation6], 6144
        $region96: #{tpu_custom_call.1} parent=87 // pred_fallthru
          _
        // Predicated region
        $region97: #{tpu_custom_call.1} parent=87 // pred_check
          %p575 = pneg %p205
        $region98: #{tpu_custom_call.1} parent=87 // pred_check_branch
          %577 = sbr.rel (%p575) target = $region100
        $region99: #{tpu_custom_call.1} parent=87 // pred_region
          %578 = dma.done [#allocation6], 6144
        $region100: #{tpu_custom_call.1} parent=87 // pred_fallthru
          _
        // Predicated region
        $region101: #{tpu_custom_call.1} parent=87 // pred_check
          %p579 = pneg %p226
        $region102: #{tpu_custom_call.1} parent=87 // pred_check_branch
          %581 = sbr.rel (%p579) target = $region104
        $region103: #{tpu_custom_call.1} parent=87 // pred_region
          %582 = dma.done [#allocation9], 6144
        $region104: #{tpu_custom_call.1} parent=87 // pred_fallthru
          _
        // Predicated region
        $region105: #{tpu_custom_call.1} parent=87 // pred_check
          %p583 = pneg %p310
        $region106: #{tpu_custom_call.1} parent=87 // pred_check_branch
          %585 = sbr.rel (%p583) target = $region108
        $region107: #{tpu_custom_call.1} parent=87 // pred_region
          %586 = dma.done [#allocation9], 6144
        $region108: #{tpu_custom_call.1} parent=87 // pred_fallthru
          _
        // Predicated region
        $region109: #{tpu_custom_call.1} parent=87 // pred_check
          %p587 = pneg %p331
        $region110: #{tpu_custom_call.1} parent=87 // pred_check_branch
          %589 = sbr.rel (%p587) target = $region112
        $region111: #{tpu_custom_call.1} parent=87 // pred_region
          %590 = dma.done [#allocation12], 6144
        $region112: #{tpu_custom_call.1} parent=87 // pred_fallthru
          _
        %s591 = sand.u32 %s45, 1
        %s592 = scalar_lea.sflag [#allocation3], %s591
        %s593 = sand.u32 %s45, 1
        %s594 = smul.addr %s593, 8
        %s595 = scalar_lea.vmem [#allocation2], %s594
        %p596 = pneg %p58
        %p597 = pneg %p55
        %p598 = pneg %p79
        %p599 = pneg %p76
        %p600 = pneg %p100
        %p601 = pneg %p97
        %p602 = pneg %p121
        %p603 = pneg %p118
        %p604 = pneg %p142
        %p605 = pneg %p139
        %p606 = pneg %p163
        %p607 = pneg %p160
        %p608 = pneg %p184
        %p609 = pneg %p181
        %p610 = pneg %p205
        %p611 = pneg %p202
        %p612 = pneg %p226
        %p613 = pneg %p223
        %p614 = pneg %p247
        %p615 = pneg %p244
        %p616 = pneg %p268
        %p617 = pneg %p265
        %p618 = pneg %p289
        %p619 = pneg %p286
        %p620 = pneg %p310
        %p621 = pneg %p307
        %p622 = pneg %p331
        %p623 = pneg %p328
        %p624 = pneg %p352
        %p625 = pneg %p349
        %p626 = pneg %p373
        %p627 = pneg %p370
        %p628 = pneg %p394
        %p629 = pneg %p391
        %p630 = pneg %p420
        %p631 = pneg %p417
        %s632 = sand.u32 %s407, 1
        %s633 = scalar_lea.sflag [#allocation4], %s632
        %s634 = sand.u32 %s407, 1
        %s635 = smul.addr %s634, 8
        %s636 = scalar_lea.vmem [#allocation13], %s635
        %v637 = vlaneseq
        %v638 = vshrl.u32 %v637, 7
        %vm639 = vcmp.ge.s32.totalorder %v638, 1
        %v640 = vsel %vm639, 1, 0
        %v641 = vcvt.s32.f32 %v640
        %vm642 = vcmp.lt.s32.totalorder %v638, 7
        %v643 = vsel %vm642, 1, 0
        %v644 = vcvt.s32.f32 %v643
        %v645 = vld [vmem:[%s566] sm:$0xff]
        %v646 = vrot.slane %v645, 7
        %v647 = vmul.f32 %v641, %v646
        %v648 = vrot.slane %v645, 1
        %v649 = vmul.f32 %v644, %v648
        %v650 = vld [vmem:[%s1] sm:$0xff]
        %v651 = vld [vmem:[%s1 + $0x8] sm:$0xff]
        %v652 = vld [vmem:[%s1 + $0x10] sm:$0xff]
        %v653 = vld [vmem:[%s1 + $0x18] sm:$0xff]
        %v654 = vld [vmem:[%s1 + $0x20] sm:$0xff]
        %v655 = vld [vmem:[%s1 + $0x28] sm:$0xff]
        %v656 = vld [vmem:[%s1 + $0x30] sm:$0xff]
        %v657 = vld [vmem:[%s1 + $0x38] sm:$0xff]
        %v658 = vld [vmem:[%s1 + $0x40] sm:$0xff]
        %v659 = vld [vmem:[%s1 + $0x48] sm:$0xff]
        %v660 = vld [vmem:[%s1 + $0x50] sm:$0xff]
        %v661 = vld [vmem:[%s1 + $0x58] sm:$0xff]
        %v662 = vld [vmem:[%s1 + $0x60] sm:$0xff]
        %v663 = vld [vmem:[%s1 + $0x68] sm:$0xff]
        %v664 = vld [vmem:[%s1 + $0x70] sm:$0xff]
        %v665 = vld [vmem:[%s1 + $0x78] sm:$0xff]
        %s666 = scalar_lea.vmem %s1, 128
        %v667 = vld [vmem:[%s666] sm:$0xff]
        %v668 = vld [vmem:[%s666 + $0x8] sm:$0xff]
        %v669 = vld [vmem:[%s666 + $0x10] sm:$0xff]
        %v670 = vld [vmem:[%s666 + $0x18] sm:$0xff]
        %v671 = vld [vmem:[%s666 + $0x20] sm:$0xff]
        %v672 = vld [vmem:[%s666 + $0x28] sm:$0xff]
        %v673 = vld [vmem:[%s666 + $0x30] sm:$0xff]
        %v674 = vld [vmem:[%s666 + $0x38] sm:$0xff]
        %v675 = vld [vmem:[%s666 + $0x40] sm:$0xff]
        %v676 = vld [vmem:[%s666 + $0x48] sm:$0xff]
        %v677 = vld [vmem:[%s666 + $0x50] sm:$0xff]
        %v678 = vld [vmem:[%s666 + $0x58] sm:$0xff]
        %v679 = vld [vmem:[%s666 + $0x60] sm:$0xff]
        %v680 = vld [vmem:[%s666 + $0x68] sm:$0xff]
        %v681 = vld [vmem:[%s666 + $0x70] sm:$0xff]
        %v682 = vld [vmem:[%s666 + $0x78] sm:$0xff]
        %683 = vmatprep.subr.mxu0 0.0
        %684 = vmatpush1.msra.mxu0 %v667
        %685 = vmatprep.subr.mxu0 0.0
        %686 = vmatpush1.msra.mxu0 %v668
        %687 = vmatprep.subr.mxu0 0.0
        %688 = vmatpush1.msra.mxu0 %v669
        %689 = vmatprep.subr.mxu0 0.0
        %690 = vmatpush1.msra.mxu0 %v670
        %691 = vmatprep.subr.mxu0 0.0
        %692 = vmatpush1.msra.mxu0 %v671
        %693 = vmatprep.subr.mxu0 0.0
        %694 = vmatpush1.msra.mxu0 %v672
        %695 = vmatprep.subr.mxu0 0.0
        %696 = vmatpush1.msra.mxu0 %v673
        %697 = vmatprep.subr.mxu0 0.0
        %698 = vmatpush1.msra.mxu0 %v674
        %699 = vmatprep.subr.mxu0 0.0
        %700 = vmatpush1.msra.mxu0 %v675
        %701 = vmatprep.subr.mxu0 0.0
        %702 = vmatpush1.msra.mxu0 %v676
        %703 = vmatprep.subr.mxu0 0.0
        %704 = vmatpush1.msra.mxu0 %v677
        %705 = vmatprep.subr.mxu0 0.0
        %706 = vmatpush1.msra.mxu0 %v678
        %707 = vmatprep.subr.mxu0 0.0
        %708 = vmatpush1.msra.mxu0 %v679
        %709 = vmatprep.subr.mxu0 0.0
        %710 = vmatpush1.msra.mxu0 %v680
        %711 = vmatprep.subr.mxu0 0.0
        %712 = vmatpush1.msra.mxu0 %v681
        %713 = vmatprep.subr.mxu0 0.0
        %714 = vmatpush1.msra.mxu0 %v682
        %715 = vmatprep.subr.mxu0 0.0
        %716 = vmatpush1.msra.mxu0 0.0
        %717 = vmatprep.subr.mxu0 0.0
        %718 = vmatpush1.msra.mxu0 0.0
        %719 = vmatprep.subr.mxu0 0.0
        %720 = vmatpush1.msra.mxu0 0.0
        %721 = vmatprep.subr.mxu0 0.0
        %722 = vmatpush1.msra.mxu0 0.0
        %723 = vmatprep.subr.mxu0 0.0
        %724 = vmatpush1.msra.mxu0 0.0
        %725 = vmatprep.subr.mxu0 0.0
        %726 = vmatpush1.msra.mxu0 0.0
        %727 = vmatprep.subr.mxu0 0.0
        %728 = vmatpush1.msra.mxu0 0.0
        %729 = vmatprep.subr.mxu0 0.0
        %730 = vmatpush1.msra.mxu0 0.0
        %731 = vmatprep.subr.mxu0 0.0
        %732 = vmatpush1.msra.mxu0 0.0
        %733 = vmatprep.subr.mxu0 0.0
        %734 = vmatpush1.msra.mxu0 0.0
        %735 = vmatprep.subr.mxu0 0.0
        %736 = vmatpush1.msra.mxu0 0.0
        %737 = vmatprep.subr.mxu0 0.0
        %738 = vmatpush1.msra.mxu0 0.0
        %739 = vmatprep.subr.mxu0 0.0
        %740 = vmatpush1.msra.mxu0 0.0
        %741 = vmatprep.subr.mxu0 0.0
        %742 = vmatpush1.msra.mxu0 0.0
        %743 = vmatprep.subr.mxu0 0.0
        %744 = vmatpush1.msra.mxu0 0.0
        %745 = vmatprep.subr.mxu0 0.0
        %746 = vmatpush1.msra.mxu0 0.0
        %747 = vmatprep.mubr.f32.mxu0 0.0
        %748 = vmatmul.mubr.f32.gmra.mrb[0].mxu0 %v645
        %v749 = vpop.f32.mrb[0].mxu0
        %v750 = vadd.f32 0.0, %v749
        %v751 = vpop.f32.mrb[0].mxu0
        %752 = vdwg.mxu0
        %753 = vmatprep.subr.mxu0 0.0
        %754 = vmatpush1.msra.mxu0 %v650
        %755 = vmatprep.subr.mxu0 0.0
        %756 = vmatpush1.msra.mxu0 %v651
        %757 = vmatprep.subr.mxu0 0.0
        %758 = vmatpush1.msra.mxu0 %v652
        %759 = vmatprep.subr.mxu0 0.0
        %760 = vmatpush1.msra.mxu0 %v653
        %761 = vmatprep.subr.mxu0 0.0
        %762 = vmatpush1.msra.mxu0 %v654
        %763 = vmatprep.subr.mxu0 0.0
        %764 = vmatpush1.msra.mxu0 %v655
        %765 = vmatprep.subr.mxu0 0.0
        %766 = vmatpush1.msra.mxu0 %v656
        %767 = vmatprep.subr.mxu0 0.0
        %768 = vmatpush1.msra.mxu0 %v657
        %769 = vmatprep.subr.mxu0 0.0
        %770 = vmatpush1.msra.mxu0 %v658
        %771 = vmatprep.subr.mxu0 0.0
        %772 = vmatpush1.msra.mxu0 %v659
        %773 = vmatprep.subr.mxu0 0.0
        %774 = vmatpush1.msra.mxu0 %v660
        %775 = vmatprep.subr.mxu0 0.0
        %776 = vmatpush1.msra.mxu0 %v661
        %777 = vmatprep.subr.mxu0 0.0
        %778 = vmatpush1.msra.mxu0 %v662
        %779 = vmatprep.subr.mxu0 0.0
        %780 = vmatpush1.msra.mxu0 %v663
        %781 = vmatprep.subr.mxu0 0.0
        %782 = vmatpush1.msra.mxu0 %v664
        %783 = vmatprep.subr.mxu0 0.0
        %784 = vmatpush1.msra.mxu0 %v665
        %785 = vmatprep.subr.mxu0 0.0
        %786 = vmatpush1.msra.mxu0 0.0
        %787 = vmatprep.subr.mxu0 0.0
        %788 = vmatpush1.msra.mxu0 0.0
        %789 = vmatprep.subr.mxu0 0.0
        %790 = vmatpush1.msra.mxu0 0.0
        %791 = vmatprep.subr.mxu0 0.0
        %792 = vmatpush1.msra.mxu0 0.0
        %793 = vmatprep.subr.mxu0 0.0
        %794 = vmatpush1.msra.mxu0 0.0
        %795 = vmatprep.subr.mxu0 0.0
        %796 = vmatpush1.msra.mxu0 0.0
        %797 = vmatprep.subr.mxu0 0.0
        %798 = vmatpush1.msra.mxu0 0.0
        %799 = vmatprep.subr.mxu0 0.0
        %800 = vmatpush1.msra.mxu0 0.0
        %801 = vmatprep.subr.mxu0 0.0
        %802 = vmatpush1.msra.mxu0 0.0
        %803 = vmatprep.subr.mxu0 0.0
        %804 = vmatpush1.msra.mxu0 0.0
        %805 = vmatprep.subr.mxu0 0.0
        %806 = vmatpush1.msra.mxu0 0.0
        %807 = vmatprep.subr.mxu0 0.0
        %808 = vmatpush1.msra.mxu0 0.0
        %809 = vmatprep.subr.mxu0 0.0
        %810 = vmatpush1.msra.mxu0 0.0
        %811 = vmatprep.subr.mxu0 0.0
        %812 = vmatpush1.msra.mxu0 0.0
        %813 = vmatprep.subr.mxu0 0.0
        %814 = vmatpush1.msra.mxu0 0.0
        %815 = vmatprep.subr.mxu0 0.0
        %816 = vmatpush1.msra.mxu0 0.0
        %817 = vmatprep.mubr.f32.mxu0 0.0
        %818 = vmatmul.mubr.f32.gmra.mrb[0].mxu0 %v647
        %v819 = vpop.f32.mrb[0].mxu0
        %v820 = vadd.f32 %v750, %v819
        %v821 = vpop.f32.mrb[0].mxu0
        %822 = vdwg.mxu0
        %s823 = scalar_lea.vmem %s1, 256
        %v824 = vld [vmem:[%s823] sm:$0xff]
        %v825 = vld [vmem:[%s823 + $0x8] sm:$0xff]
        %v826 = vld [vmem:[%s823 + $0x10] sm:$0xff]
        %v827 = vld [vmem:[%s823 + $0x18] sm:$0xff]
        %v828 = vld [vmem:[%s823 + $0x20] sm:$0xff]
        %v829 = vld [vmem:[%s823 + $0x28] sm:$0xff]
        %v830 = vld [vmem:[%s823 + $0x30] sm:$0xff]
        %v831 = vld [vmem:[%s823 + $0x38] sm:$0xff]
        %v832 = vld [vmem:[%s823 + $0x40] sm:$0xff]
        %v833 = vld [vmem:[%s823 + $0x48] sm:$0xff]
        %v834 = vld [vmem:[%s823 + $0x50] sm:$0xff]
        %v835 = vld [vmem:[%s823 + $0x58] sm:$0xff]
        %v836 = vld [vmem:[%s823 + $0x60] sm:$0xff]
        %v837 = vld [vmem:[%s823 + $0x68] sm:$0xff]
        %v838 = vld [vmem:[%s823 + $0x70] sm:$0xff]
        %v839 = vld [vmem:[%s823 + $0x78] sm:$0xff]
        %840 = vmatprep.subr.mxu0 0.0
        %841 = vmatpush1.msra.mxu0 %v824
        %842 = vmatprep.subr.mxu0 0.0
        %843 = vmatpush1.msra.mxu0 %v825
        %844 = vmatprep.subr.mxu0 0.0
        %845 = vmatpush1.msra.mxu0 %v826
        %846 = vmatprep.subr.mxu0 0.0
        %847 = vmatpush1.msra.mxu0 %v827
        %848 = vmatprep.subr.mxu0 0.0
        %849 = vmatpush1.msra.mxu0 %v828
        %850 = vmatprep.subr.mxu0 0.0
        %851 = vmatpush1.msra.mxu0 %v829
        %852 = vmatprep.subr.mxu0 0.0
        %853 = vmatpush1.msra.mxu0 %v830
        %854 = vmatprep.subr.mxu0 0.0
        %855 = vmatpush1.msra.mxu0 %v831
        %856 = vmatprep.subr.mxu0 0.0
        %857 = vmatpush1.msra.mxu0 %v832
        %858 = vmatprep.subr.mxu0 0.0
        %859 = vmatpush1.msra.mxu0 %v833
        %860 = vmatprep.subr.mxu0 0.0
        %861 = vmatpush1.msra.mxu0 %v834
        %862 = vmatprep.subr.mxu0 0.0
        %863 = vmatpush1.msra.mxu0 %v835
        %864 = vmatprep.subr.mxu0 0.0
        %865 = vmatpush1.msra.mxu0 %v836
        %866 = vmatprep.subr.mxu0 0.0
        %867 = vmatpush1.msra.mxu0 %v837
        %868 = vmatprep.subr.mxu0 0.0
        %869 = vmatpush1.msra.mxu0 %v838
        %870 = vmatprep.subr.mxu0 0.0
        %871 = vmatpush1.msra.mxu0 %v839
        %872 = vmatprep.subr.mxu0 0.0
        %873 = vmatpush1.msra.mxu0 0.0
        %874 = vmatprep.subr.mxu0 0.0
        %875 = vmatpush1.msra.mxu0 0.0
        %876 = vmatprep.subr.mxu0 0.0
        %877 = vmatpush1.msra.mxu0 0.0
        %878 = vmatprep.subr.mxu0 0.0
        %879 = vmatpush1.msra.mxu0 0.0
        %880 = vmatprep.subr.mxu0 0.0
        %881 = vmatpush1.msra.mxu0 0.0
        %882 = vmatprep.subr.mxu0 0.0
        %883 = vmatpush1.msra.mxu0 0.0
        %884 = vmatprep.subr.mxu0 0.0
        %885 = vmatpush1.msra.mxu0 0.0
        %886 = vmatprep.subr.mxu0 0.0
        %887 = vmatpush1.msra.mxu0 0.0
        %888 = vmatprep.subr.mxu0 0.0
        %889 = vmatpush1.msra.mxu0 0.0
        %890 = vmatprep.subr.mxu0 0.0
        %891 = vmatpush1.msra.mxu0 0.0
        %892 = vmatprep.subr.mxu0 0.0
        %893 = vmatpush1.msra.mxu0 0.0
        %894 = vmatprep.subr.mxu0 0.0
        %895 = vmatpush1.msra.mxu0 0.0
        %896 = vmatprep.subr.mxu0 0.0
        %897 = vmatpush1.msra.mxu0 0.0
        %898 = vmatprep.subr.mxu0 0.0
        %899 = vmatpush1.msra.mxu0 0.0
        %900 = vmatprep.subr.mxu0 0.0
        %901 = vmatpush1.msra.mxu0 0.0
        %902 = vmatprep.subr.mxu0 0.0
        %903 = vmatpush1.msra.mxu0 0.0
        %904 = vmatprep.mubr.f32.mxu0 0.0
        %905 = vmatmul.mubr.f32.gmra.mrb[0].mxu0 %v649
        %v906 = vpop.f32.mrb[0].mxu0
        %v907 = vadd.f32 0.0, %v906
        %v908 = vpop.f32.mrb[0].mxu0
        %909 = vdwg.mxu0
        %v910 = vadd.f32 %v820, %v907
        %v911 = vld [vmem:[%s2] sm:$0x1]
        %v913 = vlaneseq
        %v914 = vshrl.u32 %v913, 7
        %v915 = vsub.s32 0, %v914
        %v916 = vrot.slane %v911, %v915
        %v918 = vadd.f32 %v910, %v916
        %v919 = vmax.f32 %v918, 0.0
        %v920 = vrot.slane %v919, 7
        %v921 = vmul.f32 %v641, %v920
        %v922 = vrot.slane %v919, 1
        %v923 = vmul.f32 %v644, %v922
        %v924 = vld [vmem:[#allocation5] sm:$0xff]
        %v925 = vld [vmem:[#allocation5 + $0x8] sm:$0xff]
        %v926 = vld [vmem:[#allocation5 + $0x10] sm:$0xff]
        %v927 = vld [vmem:[#allocation5 + $0x18] sm:$0xff]
        %v928 = vld [vmem:[#allocation5 + $0x20] sm:$0xff]
        %v929 = vld [vmem:[#allocation5 + $0x28] sm:$0xff]
        %v930 = vld [vmem:[#allocation5 + $0x30] sm:$0xff]
        %v931 = vld [vmem:[#allocation5 + $0x38] sm:$0xff]
        %v932 = vld [vmem:[#allocation5 + $0x40] sm:$0xff]
        %v933 = vld [vmem:[#allocation5 + $0x48] sm:$0xff]
        %v934 = vld [vmem:[#allocation5 + $0x50] sm:$0xff]
        %v935 = vld [vmem:[#allocation5 + $0x58] sm:$0xff]
        %v936 = vld [vmem:[#allocation5 + $0x60] sm:$0xff]
        %v937 = vld [vmem:[#allocation5 + $0x68] sm:$0xff]
        %v938 = vld [vmem:[#allocation5 + $0x70] sm:$0xff]
        %v939 = vld [vmem:[#allocation5 + $0x78] sm:$0xff]
        %s940 = scalar_lea.vmem [#allocation5], 128
        %v941 = vld [vmem:[%s940] sm:$0xff]
        %v942 = vld [vmem:[%s940 + $0x8] sm:$0xff]
        %v943 = vld [vmem:[%s940 + $0x10] sm:$0xff]
        %v944 = vld [vmem:[%s940 + $0x18] sm:$0xff]
        %v945 = vld [vmem:[%s940 + $0x20] sm:$0xff]
        %v946 = vld [vmem:[%s940 + $0x28] sm:$0xff]
        %v947 = vld [vmem:[%s940 + $0x30] sm:$0xff]
        %v948 = vld [vmem:[%s940 + $0x38] sm:$0xff]
        %v949 = vld [vmem:[%s940 + $0x40] sm:$0xff]
        %v950 = vld [vmem:[%s940 + $0x48] sm:$0xff]
        %v951 = vld [vmem:[%s940 + $0x50] sm:$0xff]
        %v952 = vld [vmem:[%s940 + $0x58] sm:$0xff]
        %v953 = vld [vmem:[%s940 + $0x60] sm:$0xff]
        %v954 = vld [vmem:[%s940 + $0x68] sm:$0xff]
        %v955 = vld [vmem:[%s940 + $0x70] sm:$0xff]
        %v956 = vld [vmem:[%s940 + $0x78] sm:$0xff]
        %957 = vmatprep.subr.mxu0 0.0
        %958 = vmatpush1.msra.mxu0 %v941
        %959 = vmatprep.subr.mxu0 0.0
        %960 = vmatpush1.msra.mxu0 %v942
        %961 = vmatprep.subr.mxu0 0.0
        %962 = vmatpush1.msra.mxu0 %v943
        %963 = vmatprep.subr.mxu0 0.0
        %964 = vmatpush1.msra.mxu0 %v944
        %965 = vmatprep.subr.mxu0 0.0
        %966 = vmatpush1.msra.mxu0 %v945
        %967 = vmatprep.subr.mxu0 0.0
        %968 = vmatpush1.msra.mxu0 %v946
        %969 = vmatprep.subr.mxu0 0.0
        %970 = vmatpush1.msra.mxu0 %v947
        %971 = vmatprep.subr.mxu0 0.0
        %972 = vmatpush1.msra.mxu0 %v948
        %973 = vmatprep.subr.mxu0 0.0
        %974 = vmatpush1.msra.mxu0 %v949
        %975 = vmatprep.subr.mxu0 0.0
        %976 = vmatpush1.msra.mxu0 %v950
        %977 = vmatprep.subr.mxu0 0.0
        %978 = vmatpush1.msra.mxu0 %v951
        %979 = vmatprep.subr.mxu0 0.0
        %980 = vmatpush1.msra.mxu0 %v952
        %981 = vmatprep.subr.mxu0 0.0
        %982 = vmatpush1.msra.mxu0 %v953
        %983 = vmatprep.subr.mxu0 0.0
        %984 = vmatpush1.msra.mxu0 %v954
        %985 = vmatprep.subr.mxu0 0.0
        %986 = vmatpush1.msra.mxu0 %v955
        %987 = vmatprep.subr.mxu0 0.0
        %988 = vmatpush1.msra.mxu0 %v956
        %989 = vmatprep.subr.mxu0 0.0
        %990 = vmatpush1.msra.mxu0 0.0
        %991 = vmatprep.subr.mxu0 0.0
        %992 = vmatpush1.msra.mxu0 0.0
        %993 = vmatprep.subr.mxu0 0.0
        %994 = vmatpush1.msra.mxu0 0.0
        %995 = vmatprep.subr.mxu0 0.0
        %996 = vmatpush1.msra.mxu0 0.0
        %997 = vmatprep.subr.mxu0 0.0
        %998 = vmatpush1.msra.mxu0 0.0
        %999 = vmatprep.subr.mxu0 0.0
        %1000 = vmatpush1.msra.mxu0 0.0
        %1001 = vmatprep.subr.mxu0 0.0
        %1002 = vmatpush1.msra.mxu0 0.0
        %1003 = vmatprep.subr.mxu0 0.0
        %1004 = vmatpush1.msra.mxu0 0.0
        %1005 = vmatprep.subr.mxu0 0.0
        %1006 = vmatpush1.msra.mxu0 0.0
        %1007 = vmatprep.subr.mxu0 0.0
        %1008 = vmatpush1.msra.mxu0 0.0
        %1009 = vmatprep.subr.mxu0 0.0
        %1010 = vmatpush1.msra.mxu0 0.0
        %1011 = vmatprep.subr.mxu0 0.0
        %1012 = vmatpush1.msra.mxu0 0.0
        %1013 = vmatprep.subr.mxu0 0.0
        %1014 = vmatpush1.msra.mxu0 0.0
        %1015 = vmatprep.subr.mxu0 0.0
        %1016 = vmatpush1.msra.mxu0 0.0
        %1017 = vmatprep.subr.mxu0 0.0
        %1018 = vmatpush1.msra.mxu0 0.0
        %1019 = vmatprep.subr.mxu0 0.0
        %1020 = vmatpush1.msra.mxu0 0.0
        %1021 = vmatprep.mubr.f32.mxu0 0.0
        %1022 = vmatmul.mubr.f32.gmra.mrb[0].mxu0 %v919
        %v1023 = vpop.f32.mrb[0].mxu0
        %v1024 = vadd.f32 0.0, %v1023
        %v1025 = vpop.f32.mrb[0].mxu0
        %1026 = vdwg.mxu0
        %1027 = vmatprep.subr.mxu0 0.0
        %1028 = vmatpush1.msra.mxu0 %v924
        %1029 = vmatprep.subr.mxu0 0.0
        %1030 = vmatpush1.msra.mxu0 %v925
        %1031 = vmatprep.subr.mxu0 0.0
        %1032 = vmatpush1.msra.mxu0 %v926
        %1033 = vmatprep.subr.mxu0 0.0
        %1034 = vmatpush1.msra.mxu0 %v927
        %1035 = vmatprep.subr.mxu0 0.0
        %1036 = vmatpush1.msra.mxu0 %v928
        %1037 = vmatprep.subr.mxu0 0.0
        %1038 = vmatpush1.msra.mxu0 %v929
        %1039 = vmatprep.subr.mxu0 0.0
        %1040 = vmatpush1.msra.mxu0 %v930
        %1041 = vmatprep.subr.mxu0 0.0
        %1042 = vmatpush1.msra.mxu0 %v931
        %1043 = vmatprep.subr.mxu0 0.0
        %1044 = vmatpush1.msra.mxu0 %v932
        %1045 = vmatprep.subr.mxu0 0.0
        %1046 = vmatpush1.msra.mxu0 %v933
        %1047 = vmatprep.subr.mxu0 0.0
        %1048 = vmatpush1.msra.mxu0 %v934
        %1049 = vmatprep.subr.mxu0 0.0
        %1050 = vmatpush1.msra.mxu0 %v935
        %1051 = vmatprep.subr.mxu0 0.0
        %1052 = vmatpush1.msra.mxu0 %v936
        %1053 = vmatprep.subr.mxu0 0.0
        %1054 = vmatpush1.msra.mxu0 %v937
        %1055 = vmatprep.subr.mxu0 0.0
        %1056 = vmatpush1.msra.mxu0 %v938
        %1057 = vmatprep.subr.mxu0 0.0
        %1058 = vmatpush1.msra.mxu0 %v939
        %1059 = vmatprep.subr.mxu0 0.0
        %1060 = vmatpush1.msra.mxu0 0.0
        %1061 = vmatprep.subr.mxu0 0.0
        %1062 = vmatpush1.msra.mxu0 0.0
        %1063 = vmatprep.subr.mxu0 0.0
        %1064 = vmatpush1.msra.mxu0 0.0
        %1065 = vmatprep.subr.mxu0 0.0
        %1066 = vmatpush1.msra.mxu0 0.0
        %1067 = vmatprep.subr.mxu0 0.0
        %1068 = vmatpush1.msra.mxu0 0.0
        %1069 = vmatprep.subr.mxu0 0.0
        %1070 = vmatpush1.msra.mxu0 0.0
        %1071 = vmatprep.subr.mxu0 0.0
        %1072 = vmatpush1.msra.mxu0 0.0
        %1073 = vmatprep.subr.mxu0 0.0
        %1074 = vmatpush1.msra.mxu0 0.0
        %1075 = vmatprep.subr.mxu0 0.0
        %1076 = vmatpush1.msra.mxu0 0.0
        %1077 = vmatprep.subr.mxu0 0.0
        %1078 = vmatpush1.msra.mxu0 0.0
        %1079 = vmatprep.subr.mxu0 0.0
        %1080 = vmatpush1.msra.mxu0 0.0
        %1081 = vmatprep.subr.mxu0 0.0
        %1082 = vmatpush1.msra.mxu0 0.0
        %1083 = vmatprep.subr.mxu0 0.0
        %1084 = vmatpush1.msra.mxu0 0.0
        %1085 = vmatprep.subr.mxu0 0.0
        %1086 = vmatpush1.msra.mxu0 0.0
        %1087 = vmatprep.subr.mxu0 0.0
        %1088 = vmatpush1.msra.mxu0 0.0
        %1089 = vmatprep.subr.mxu0 0.0
        %1090 = vmatpush1.msra.mxu0 0.0
        %1091 = vmatprep.mubr.f32.mxu0 0.0
        %1092 = vmatmul.mubr.f32.gmra.mrb[0].mxu0 %v921
        %v1093 = vpop.f32.mrb[0].mxu0
        %v1094 = vadd.f32 %v1024, %v1093
        %v1095 = vpop.f32.mrb[0].mxu0
        %1096 = vdwg.mxu0
        %s1097 = scalar_lea.vmem [#allocation5], 256
        %v1098 = vld [vmem:[%s1097] sm:$0xff]
        %v1099 = vld [vmem:[%s1097 + $0x8] sm:$0xff]
        %v1100 = vld [vmem:[%s1097 + $0x10] sm:$0xff]
        %v1101 = vld [vmem:[%s1097 + $0x18] sm:$0xff]
        %v1102 = vld [vmem:[%s1097 + $0x20] sm:$0xff]
        %v1103 = vld [vmem:[%s1097 + $0x28] sm:$0xff]
        %v1104 = vld [vmem:[%s1097 + $0x30] sm:$0xff]
        %v1105 = vld [vmem:[%s1097 + $0x38] sm:$0xff]
        %v1106 = vld [vmem:[%s1097 + $0x40] sm:$0xff]
        %v1107 = vld [vmem:[%s1097 + $0x48] sm:$0xff]
        %v1108 = vld [vmem:[%s1097 + $0x50] sm:$0xff]
        %v1109 = vld [vmem:[%s1097 + $0x58] sm:$0xff]
        %v1110 = vld [vmem:[%s1097 + $0x60] sm:$0xff]
        %v1111 = vld [vmem:[%s1097 + $0x68] sm:$0xff]
        %v1112 = vld [vmem:[%s1097 + $0x70] sm:$0xff]
        %v1113 = vld [vmem:[%s1097 + $0x78] sm:$0xff]
        %1114 = vmatprep.subr.mxu0 0.0
        %1115 = vmatpush1.msra.mxu0 %v1098
        %1116 = vmatprep.subr.mxu0 0.0
        %1117 = vmatpush1.msra.mxu0 %v1099
        %1118 = vmatprep.subr.mxu0 0.0
        %1119 = vmatpush1.msra.mxu0 %v1100
        %1120 = vmatprep.subr.mxu0 0.0
        %1121 = vmatpush1.msra.mxu0 %v1101
        %1122 = vmatprep.subr.mxu0 0.0
        %1123 = vmatpush1.msra.mxu0 %v1102
        %1124 = vmatprep.subr.mxu0 0.0
        %1125 = vmatpush1.msra.mxu0 %v1103
        %1126 = vmatprep.subr.mxu0 0.0
        %1127 = vmatpush1.msra.mxu0 %v1104
        %1128 = vmatprep.subr.mxu0 0.0
        %1129 = vmatpush1.msra.mxu0 %v1105
        %1130 = vmatprep.subr.mxu0 0.0
        %1131 = vmatpush1.msra.mxu0 %v1106
        %1132 = vmatprep.subr.mxu0 0.0
        %1133 = vmatpush1.msra.mxu0 %v1107
        %1134 = vmatprep.subr.mxu0 0.0
        %1135 = vmatpush1.msra.mxu0 %v1108
        %1136 = vmatprep.subr.mxu0 0.0
        %1137 = vmatpush1.msra.mxu0 %v1109
        %1138 = vmatprep.subr.mxu0 0.0
        %1139 = vmatpush1.msra.mxu0 %v1110
        %1140 = vmatprep.subr.mxu0 0.0
        %1141 = vmatpush1.msra.mxu0 %v1111
        %1142 = vmatprep.subr.mxu0 0.0
        %1143 = vmatpush1.msra.mxu0 %v1112
        %1144 = vmatprep.subr.mxu0 0.0
        %1145 = vmatpush1.msra.mxu0 %v1113
        %1146 = vmatprep.subr.mxu0 0.0
        %1147 = vmatpush1.msra.mxu0 0.0
        %1148 = vmatprep.subr.mxu0 0.0
        %1149 = vmatpush1.msra.mxu0 0.0
        %1150 = vmatprep.subr.mxu0 0.0
        %1151 = vmatpush1.msra.mxu0 0.0
        %1152 = vmatprep.subr.mxu0 0.0
        %1153 = vmatpush1.msra.mxu0 0.0
        %1154 = vmatprep.subr.mxu0 0.0
        %1155 = vmatpush1.msra.mxu0 0.0
        %1156 = vmatprep.subr.mxu0 0.0
        %1157 = vmatpush1.msra.mxu0 0.0
        %1158 = vmatprep.subr.mxu0 0.0
        %1159 = vmatpush1.msra.mxu0 0.0
        %1160 = vmatprep.subr.mxu0 0.0
        %1161 = vmatpush1.msra.mxu0 0.0
        %1162 = vmatprep.subr.mxu0 0.0
        %1163 = vmatpush1.msra.mxu0 0.0
        %1164 = vmatprep.subr.mxu0 0.0
        %1165 = vmatpush1.msra.mxu0 0.0
        %1166 = vmatprep.subr.mxu0 0.0
        %1167 = vmatpush1.msra.mxu0 0.0
        %1168 = vmatprep.subr.mxu0 0.0
        %1169 = vmatpush1.msra.mxu0 0.0
        %1170 = vmatprep.subr.mxu0 0.0
        %1171 = vmatpush1.msra.mxu0 0.0
        %1172 = vmatprep.subr.mxu0 0.0
        %1173 = vmatpush1.msra.mxu0 0.0
        %1174 = vmatprep.subr.mxu0 0.0
        %1175 = vmatpush1.msra.mxu0 0.0
        %1176 = vmatprep.subr.mxu0 0.0
        %1177 = vmatpush1.msra.mxu0 0.0
        %1178 = vmatprep.mubr.f32.mxu0 0.0
        %1179 = vmatmul.mubr.f32.gmra.mrb[0].mxu0 %v923
        %v1180 = vpop.f32.mrb[0].mxu0
        %v1181 = vadd.f32 0.0, %v1180
        %v1182 = vpop.f32.mrb[0].mxu0
        %1183 = vdwg.mxu0
        %v1184 = vadd.f32 %v1094, %v1181
        %v1185 = vld [vmem:[%s4] sm:$0x1]
        %v1187 = vlaneseq
        %v1188 = vshrl.u32 %v1187, 7
        %v1189 = vsub.s32 0, %v1188
        %v1190 = vrot.slane %v1185, %v1189
        %v1192 = vadd.f32 %v1184, %v1190
        %v1193 = vrot.slane %v1192, 4
        %v1194 = vadd.f32 %v1192, %v1193
        %v1195 = vrot.slane %v1194, 2
        %v1196 = vadd.f32 %v1194, %v1195
        %v1197 = vrot.slane %v1196, 1
        %v1198 = vadd.f32 %v1196, %v1197
        %v1199 = vld [vmem:[%s5] sm:$0xff]
        %v1200 = vld [vmem:[%s5 + $0x8] sm:$0xff]
        %v1201 = vld [vmem:[%s5 + $0x10] sm:$0xff]
        %v1202 = vld [vmem:[%s5 + $0x18] sm:$0xff]
        %v1203 = vld [vmem:[%s5 + $0x20] sm:$0xff]
        %v1204 = vld [vmem:[%s5 + $0x28] sm:$0xff]
        %v1205 = vld [vmem:[%s5 + $0x30] sm:$0xff]
        %v1206 = vld [vmem:[%s5 + $0x38] sm:$0xff]
        %v1207 = vld [vmem:[%s5 + $0x40] sm:$0xff]
        %v1208 = vld [vmem:[%s5 + $0x48] sm:$0xff]
        %v1209 = vld [vmem:[%s5 + $0x50] sm:$0xff]
        %v1210 = vld [vmem:[%s5 + $0x58] sm:$0xff]
        %v1211 = vld [vmem:[%s5 + $0x60] sm:$0xff]
        %v1212 = vld [vmem:[%s5 + $0x68] sm:$0xff]
        %v1213 = vld [vmem:[%s5 + $0x70] sm:$0xff]
        %v1214 = vld [vmem:[%s5 + $0x78] sm:$0xff]
        %1215 = vmatprep.subr.mxu0 0.0
        %1216 = vmatpush1.msra.mxu0 %v1199
        %1217 = vmatprep.subr.mxu0 0.0
        %1218 = vmatpush1.msra.mxu0 %v1200
        %1219 = vmatprep.subr.mxu0 0.0
        %1220 = vmatpush1.msra.mxu0 %v1201
        %1221 = vmatprep.subr.mxu0 0.0
        %1222 = vmatpush1.msra.mxu0 %v1202
        %1223 = vmatprep.subr.mxu0 0.0
        %1224 = vmatpush1.msra.mxu0 %v1203
        %1225 = vmatprep.subr.mxu0 0.0
        %1226 = vmatpush1.msra.mxu0 %v1204
        %1227 = vmatprep.subr.mxu0 0.0
        %1228 = vmatpush1.msra.mxu0 %v1205
        %1229 = vmatprep.subr.mxu0 0.0
        %1230 = vmatpush1.msra.mxu0 %v1206
        %1231 = vmatprep.subr.mxu0 0.0
        %1232 = vmatpush1.msra.mxu0 %v1207
        %1233 = vmatprep.subr.mxu0 0.0
        %1234 = vmatpush1.msra.mxu0 %v1208
        %1235 = vmatprep.subr.mxu0 0.0
        %1236 = vmatpush1.msra.mxu0 %v1209
        %1237 = vmatprep.subr.mxu0 0.0
        %1238 = vmatpush1.msra.mxu0 %v1210
        %1239 = vmatprep.subr.mxu0 0.0
        %1240 = vmatpush1.msra.mxu0 %v1211
        %1241 = vmatprep.subr.mxu0 0.0
        %1242 = vmatpush1.msra.mxu0 %v1212
        %1243 = vmatprep.subr.mxu0 0.0
        %1244 = vmatpush1.msra.mxu0 %v1213
        %1245 = vmatprep.subr.mxu0 0.0
        %1246 = vmatpush1.msra.mxu0 %v1214
        %1247 = vmatprep.subr.mxu0 0.0
        %1248 = vmatpush1.msra.mxu0 0.0
        %1249 = vmatprep.subr.mxu0 0.0
        %1250 = vmatpush1.msra.mxu0 0.0
        %1251 = vmatprep.subr.mxu0 0.0
        %1252 = vmatpush1.msra.mxu0 0.0
        %1253 = vmatprep.subr.mxu0 0.0
        %1254 = vmatpush1.msra.mxu0 0.0
        %1255 = vmatprep.subr.mxu0 0.0
        %1256 = vmatpush1.msra.mxu0 0.0
        %1257 = vmatprep.subr.mxu0 0.0
        %1258 = vmatpush1.msra.mxu0 0.0
        %1259 = vmatprep.subr.mxu0 0.0
        %1260 = vmatpush1.msra.mxu0 0.0
        %1261 = vmatprep.subr.mxu0 0.0
        %1262 = vmatpush1.msra.mxu0 0.0
        %1263 = vmatprep.subr.mxu0 0.0
        %1264 = vmatpush1.msra.mxu0 0.0
        %1265 = vmatprep.subr.mxu0 0.0
        %1266 = vmatpush1.msra.mxu0 0.0
        %1267 = vmatprep.subr.mxu0 0.0
        %1268 = vmatpush1.msra.mxu0 0.0
        %1269 = vmatprep.subr.mxu0 0.0
        %1270 = vmatpush1.msra.mxu0 0.0
        %1271 = vmatprep.subr.mxu0 0.0
        %1272 = vmatpush1.msra.mxu0 0.0
        %1273 = vmatprep.subr.mxu0 0.0
        %1274 = vmatpush1.msra.mxu0 0.0
        %1275 = vmatprep.subr.mxu0 0.0
        %1276 = vmatpush1.msra.mxu0 0.0
        %1277 = vmatprep.subr.mxu0 0.0
        %1278 = vmatpush1.msra.mxu0 0.0
        %1279 = vmatprep.mubr.f32.mxu0 0.0
        %1280 = vmatmul.mubr.f32.gmra.mrb[0].mxu0 %v1198
        %v1281 = vpop.f32.mrb[0].mxu0
        %v1282 = vadd.f32 0.0, %v1281
        %v1283 = vpop.f32.mrb[0].mxu0
        %1284 = vdwg.mxu0
        %v1285 = vmax.f32 %v1282, 0.0
        %v1286 = vld [vmem:[%s6] sm:$0xf]
        %vm1287 = vcmask 31744
        %v1289 = vsel %vm1287, %v1285, 0
        %vm1291 = vcmask 1043456
        %v1293 = vsel %vm1291, %v1286, 0
        %1295 = vmatprep.subr.mxu0 0.0
        %1296 = vmatpush1.msra.mxu0 %v1293
        %1297 = vmatprep.subr.mxu0 0.0
        %1298 = vmatpush1.msra.mxu0 0.0
        %1299 = vmatprep.subr.mxu0 0.0
        %1300 = vmatpush1.msra.mxu0 0.0
        %1301 = vmatprep.subr.mxu0 0.0
        %1302 = vmatpush1.msra.mxu0 0.0
        %1303 = vmatprep.subr.mxu0 0.0
        %1304 = vmatpush1.msra.mxu0 0.0
        %1305 = vmatprep.subr.mxu0 0.0
        %1306 = vmatpush1.msra.mxu0 0.0
        %1307 = vmatprep.subr.mxu0 0.0
        %1308 = vmatpush1.msra.mxu0 0.0
        %1309 = vmatprep.subr.mxu0 0.0
        %1310 = vmatpush1.msra.mxu0 0.0
        %1311 = vmatprep.subr.mxu0 0.0
        %1312 = vmatpush1.msra.mxu0 0.0
        %1313 = vmatprep.subr.mxu0 0.0
        %1314 = vmatpush1.msra.mxu0 0.0
        %1315 = vmatprep.subr.mxu0 0.0
        %1316 = vmatpush1.msra.mxu0 0.0
        %1317 = vmatprep.subr.mxu0 0.0
        %1318 = vmatpush1.msra.mxu0 0.0
        %1319 = vmatprep.subr.mxu0 0.0
        %1320 = vmatpush1.msra.mxu0 0.0
        %1321 = vmatprep.subr.mxu0 0.0
        %1322 = vmatpush1.msra.mxu0 0.0
        %1323 = vmatprep.subr.mxu0 0.0
        %1324 = vmatpush1.msra.mxu0 0.0
        %1325 = vmatprep.subr.mxu0 0.0
        %1326 = vmatpush1.msra.mxu0 0.0
        %1327 = vmatprep.subr.mxu0 0.0
        %1328 = vmatpush1.msra.mxu0 0.0
        %1329 = vmatprep.subr.mxu0 0.0
        %1330 = vmatpush1.msra.mxu0 0.0
        %1331 = vmatprep.subr.mxu0 0.0
        %1332 = vmatpush1.msra.mxu0 0.0
        %1333 = vmatprep.subr.mxu0 0.0
        %1334 = vmatpush1.msra.mxu0 0.0
        %1335 = vmatprep.subr.mxu0 0.0
        %1336 = vmatpush1.msra.mxu0 0.0
        %1337 = vmatprep.subr.mxu0 0.0
        %1338 = vmatpush1.msra.mxu0 0.0
        %1339 = vmatprep.subr.mxu0 0.0
        %1340 = vmatpush1.msra.mxu0 0.0
        %1341 = vmatprep.subr.mxu0 0.0
        %1342 = vmatpush1.msra.mxu0 0.0
        %1343 = vmatprep.subr.mxu0 0.0
        %1344 = vmatpush1.msra.mxu0 0.0
        %1345 = vmatprep.subr.mxu0 0.0
        %1346 = vmatpush1.msra.mxu0 0.0
        %1347 = vmatprep.subr.mxu0 0.0
        %1348 = vmatpush1.msra.mxu0 0.0
        %1349 = vmatprep.subr.mxu0 0.0
        %1350 = vmatpush1.msra.mxu0 0.0
        %1351 = vmatprep.subr.mxu0 0.0
        %1352 = vmatpush1.msra.mxu0 0.0
        %1353 = vmatprep.subr.mxu0 0.0
        %1354 = vmatpush1.msra.mxu0 0.0
        %1355 = vmatprep.subr.mxu0 0.0
        %1356 = vmatpush1.msra.mxu0 0.0
        %1357 = vmatprep.subr.mxu0 0.0
        %1358 = vmatpush1.msra.mxu0 0.0
        %1359 = vmatprep.mubr.f32.mxu0 0.0
        %1360 = vmatmul.mubr.f32.gmra.mrb[0].mxu0 %v1289
        %v1361 = vpop.f32.mrb[0].mxu0
        %v1362 = vadd.f32 0.0, %v1361
        %v1363 = vpop.f32.mrb[0].mxu0
        %1364 = vdwg.mxu0
        %v1365 = vmul.f32 %v1362, 0.5
        %v1366 = vtanh.pop %v1365
        %v1367 = vadd.f32 %v1366, 1.0
        %v1368 = vmul.f32 %v1367, 0.5
        %v1369 = vlaneseq
        %v1370 = vshrl.u32 %v1369, 7
        %v1371 = vsub.s32 0, %v1370
        %v1372 = vrot.slane %v1368, %v1371
        %v1373 = vmul.f32 %v1192, %v1372
        %v1374 = vrot.slane %v1373, 7
        %v1375 = vmul.f32 %v641, %v1374
        %v1376 = vrot.slane %v1373, 1
        %v1377 = vmul.f32 %v644, %v1376
        %v1378 = vld [vmem:[#allocation7] sm:$0xff]
        %v1379 = vld [vmem:[#allocation7 + $0x8] sm:$0xff]
        %v1380 = vld [vmem:[#allocation7 + $0x10] sm:$0xff]
        %v1381 = vld [vmem:[#allocation7 + $0x18] sm:$0xff]
        %v1382 = vld [vmem:[#allocation7 + $0x20] sm:$0xff]
        %v1383 = vld [vmem:[#allocation7 + $0x28] sm:$0xff]
        %v1384 = vld [vmem:[#allocation7 + $0x30] sm:$0xff]
        %v1385 = vld [vmem:[#allocation7 + $0x38] sm:$0xff]
        %v1386 = vld [vmem:[#allocation7 + $0x40] sm:$0xff]
        %v1387 = vld [vmem:[#allocation7 + $0x48] sm:$0xff]
        %v1388 = vld [vmem:[#allocation7 + $0x50] sm:$0xff]
        %v1389 = vld [vmem:[#allocation7 + $0x58] sm:$0xff]
        %v1390 = vld [vmem:[#allocation7 + $0x60] sm:$0xff]
        %v1391 = vld [vmem:[#allocation7 + $0x68] sm:$0xff]
        %v1392 = vld [vmem:[#allocation7 + $0x70] sm:$0xff]
        %v1393 = vld [vmem:[#allocation7 + $0x78] sm:$0xff]
        %s1394 = scalar_lea.vmem [#allocation7], 128
        %v1395 = vld [vmem:[%s1394] sm:$0xff]
        %v1396 = vld [vmem:[%s1394 + $0x8] sm:$0xff]
        %v1397 = vld [vmem:[%s1394 + $0x10] sm:$0xff]
        %v1398 = vld [vmem:[%s1394 + $0x18] sm:$0xff]
        %v1399 = vld [vmem:[%s1394 + $0x20] sm:$0xff]
        %v1400 = vld [vmem:[%s1394 + $0x28] sm:$0xff]
        %v1401 = vld [vmem:[%s1394 + $0x30] sm:$0xff]
        %v1402 = vld [vmem:[%s1394 + $0x38] sm:$0xff]
        %v1403 = vld [vmem:[%s1394 + $0x40] sm:$0xff]
        %v1404 = vld [vmem:[%s1394 + $0x48] sm:$0xff]
        %v1405 = vld [vmem:[%s1394 + $0x50] sm:$0xff]
        %v1406 = vld [vmem:[%s1394 + $0x58] sm:$0xff]
        %v1407 = vld [vmem:[%s1394 + $0x60] sm:$0xff]
        %v1408 = vld [vmem:[%s1394 + $0x68] sm:$0xff]
        %v1409 = vld [vmem:[%s1394 + $0x70] sm:$0xff]
        %v1410 = vld [vmem:[%s1394 + $0x78] sm:$0xff]
        %1411 = vmatprep.subr.mxu0 0.0
        %1412 = vmatpush1.msra.mxu0 %v1395
        %1413 = vmatprep.subr.mxu0 0.0
        %1414 = vmatpush1.msra.mxu0 %v1396
        %1415 = vmatprep.subr.mxu0 0.0
        %1416 = vmatpush1.msra.mxu0 %v1397
        %1417 = vmatprep.subr.mxu0 0.0
        %1418 = vmatpush1.msra.mxu0 %v1398
        %1419 = vmatprep.subr.mxu0 0.0
        %1420 = vmatpush1.msra.mxu0 %v1399
        %1421 = vmatprep.subr.mxu0 0.0
        %1422 = vmatpush1.msra.mxu0 %v1400
        %1423 = vmatprep.subr.mxu0 0.0
        %1424 = vmatpush1.msra.mxu0 %v1401
        %1425 = vmatprep.subr.mxu0 0.0
        %1426 = vmatpush1.msra.mxu0 %v1402
        %1427 = vmatprep.subr.mxu0 0.0
        %1428 = vmatpush1.msra.mxu0 %v1403
        %1429 = vmatprep.subr.mxu0 0.0
        %1430 = vmatpush1.msra.mxu0 %v1404
        %1431 = vmatprep.subr.mxu0 0.0
        %1432 = vmatpush1.msra.mxu0 %v1405
        %1433 = vmatprep.subr.mxu0 0.0
        %1434 = vmatpush1.msra.mxu0 %v1406
        %1435 = vmatprep.subr.mxu0 0.0
        %1436 = vmatpush1.msra.mxu0 %v1407
        %1437 = vmatprep.subr.mxu0 0.0
        %1438 = vmatpush1.msra.mxu0 %v1408
        %1439 = vmatprep.subr.mxu0 0.0
        %1440 = vmatpush1.msra.mxu0 %v1409
        %1441 = vmatprep.subr.mxu0 0.0
        %1442 = vmatpush1.msra.mxu0 %v1410
        %1443 = vmatprep.subr.mxu0 0.0
        %1444 = vmatpush1.msra.mxu0 0.0
        %1445 = vmatprep.subr.mxu0 0.0
        %1446 = vmatpush1.msra.mxu0 0.0
        %1447 = vmatprep.subr.mxu0 0.0
        %1448 = vmatpush1.msra.mxu0 0.0
        %1449 = vmatprep.subr.mxu0 0.0
        %1450 = vmatpush1.msra.mxu0 0.0
        %1451 = vmatprep.subr.mxu0 0.0
        %1452 = vmatpush1.msra.mxu0 0.0
        %1453 = vmatprep.subr.mxu0 0.0
        %1454 = vmatpush1.msra.mxu0 0.0
        %1455 = vmatprep.subr.mxu0 0.0
        %1456 = vmatpush1.msra.mxu0 0.0
        %1457 = vmatprep.subr.mxu0 0.0
        %1458 = vmatpush1.msra.mxu0 0.0
        %1459 = vmatprep.subr.mxu0 0.0
        %1460 = vmatpush1.msra.mxu0 0.0
        %1461 = vmatprep.subr.mxu0 0.0
        %1462 = vmatpush1.msra.mxu0 0.0
        %1463 = vmatprep.subr.mxu0 0.0
        %1464 = vmatpush1.msra.mxu0 0.0
        %1465 = vmatprep.subr.mxu0 0.0
        %1466 = vmatpush1.msra.mxu0 0.0
        %1467 = vmatprep.subr.mxu0 0.0
        %1468 = vmatpush1.msra.mxu0 0.0
        %1469 = vmatprep.subr.mxu0 0.0
        %1470 = vmatpush1.msra.mxu0 0.0
        %1471 = vmatprep.subr.mxu0 0.0
        %1472 = vmatpush1.msra.mxu0 0.0
        %1473 = vmatprep.subr.mxu0 0.0
        %1474 = vmatpush1.msra.mxu0 0.0
        %1475 = vmatprep.mubr.f32.mxu0 0.0
        %1476 = vmatmul.mubr.f32.gmra.mrb[0].mxu0 %v1373
        %v1477 = vpop.f32.mrb[0].mxu0
        %v1478 = vadd.f32 0.0, %v1477
        %v1479 = vpop.f32.mrb[0].mxu0
        %1480 = vdwg.mxu0
        %1481 = vmatprep.subr.mxu0 0.0
        %1482 = vmatpush1.msra.mxu0 %v1378
        %1483 = vmatprep.subr.mxu0 0.0
        %1484 = vmatpush1.msra.mxu0 %v1379
        %1485 = vmatprep.subr.mxu0 0.0
        %1486 = vmatpush1.msra.mxu0 %v1380
        %1487 = vmatprep.subr.mxu0 0.0
        %1488 = vmatpush1.msra.mxu0 %v1381
        %1489 = vmatprep.subr.mxu0 0.0
        %1490 = vmatpush1.msra.mxu0 %v1382
        %1491 = vmatprep.subr.mxu0 0.0
        %1492 = vmatpush1.msra.mxu0 %v1383
        %1493 = vmatprep.subr.mxu0 0.0
        %1494 = vmatpush1.msra.mxu0 %v1384
        %1495 = vmatprep.subr.mxu0 0.0
        %1496 = vmatpush1.msra.mxu0 %v1385
        %1497 = vmatprep.subr.mxu0 0.0
        %1498 = vmatpush1.msra.mxu0 %v1386
        %1499 = vmatprep.subr.mxu0 0.0
        %1500 = vmatpush1.msra.mxu0 %v1387
        %1501 = vmatprep.subr.mxu0 0.0
        %1502 = vmatpush1.msra.mxu0 %v1388
        %1503 = vmatprep.subr.mxu0 0.0
        %1504 = vmatpush1.msra.mxu0 %v1389
        %1505 = vmatprep.subr.mxu0 0.0
        %1506 = vmatpush1.msra.mxu0 %v1390
        %1507 = vmatprep.subr.mxu0 0.0
        %1508 = vmatpush1.msra.mxu0 %v1391
        %1509 = vmatprep.subr.mxu0 0.0
        %1510 = vmatpush1.msra.mxu0 %v1392
        %1511 = vmatprep.subr.mxu0 0.0
        %1512 = vmatpush1.msra.mxu0 %v1393
        %1513 = vmatprep.subr.mxu0 0.0
        %1514 = vmatpush1.msra.mxu0 0.0
        %1515 = vmatprep.subr.mxu0 0.0
        %1516 = vmatpush1.msra.mxu0 0.0
        %1517 = vmatprep.subr.mxu0 0.0
        %1518 = vmatpush1.msra.mxu0 0.0
        %1519 = vmatprep.subr.mxu0 0.0
        %1520 = vmatpush1.msra.mxu0 0.0
        %1521 = vmatprep.subr.mxu0 0.0
        %1522 = vmatpush1.msra.mxu0 0.0
        %1523 = vmatprep.subr.mxu0 0.0
        %1524 = vmatpush1.msra.mxu0 0.0
        %1525 = vmatprep.subr.mxu0 0.0
        %1526 = vmatpush1.msra.mxu0 0.0
        %1527 = vmatprep.subr.mxu0 0.0
        %1528 = vmatpush1.msra.mxu0 0.0
        %1529 = vmatprep.subr.mxu0 0.0
        %1530 = vmatpush1.msra.mxu0 0.0
        %1531 = vmatprep.subr.mxu0 0.0
        %1532 = vmatpush1.msra.mxu0 0.0
        %1533 = vmatprep.subr.mxu0 0.0
        %1534 = vmatpush1.msra.mxu0 0.0
        %1535 = vmatprep.subr.mxu0 0.0
        %1536 = vmatpush1.msra.mxu0 0.0
        %1537 = vmatprep.subr.mxu0 0.0
        %1538 = vmatpush1.msra.mxu0 0.0
        %1539 = vmatprep.subr.mxu0 0.0
        %1540 = vmatpush1.msra.mxu0 0.0
        %1541 = vmatprep.subr.mxu0 0.0
        %1542 = vmatpush1.msra.mxu0 0.0
        %1543 = vmatprep.subr.mxu0 0.0
        %1544 = vmatpush1.msra.mxu0 0.0
        %1545 = vmatprep.mubr.f32.mxu0 0.0
        %1546 = vmatmul.mubr.f32.gmra.mrb[0].mxu0 %v1375
        %v1547 = vpop.f32.mrb[0].mxu0
        %v1548 = vadd.f32 %v1478, %v1547
        %v1549 = vpop.f32.mrb[0].mxu0
        %1550 = vdwg.mxu0
        %s1551 = scalar_lea.vmem [#allocation7], 256
        %v1552 = vld [vmem:[%s1551] sm:$0xff]
        %v1553 = vld [vmem:[%s1551 + $0x8] sm:$0xff]
        %v1554 = vld [vmem:[%s1551 + $0x10] sm:$0xff]
        %v1555 = vld [vmem:[%s1551 + $0x18] sm:$0xff]
        %v1556 = vld [vmem:[%s1551 + $0x20] sm:$0xff]
        %v1557 = vld [vmem:[%s1551 + $0x28] sm:$0xff]
        %v1558 = vld [vmem:[%s1551 + $0x30] sm:$0xff]
        %v1559 = vld [vmem:[%s1551 + $0x38] sm:$0xff]
        %v1560 = vld [vmem:[%s1551 + $0x40] sm:$0xff]
        %v1561 = vld [vmem:[%s1551 + $0x48] sm:$0xff]
        %v1562 = vld [vmem:[%s1551 + $0x50] sm:$0xff]
        %v1563 = vld [vmem:[%s1551 + $0x58] sm:$0xff]
        %v1564 = vld [vmem:[%s1551 + $0x60] sm:$0xff]
        %v1565 = vld [vmem:[%s1551 + $0x68] sm:$0xff]
        %v1566 = vld [vmem:[%s1551 + $0x70] sm:$0xff]
        %v1567 = vld [vmem:[%s1551 + $0x78] sm:$0xff]
        %1568 = vmatprep.subr.mxu0 0.0
        %1569 = vmatpush1.msra.mxu0 %v1552
        %1570 = vmatprep.subr.mxu0 0.0
        %1571 = vmatpush1.msra.mxu0 %v1553
        %1572 = vmatprep.subr.mxu0 0.0
        %1573 = vmatpush1.msra.mxu0 %v1554
        %1574 = vmatprep.subr.mxu0 0.0
        %1575 = vmatpush1.msra.mxu0 %v1555
        %1576 = vmatprep.subr.mxu0 0.0
        %1577 = vmatpush1.msra.mxu0 %v1556
        %1578 = vmatprep.subr.mxu0 0.0
        %1579 = vmatpush1.msra.mxu0 %v1557
        %1580 = vmatprep.subr.mxu0 0.0
        %1581 = vmatpush1.msra.mxu0 %v1558
        %1582 = vmatprep.subr.mxu0 0.0
        %1583 = vmatpush1.msra.mxu0 %v1559
        %1584 = vmatprep.subr.mxu0 0.0
        %1585 = vmatpush1.msra.mxu0 %v1560
        %1586 = vmatprep.subr.mxu0 0.0
        %1587 = vmatpush1.msra.mxu0 %v1561
        %1588 = vmatprep.subr.mxu0 0.0
        %1589 = vmatpush1.msra.mxu0 %v1562
        %1590 = vmatprep.subr.mxu0 0.0
        %1591 = vmatpush1.msra.mxu0 %v1563
        %1592 = vmatprep.subr.mxu0 0.0
        %1593 = vmatpush1.msra.mxu0 %v1564
        %1594 = vmatprep.subr.mxu0 0.0
        %1595 = vmatpush1.msra.mxu0 %v1565
        %1596 = vmatprep.subr.mxu0 0.0
        %1597 = vmatpush1.msra.mxu0 %v1566
        %1598 = vmatprep.subr.mxu0 0.0
        %1599 = vmatpush1.msra.mxu0 %v1567
        %1600 = vmatprep.subr.mxu0 0.0
        %1601 = vmatpush1.msra.mxu0 0.0
        %1602 = vmatprep.subr.mxu0 0.0
        %1603 = vmatpush1.msra.mxu0 0.0
        %1604 = vmatprep.subr.mxu0 0.0
        %1605 = vmatpush1.msra.mxu0 0.0
        %1606 = vmatprep.subr.mxu0 0.0
        %1607 = vmatpush1.msra.mxu0 0.0
        %1608 = vmatprep.subr.mxu0 0.0
        %1609 = vmatpush1.msra.mxu0 0.0
        %1610 = vmatprep.subr.mxu0 0.0
        %1611 = vmatpush1.msra.mxu0 0.0
        %1612 = vmatprep.subr.mxu0 0.0
        %1613 = vmatpush1.msra.mxu0 0.0
        %1614 = vmatprep.subr.mxu0 0.0
        %1615 = vmatpush1.msra.mxu0 0.0
        %1616 = vmatprep.subr.mxu0 0.0
        %1617 = vmatpush1.msra.mxu0 0.0
        %1618 = vmatprep.subr.mxu0 0.0
        %1619 = vmatpush1.msra.mxu0 0.0
        %1620 = vmatprep.subr.mxu0 0.0
        %1621 = vmatpush1.msra.mxu0 0.0
        %1622 = vmatprep.subr.mxu0 0.0
        %1623 = vmatpush1.msra.mxu0 0.0
        %1624 = vmatprep.subr.mxu0 0.0
        %1625 = vmatpush1.msra.mxu0 0.0
        %1626 = vmatprep.subr.mxu0 0.0
        %1627 = vmatpush1.msra.mxu0 0.0
        %1628 = vmatprep.subr.mxu0 0.0
        %1629 = vmatpush1.msra.mxu0 0.0
        %1630 = vmatprep.subr.mxu0 0.0
        %1631 = vmatpush1.msra.mxu0 0.0
        %1632 = vmatprep.mubr.f32.mxu0 0.0
        %1633 = vmatmul.mubr.f32.gmra.mrb[0].mxu0 %v1377
        %v1634 = vpop.f32.mrb[0].mxu0
        %v1635 = vadd.f32 0.0, %v1634
        %v1636 = vpop.f32.mrb[0].mxu0
        %1637 = vdwg.mxu0
        %v1638 = vadd.f32 %v1548, %v1635
        %v1639 = vld [vmem:[#allocation8] sm:$0xff]
        %v1640 = vld [vmem:[#allocation8 + $0x8] sm:$0xff]
        %v1641 = vld [vmem:[#allocation8 + $0x10] sm:$0xff]
        %v1642 = vld [vmem:[#allocation8 + $0x18] sm:$0xff]
        %v1643 = vld [vmem:[#allocation8 + $0x20] sm:$0xff]
        %v1644 = vld [vmem:[#allocation8 + $0x28] sm:$0xff]
        %v1645 = vld [vmem:[#allocation8 + $0x30] sm:$0xff]
        %v1646 = vld [vmem:[#allocation8 + $0x38] sm:$0xff]
        %v1647 = vld [vmem:[#allocation8 + $0x40] sm:$0xff]
        %v1648 = vld [vmem:[#allocation8 + $0x48] sm:$0xff]
        %v1649 = vld [vmem:[#allocation8 + $0x50] sm:$0xff]
        %v1650 = vld [vmem:[#allocation8 + $0x58] sm:$0xff]
        %v1651 = vld [vmem:[#allocation8 + $0x60] sm:$0xff]
        %v1652 = vld [vmem:[#allocation8 + $0x68] sm:$0xff]
        %v1653 = vld [vmem:[#allocation8 + $0x70] sm:$0xff]
        %v1654 = vld [vmem:[#allocation8 + $0x78] sm:$0xff]
        %1655 = vmatprep.subr.mxu0 0.0
        %1656 = vmatpush1.msra.mxu0 %v1639
        %1657 = vmatprep.subr.mxu0 0.0
        %1658 = vmatpush1.msra.mxu0 %v1640
        %1659 = vmatprep.subr.mxu0 0.0
        %1660 = vmatpush1.msra.mxu0 %v1641
        %1661 = vmatprep.subr.mxu0 0.0
        %1662 = vmatpush1.msra.mxu0 %v1642
        %1663 = vmatprep.subr.mxu0 0.0
        %1664 = vmatpush1.msra.mxu0 %v1643
        %1665 = vmatprep.subr.mxu0 0.0
        %1666 = vmatpush1.msra.mxu0 %v1644
        %1667 = vmatprep.subr.mxu0 0.0
        %1668 = vmatpush1.msra.mxu0 %v1645
        %1669 = vmatprep.subr.mxu0 0.0
        %1670 = vmatpush1.msra.mxu0 %v1646
        %1671 = vmatprep.subr.mxu0 0.0
        %1672 = vmatpush1.msra.mxu0 %v1647
        %1673 = vmatprep.subr.mxu0 0.0
        %1674 = vmatpush1.msra.mxu0 %v1648
        %1675 = vmatprep.subr.mxu0 0.0
        %1676 = vmatpush1.msra.mxu0 %v1649
        %1677 = vmatprep.subr.mxu0 0.0
        %1678 = vmatpush1.msra.mxu0 %v1650
        %1679 = vmatprep.subr.mxu0 0.0
        %1680 = vmatpush1.msra.mxu0 %v1651
        %1681 = vmatprep.subr.mxu0 0.0
        %1682 = vmatpush1.msra.mxu0 %v1652
        %1683 = vmatprep.subr.mxu0 0.0
        %1684 = vmatpush1.msra.mxu0 %v1653
        %1685 = vmatprep.subr.mxu0 0.0
        %1686 = vmatpush1.msra.mxu0 %v1654
        %1687 = vmatprep.subr.mxu0 0.0
        %1688 = vmatpush1.msra.mxu0 0.0
        %1689 = vmatprep.subr.mxu0 0.0
        %1690 = vmatpush1.msra.mxu0 0.0
        %1691 = vmatprep.subr.mxu0 0.0
        %1692 = vmatpush1.msra.mxu0 0.0
        %1693 = vmatprep.subr.mxu0 0.0
        %1694 = vmatpush1.msra.mxu0 0.0
        %1695 = vmatprep.subr.mxu0 0.0
        %1696 = vmatpush1.msra.mxu0 0.0
        %1697 = vmatprep.subr.mxu0 0.0
        %1698 = vmatpush1.msra.mxu0 0.0
        %1699 = vmatprep.subr.mxu0 0.0
        %1700 = vmatpush1.msra.mxu0 0.0
        %1701 = vmatprep.subr.mxu0 0.0
        %1702 = vmatpush1.msra.mxu0 0.0
        %1703 = vmatprep.subr.mxu0 0.0
        %1704 = vmatpush1.msra.mxu0 0.0
        %1705 = vmatprep.subr.mxu0 0.0
        %1706 = vmatpush1.msra.mxu0 0.0
        %1707 = vmatprep.subr.mxu0 0.0
        %1708 = vmatpush1.msra.mxu0 0.0
        %1709 = vmatprep.subr.mxu0 0.0
        %1710 = vmatpush1.msra.mxu0 0.0
        %1711 = vmatprep.subr.mxu0 0.0
        %1712 = vmatpush1.msra.mxu0 0.0
        %1713 = vmatprep.subr.mxu0 0.0
        %1714 = vmatpush1.msra.mxu0 0.0
        %1715 = vmatprep.subr.mxu0 0.0
        %1716 = vmatpush1.msra.mxu0 0.0
        %1717 = vmatprep.subr.mxu0 0.0
        %1718 = vmatpush1.msra.mxu0 0.0
        %1719 = vmatprep.mubr.f32.mxu0 0.0
        %1720 = vmatmul.mubr.f32.gmra.mrb[0].mxu0 %v647
        %v1721 = vpop.f32.mrb[0].mxu0
        %v1722 = vadd.f32 0.0, %v1721
        %v1723 = vpop.f32.mrb[0].mxu0
        %1724 = vdwg.mxu0
        %v1725 = vadd.f32 %v1638, %v1722
        %s1726 = scalar_lea.vmem [#allocation8], 128
        %v1727 = vld [vmem:[%s1726] sm:$0xff]
        %v1728 = vld [vmem:[%s1726 + $0x8] sm:$0xff]
        %v1729 = vld [vmem:[%s1726 + $0x10] sm:$0xff]
        %v1730 = vld [vmem:[%s1726 + $0x18] sm:$0xff]
        %v1731 = vld [vmem:[%s1726 + $0x20] sm:$0xff]
        %v1732 = vld [vmem:[%s1726 + $0x28] sm:$0xff]
        %v1733 = vld [vmem:[%s1726 + $0x30] sm:$0xff]
        %v1734 = vld [vmem:[%s1726 + $0x38] sm:$0xff]
        %v1735 = vld [vmem:[%s1726 + $0x40] sm:$0xff]
        %v1736 = vld [vmem:[%s1726 + $0x48] sm:$0xff]
        %v1737 = vld [vmem:[%s1726 + $0x50] sm:$0xff]
        %v1738 = vld [vmem:[%s1726 + $0x58] sm:$0xff]
        %v1739 = vld [vmem:[%s1726 + $0x60] sm:$0xff]
        %v1740 = vld [vmem:[%s1726 + $0x68] sm:$0xff]
        %v1741 = vld [vmem:[%s1726 + $0x70] sm:$0xff]
        %v1742 = vld [vmem:[%s1726 + $0x78] sm:$0xff]
        %1743 = vmatprep.subr.mxu0 0.0
        %1744 = vmatpush1.msra.mxu0 %v1727
        %1745 = vmatprep.subr.mxu0 0.0
        %1746 = vmatpush1.msra.mxu0 %v1728
        %1747 = vmatprep.subr.mxu0 0.0
        %1748 = vmatpush1.msra.mxu0 %v1729
        %1749 = vmatprep.subr.mxu0 0.0
        %1750 = vmatpush1.msra.mxu0 %v1730
        %1751 = vmatprep.subr.mxu0 0.0
        %1752 = vmatpush1.msra.mxu0 %v1731
        %1753 = vmatprep.subr.mxu0 0.0
        %1754 = vmatpush1.msra.mxu0 %v1732
        %1755 = vmatprep.subr.mxu0 0.0
        %1756 = vmatpush1.msra.mxu0 %v1733
        %1757 = vmatprep.subr.mxu0 0.0
        %1758 = vmatpush1.msra.mxu0 %v1734
        %1759 = vmatprep.subr.mxu0 0.0
        %1760 = vmatpush1.msra.mxu0 %v1735
        %1761 = vmatprep.subr.mxu0 0.0
        %1762 = vmatpush1.msra.mxu0 %v1736
        %1763 = vmatprep.subr.mxu0 0.0
        %1764 = vmatpush1.msra.mxu0 %v1737
        %1765 = vmatprep.subr.mxu0 0.0
        %1766 = vmatpush1.msra.mxu0 %v1738
        %1767 = vmatprep.subr.mxu0 0.0
        %1768 = vmatpush1.msra.mxu0 %v1739
        %1769 = vmatprep.subr.mxu0 0.0
        %1770 = vmatpush1.msra.mxu0 %v1740
        %1771 = vmatprep.subr.mxu0 0.0
        %1772 = vmatpush1.msra.mxu0 %v1741
        %1773 = vmatprep.subr.mxu0 0.0
        %1774 = vmatpush1.msra.mxu0 %v1742
        %1775 = vmatprep.subr.mxu0 0.0
        %1776 = vmatpush1.msra.mxu0 0.0
        %1777 = vmatprep.subr.mxu0 0.0
        %1778 = vmatpush1.msra.mxu0 0.0
        %1779 = vmatprep.subr.mxu0 0.0
        %1780 = vmatpush1.msra.mxu0 0.0
        %1781 = vmatprep.subr.mxu0 0.0
        %1782 = vmatpush1.msra.mxu0 0.0
        %1783 = vmatprep.subr.mxu0 0.0
        %1784 = vmatpush1.msra.mxu0 0.0
        %1785 = vmatprep.subr.mxu0 0.0
        %1786 = vmatpush1.msra.mxu0 0.0
        %1787 = vmatprep.subr.mxu0 0.0
        %1788 = vmatpush1.msra.mxu0 0.0
        %1789 = vmatprep.subr.mxu0 0.0
        %1790 = vmatpush1.msra.mxu0 0.0
        %1791 = vmatprep.subr.mxu0 0.0
        %1792 = vmatpush1.msra.mxu0 0.0
        %1793 = vmatprep.subr.mxu0 0.0
        %1794 = vmatpush1.msra.mxu0 0.0
        %1795 = vmatprep.subr.mxu0 0.0
        %1796 = vmatpush1.msra.mxu0 0.0
        %1797 = vmatprep.subr.mxu0 0.0
        %1798 = vmatpush1.msra.mxu0 0.0
        %1799 = vmatprep.subr.mxu0 0.0
        %1800 = vmatpush1.msra.mxu0 0.0
        %1801 = vmatprep.subr.mxu0 0.0
        %1802 = vmatpush1.msra.mxu0 0.0
        %1803 = vmatprep.subr.mxu0 0.0
        %1804 = vmatpush1.msra.mxu0 0.0
        %1805 = vmatprep.subr.mxu0 0.0
        %1806 = vmatpush1.msra.mxu0 0.0
        %1807 = vmatprep.mubr.f32.mxu0 0.0
        %1808 = vmatmul.mubr.f32.gmra.mrb[0].mxu0 %v645
        %v1809 = vpop.f32.mrb[0].mxu0
        %v1810 = vadd.f32 0.0, %v1809
        %v1811 = vpop.f32.mrb[0].mxu0
        %1812 = vdwg.mxu0
        %v1813 = vadd.f32 %v1725, %v1810
        %s1814 = scalar_lea.vmem [#allocation8], 256
        %v1815 = vld [vmem:[%s1814] sm:$0xff]
        %v1816 = vld [vmem:[%s1814 + $0x8] sm:$0xff]
        %v1817 = vld [vmem:[%s1814 + $0x10] sm:$0xff]
        %v1818 = vld [vmem:[%s1814 + $0x18] sm:$0xff]
        %v1819 = vld [vmem:[%s1814 + $0x20] sm:$0xff]
        %v1820 = vld [vmem:[%s1814 + $0x28] sm:$0xff]
        %v1821 = vld [vmem:[%s1814 + $0x30] sm:$0xff]
        %v1822 = vld [vmem:[%s1814 + $0x38] sm:$0xff]
        %v1823 = vld [vmem:[%s1814 + $0x40] sm:$0xff]
        %v1824 = vld [vmem:[%s1814 + $0x48] sm:$0xff]
        %v1825 = vld [vmem:[%s1814 + $0x50] sm:$0xff]
        %v1826 = vld [vmem:[%s1814 + $0x58] sm:$0xff]
        %v1827 = vld [vmem:[%s1814 + $0x60] sm:$0xff]
        %v1828 = vld [vmem:[%s1814 + $0x68] sm:$0xff]
        %v1829 = vld [vmem:[%s1814 + $0x70] sm:$0xff]
        %v1830 = vld [vmem:[%s1814 + $0x78] sm:$0xff]
        %1831 = vmatprep.subr.mxu0 0.0
        %1832 = vmatpush1.msra.mxu0 %v1815
        %1833 = vmatprep.subr.mxu0 0.0
        %1834 = vmatpush1.msra.mxu0 %v1816
        %1835 = vmatprep.subr.mxu0 0.0
        %1836 = vmatpush1.msra.mxu0 %v1817
        %1837 = vmatprep.subr.mxu0 0.0
        %1838 = vmatpush1.msra.mxu0 %v1818
        %1839 = vmatprep.subr.mxu0 0.0
        %1840 = vmatpush1.msra.mxu0 %v1819
        %1841 = vmatprep.subr.mxu0 0.0
        %1842 = vmatpush1.msra.mxu0 %v1820
        %1843 = vmatprep.subr.mxu0 0.0
        %1844 = vmatpush1.msra.mxu0 %v1821
        %1845 = vmatprep.subr.mxu0 0.0
        %1846 = vmatpush1.msra.mxu0 %v1822
        %1847 = vmatprep.subr.mxu0 0.0
        %1848 = vmatpush1.msra.mxu0 %v1823
        %1849 = vmatprep.subr.mxu0 0.0
        %1850 = vmatpush1.msra.mxu0 %v1824
        %1851 = vmatprep.subr.mxu0 0.0
        %1852 = vmatpush1.msra.mxu0 %v1825
        %1853 = vmatprep.subr.mxu0 0.0
        %1854 = vmatpush1.msra.mxu0 %v1826
        %1855 = vmatprep.subr.mxu0 0.0
        %1856 = vmatpush1.msra.mxu0 %v1827
        %1857 = vmatprep.subr.mxu0 0.0
        %1858 = vmatpush1.msra.mxu0 %v1828
        %1859 = vmatprep.subr.mxu0 0.0
        %1860 = vmatpush1.msra.mxu0 %v1829
        %1861 = vmatprep.subr.mxu0 0.0
        %1862 = vmatpush1.msra.mxu0 %v1830
        %1863 = vmatprep.subr.mxu0 0.0
        %1864 = vmatpush1.msra.mxu0 0.0
        %1865 = vmatprep.subr.mxu0 0.0
        %1866 = vmatpush1.msra.mxu0 0.0
        %1867 = vmatprep.subr.mxu0 0.0
        %1868 = vmatpush1.msra.mxu0 0.0
        %1869 = vmatprep.subr.mxu0 0.0
        %1870 = vmatpush1.msra.mxu0 0.0
        %1871 = vmatprep.subr.mxu0 0.0
        %1872 = vmatpush1.msra.mxu0 0.0
        %1873 = vmatprep.subr.mxu0 0.0
        %1874 = vmatpush1.msra.mxu0 0.0
        %1875 = vmatprep.subr.mxu0 0.0
        %1876 = vmatpush1.msra.mxu0 0.0
        %1877 = vmatprep.subr.mxu0 0.0
        %1878 = vmatpush1.msra.mxu0 0.0
        %1879 = vmatprep.subr.mxu0 0.0
        %1880 = vmatpush1.msra.mxu0 0.0
        %1881 = vmatprep.subr.mxu0 0.0
        %1882 = vmatpush1.msra.mxu0 0.0
        %1883 = vmatprep.subr.mxu0 0.0
        %1884 = vmatpush1.msra.mxu0 0.0
        %1885 = vmatprep.subr.mxu0 0.0
        %1886 = vmatpush1.msra.mxu0 0.0
        %1887 = vmatprep.subr.mxu0 0.0
        %1888 = vmatpush1.msra.mxu0 0.0
        %1889 = vmatprep.subr.mxu0 0.0
        %1890 = vmatpush1.msra.mxu0 0.0
        %1891 = vmatprep.subr.mxu0 0.0
        %1892 = vmatpush1.msra.mxu0 0.0
        %1893 = vmatprep.subr.mxu0 0.0
        %1894 = vmatpush1.msra.mxu0 0.0
        %1895 = vmatprep.mubr.f32.mxu0 0.0
        %1896 = vmatmul.mubr.f32.gmra.mrb[0].mxu0 %v649
        %v1897 = vpop.f32.mrb[0].mxu0
        %v1898 = vadd.f32 0.0, %v1897
        %v1899 = vpop.f32.mrb[0].mxu0
        %1900 = vdwg.mxu0
        %v1901 = vadd.f32 %v1813, %v1898
        %v1902 = vld [vmem:[%s9] sm:$0x1]
        %v1904 = vlaneseq
        %v1905 = vshrl.u32 %v1904, 7
        %v1906 = vsub.s32 0, %v1905
        %v1907 = vrot.slane %v1902, %v1906
        %v1909 = vadd.f32 %v1901, %v1907
        %v1910 = vrot.slane %v1909, 4
        %v1911 = vadd.f32 %v1909, %v1910
        %v1912 = vrot.slane %v1911, 2
        %v1913 = vadd.f32 %v1911, %v1912
        %v1914 = vrot.slane %v1913, 1
        %v1915 = vadd.f32 %v1913, %v1914
        %v1916 = vld [vmem:[%s10] sm:$0xff]
        %v1917 = vld [vmem:[%s10 + $0x8] sm:$0xff]
        %v1918 = vld [vmem:[%s10 + $0x10] sm:$0xff]
        %v1919 = vld [vmem:[%s10 + $0x18] sm:$0xff]
        %v1920 = vld [vmem:[%s10 + $0x20] sm:$0xff]
        %v1921 = vld [vmem:[%s10 + $0x28] sm:$0xff]
        %v1922 = vld [vmem:[%s10 + $0x30] sm:$0xff]
        %v1923 = vld [vmem:[%s10 + $0x38] sm:$0xff]
        %v1924 = vld [vmem:[%s10 + $0x40] sm:$0xff]
        %v1925 = vld [vmem:[%s10 + $0x48] sm:$0xff]
        %v1926 = vld [vmem:[%s10 + $0x50] sm:$0xff]
        %v1927 = vld [vmem:[%s10 + $0x58] sm:$0xff]
        %v1928 = vld [vmem:[%s10 + $0x60] sm:$0xff]
        %v1929 = vld [vmem:[%s10 + $0x68] sm:$0xff]
        %v1930 = vld [vmem:[%s10 + $0x70] sm:$0xff]
        %v1931 = vld [vmem:[%s10 + $0x78] sm:$0xff]
        %1932 = vmatprep.subr.mxu0 0.0
        %1933 = vmatpush1.msra.mxu0 %v1916
        %1934 = vmatprep.subr.mxu0 0.0
        %1935 = vmatpush1.msra.mxu0 %v1917
        %1936 = vmatprep.subr.mxu0 0.0
        %1937 = vmatpush1.msra.mxu0 %v1918
        %1938 = vmatprep.subr.mxu0 0.0
        %1939 = vmatpush1.msra.mxu0 %v1919
        %1940 = vmatprep.subr.mxu0 0.0
        %1941 = vmatpush1.msra.mxu0 %v1920
        %1942 = vmatprep.subr.mxu0 0.0
        %1943 = vmatpush1.msra.mxu0 %v1921
        %1944 = vmatprep.subr.mxu0 0.0
        %1945 = vmatpush1.msra.mxu0 %v1922
        %1946 = vmatprep.subr.mxu0 0.0
        %1947 = vmatpush1.msra.mxu0 %v1923
        %1948 = vmatprep.subr.mxu0 0.0
        %1949 = vmatpush1.msra.mxu0 %v1924
        %1950 = vmatprep.subr.mxu0 0.0
        %1951 = vmatpush1.msra.mxu0 %v1925
        %1952 = vmatprep.subr.mxu0 0.0
        %1953 = vmatpush1.msra.mxu0 %v1926
        %1954 = vmatprep.subr.mxu0 0.0
        %1955 = vmatpush1.msra.mxu0 %v1927
        %1956 = vmatprep.subr.mxu0 0.0
        %1957 = vmatpush1.msra.mxu0 %v1928
        %1958 = vmatprep.subr.mxu0 0.0
        %1959 = vmatpush1.msra.mxu0 %v1929
        %1960 = vmatprep.subr.mxu0 0.0
        %1961 = vmatpush1.msra.mxu0 %v1930
        %1962 = vmatprep.subr.mxu0 0.0
        %1963 = vmatpush1.msra.mxu0 %v1931
        %1964 = vmatprep.subr.mxu0 0.0
        %1965 = vmatpush1.msra.mxu0 0.0
        %1966 = vmatprep.subr.mxu0 0.0
        %1967 = vmatpush1.msra.mxu0 0.0
        %1968 = vmatprep.subr.mxu0 0.0
        %1969 = vmatpush1.msra.mxu0 0.0
        %1970 = vmatprep.subr.mxu0 0.0
        %1971 = vmatpush1.msra.mxu0 0.0
        %1972 = vmatprep.subr.mxu0 0.0
        %1973 = vmatpush1.msra.mxu0 0.0
        %1974 = vmatprep.subr.mxu0 0.0
        %1975 = vmatpush1.msra.mxu0 0.0
        %1976 = vmatprep.subr.mxu0 0.0
        %1977 = vmatpush1.msra.mxu0 0.0
        %1978 = vmatprep.subr.mxu0 0.0
        %1979 = vmatpush1.msra.mxu0 0.0
        %1980 = vmatprep.subr.mxu0 0.0
        %1981 = vmatpush1.msra.mxu0 0.0
        %1982 = vmatprep.subr.mxu0 0.0
        %1983 = vmatpush1.msra.mxu0 0.0
        %1984 = vmatprep.subr.mxu0 0.0
        %1985 = vmatpush1.msra.mxu0 0.0
        %1986 = vmatprep.subr.mxu0 0.0
        %1987 = vmatpush1.msra.mxu0 0.0
        %1988 = vmatprep.subr.mxu0 0.0
        %1989 = vmatpush1.msra.mxu0 0.0
        %1990 = vmatprep.subr.mxu0 0.0
        %1991 = vmatpush1.msra.mxu0 0.0
        %1992 = vmatprep.subr.mxu0 0.0
        %1993 = vmatpush1.msra.mxu0 0.0
        %1994 = vmatprep.subr.mxu0 0.0
        %1995 = vmatpush1.msra.mxu0 0.0
        %1996 = vmatprep.mubr.f32.mxu0 0.0
        %1997 = vmatmul.mubr.f32.gmra.mrb[0].mxu0 %v1915
        %v1998 = vpop.f32.mrb[0].mxu0
        %v1999 = vadd.f32 0.0, %v1998
        %v2000 = vpop.f32.mrb[0].mxu0
        %2001 = vdwg.mxu0
        %v2002 = vmax.f32 %v1999, 0.0
        %v2003 = vld [vmem:[%s11] sm:$0xf]
        %v2005 = vsel %vm1287, %v2002, 0
        %v2008 = vsel %vm1291, %v2003, 0
        %2010 = vmatprep.subr.mxu0 0.0
        %2011 = vmatpush1.msra.mxu0 %v2008
        %2012 = vmatprep.subr.mxu0 0.0
        %2013 = vmatpush1.msra.mxu0 0.0
        %2014 = vmatprep.subr.mxu0 0.0
        %2015 = vmatpush1.msra.mxu0 0.0
        %2016 = vmatprep.subr.mxu0 0.0
        %2017 = vmatpush1.msra.mxu0 0.0
        %2018 = vmatprep.subr.mxu0 0.0
        %2019 = vmatpush1.msra.mxu0 0.0
        %2020 = vmatprep.subr.mxu0 0.0
        %2021 = vmatpush1.msra.mxu0 0.0
        %2022 = vmatprep.subr.mxu0 0.0
        %2023 = vmatpush1.msra.mxu0 0.0
        %2024 = vmatprep.subr.mxu0 0.0
        %2025 = vmatpush1.msra.mxu0 0.0
        %2026 = vmatprep.subr.mxu0 0.0
        %2027 = vmatpush1.msra.mxu0 0.0
        %2028 = vmatprep.subr.mxu0 0.0
        %2029 = vmatpush1.msra.mxu0 0.0
        %2030 = vmatprep.subr.mxu0 0.0
        %2031 = vmatpush1.msra.mxu0 0.0
        %2032 = vmatprep.subr.mxu0 0.0
        %2033 = vmatpush1.msra.mxu0 0.0
        %2034 = vmatprep.subr.mxu0 0.0
        %2035 = vmatpush1.msra.mxu0 0.0
        %2036 = vmatprep.subr.mxu0 0.0
        %2037 = vmatpush1.msra.mxu0 0.0
        %2038 = vmatprep.subr.mxu0 0.0
        %2039 = vmatpush1.msra.mxu0 0.0
        %2040 = vmatprep.subr.mxu0 0.0
        %2041 = vmatpush1.msra.mxu0 0.0
        %2042 = vmatprep.subr.mxu0 0.0
        %2043 = vmatpush1.msra.mxu0 0.0
        %2044 = vmatprep.subr.mxu0 0.0
        %2045 = vmatpush1.msra.mxu0 0.0
        %2046 = vmatprep.subr.mxu0 0.0
        %2047 = vmatpush1.msra.mxu0 0.0
        %2048 = vmatprep.subr.mxu0 0.0
        %2049 = vmatpush1.msra.mxu0 0.0
        %2050 = vmatprep.subr.mxu0 0.0
        %2051 = vmatpush1.msra.mxu0 0.0
        %2052 = vmatprep.subr.mxu0 0.0
        %2053 = vmatpush1.msra.mxu0 0.0
        %2054 = vmatprep.subr.mxu0 0.0
        %2055 = vmatpush1.msra.mxu0 0.0
        %2056 = vmatprep.subr.mxu0 0.0
        %2057 = vmatpush1.msra.mxu0 0.0
        %2058 = vmatprep.subr.mxu0 0.0
        %2059 = vmatpush1.msra.mxu0 0.0
        %2060 = vmatprep.subr.mxu0 0.0
        %2061 = vmatpush1.msra.mxu0 0.0
        %2062 = vmatprep.subr.mxu0 0.0
        %2063 = vmatpush1.msra.mxu0 0.0
        %2064 = vmatprep.subr.mxu0 0.0
        %2065 = vmatpush1.msra.mxu0 0.0
        %2066 = vmatprep.subr.mxu0 0.0
        %2067 = vmatpush1.msra.mxu0 0.0
        %2068 = vmatprep.subr.mxu0 0.0
        %2069 = vmatpush1.msra.mxu0 0.0
        %2070 = vmatprep.subr.mxu0 0.0
        %2071 = vmatpush1.msra.mxu0 0.0
        %2072 = vmatprep.subr.mxu0 0.0
        %2073 = vmatpush1.msra.mxu0 0.0
        %2074 = vmatprep.mubr.f32.mxu0 0.0
        %2075 = vmatmul.mubr.f32.gmra.mrb[0].mxu0 %v2005
        %v2076 = vpop.f32.mrb[0].mxu0
        %v2077 = vadd.f32 0.0, %v2076
        %v2078 = vpop.f32.mrb[0].mxu0
        %2079 = vdwg.mxu0
        %v2080 = vmul.f32 %v2077, 0.5
        %v2081 = vtanh.pop %v2080
        %v2082 = vadd.f32 %v2081, 1.0
        %v2083 = vmul.f32 %v2082, 0.5
        %v2084 = vlaneseq
        %v2085 = vshrl.u32 %v2084, 7
        %v2086 = vsub.s32 0, %v2085
        %v2087 = vrot.slane %v2083, %v2086
        %v2088 = vmul.f32 %v1909, %v2087
        %v2089 = vadd.f32 %v2088, %v1373
        %v2090 = vrot.slane %v2089, 7
        %v2091 = vmul.f32 %v641, %v2090
        %v2092 = vrot.slane %v2089, 1
        %v2093 = vmul.f32 %v644, %v2092
        %v2094 = vld [vmem:[#allocation10] sm:$0xff]
        %v2095 = vld [vmem:[#allocation10 + $0x8] sm:$0xff]
        %v2096 = vld [vmem:[#allocation10 + $0x10] sm:$0xff]
        %v2097 = vld [vmem:[#allocation10 + $0x18] sm:$0xff]
        %v2098 = vld [vmem:[#allocation10 + $0x20] sm:$0xff]
        %v2099 = vld [vmem:[#allocation10 + $0x28] sm:$0xff]
        %v2100 = vld [vmem:[#allocation10 + $0x30] sm:$0xff]
        %v2101 = vld [vmem:[#allocation10 + $0x38] sm:$0xff]
        %v2102 = vld [vmem:[#allocation10 + $0x40] sm:$0xff]
        %v2103 = vld [vmem:[#allocation10 + $0x48] sm:$0xff]
        %v2104 = vld [vmem:[#allocation10 + $0x50] sm:$0xff]
        %v2105 = vld [vmem:[#allocation10 + $0x58] sm:$0xff]
        %v2106 = vld [vmem:[#allocation10 + $0x60] sm:$0xff]
        %v2107 = vld [vmem:[#allocation10 + $0x68] sm:$0xff]
        %v2108 = vld [vmem:[#allocation10 + $0x70] sm:$0xff]
        %v2109 = vld [vmem:[#allocation10 + $0x78] sm:$0xff]
        %s2110 = scalar_lea.vmem [#allocation10], 128
        %v2111 = vld [vmem:[%s2110] sm:$0xff]
        %v2112 = vld [vmem:[%s2110 + $0x8] sm:$0xff]
        %v2113 = vld [vmem:[%s2110 + $0x10] sm:$0xff]
        %v2114 = vld [vmem:[%s2110 + $0x18] sm:$0xff]
        %v2115 = vld [vmem:[%s2110 + $0x20] sm:$0xff]
        %v2116 = vld [vmem:[%s2110 + $0x28] sm:$0xff]
        %v2117 = vld [vmem:[%s2110 + $0x30] sm:$0xff]
        %v2118 = vld [vmem:[%s2110 + $0x38] sm:$0xff]
        %v2119 = vld [vmem:[%s2110 + $0x40] sm:$0xff]
        %v2120 = vld [vmem:[%s2110 + $0x48] sm:$0xff]
        %v2121 = vld [vmem:[%s2110 + $0x50] sm:$0xff]
        %v2122 = vld [vmem:[%s2110 + $0x58] sm:$0xff]
        %v2123 = vld [vmem:[%s2110 + $0x60] sm:$0xff]
        %v2124 = vld [vmem:[%s2110 + $0x68] sm:$0xff]
        %v2125 = vld [vmem:[%s2110 + $0x70] sm:$0xff]
        %v2126 = vld [vmem:[%s2110 + $0x78] sm:$0xff]
        %2127 = vmatprep.subr.mxu0 0.0
        %2128 = vmatpush1.msra.mxu0 %v2111
        %2129 = vmatprep.subr.mxu0 0.0
        %2130 = vmatpush1.msra.mxu0 %v2112
        %2131 = vmatprep.subr.mxu0 0.0
        %2132 = vmatpush1.msra.mxu0 %v2113
        %2133 = vmatprep.subr.mxu0 0.0
        %2134 = vmatpush1.msra.mxu0 %v2114
        %2135 = vmatprep.subr.mxu0 0.0
        %2136 = vmatpush1.msra.mxu0 %v2115
        %2137 = vmatprep.subr.mxu0 0.0
        %2138 = vmatpush1.msra.mxu0 %v2116
        %2139 = vmatprep.subr.mxu0 0.0
        %2140 = vmatpush1.msra.mxu0 %v2117
        %2141 = vmatprep.subr.mxu0 0.0
        %2142 = vmatpush1.msra.mxu0 %v2118
        %2143 = vmatprep.subr.mxu0 0.0
        %2144 = vmatpush1.msra.mxu0 %v2119
        %2145 = vmatprep.subr.mxu0 0.0
        %2146 = vmatpush1.msra.mxu0 %v2120
        %2147 = vmatprep.subr.mxu0 0.0
        %2148 = vmatpush1.msra.mxu0 %v2121
        %2149 = vmatprep.subr.mxu0 0.0
        %2150 = vmatpush1.msra.mxu0 %v2122
        %2151 = vmatprep.subr.mxu0 0.0
        %2152 = vmatpush1.msra.mxu0 %v2123
        %2153 = vmatprep.subr.mxu0 0.0
        %2154 = vmatpush1.msra.mxu0 %v2124
        %2155 = vmatprep.subr.mxu0 0.0
        %2156 = vmatpush1.msra.mxu0 %v2125
        %2157 = vmatprep.subr.mxu0 0.0
        %2158 = vmatpush1.msra.mxu0 %v2126
        %2159 = vmatprep.subr.mxu0 0.0
        %2160 = vmatpush1.msra.mxu0 0.0
        %2161 = vmatprep.subr.mxu0 0.0
        %2162 = vmatpush1.msra.mxu0 0.0
        %2163 = vmatprep.subr.mxu0 0.0
        %2164 = vmatpush1.msra.mxu0 0.0
        %2165 = vmatprep.subr.mxu0 0.0
        %2166 = vmatpush1.msra.mxu0 0.0
        %2167 = vmatprep.subr.mxu0 0.0
        %2168 = vmatpush1.msra.mxu0 0.0
        %2169 = vmatprep.subr.mxu0 0.0
        %2170 = vmatpush1.msra.mxu0 0.0
        %2171 = vmatprep.subr.mxu0 0.0
        %2172 = vmatpush1.msra.mxu0 0.0
        %2173 = vmatprep.subr.mxu0 0.0
        %2174 = vmatpush1.msra.mxu0 0.0
        %2175 = vmatprep.subr.mxu0 0.0
        %2176 = vmatpush1.msra.mxu0 0.0
        %2177 = vmatprep.subr.mxu0 0.0
        %2178 = vmatpush1.msra.mxu0 0.0
        %2179 = vmatprep.subr.mxu0 0.0
        %2180 = vmatpush1.msra.mxu0 0.0
        %2181 = vmatprep.subr.mxu0 0.0
        %2182 = vmatpush1.msra.mxu0 0.0
        %2183 = vmatprep.subr.mxu0 0.0
        %2184 = vmatpush1.msra.mxu0 0.0
        %2185 = vmatprep.subr.mxu0 0.0
        %2186 = vmatpush1.msra.mxu0 0.0
        %2187 = vmatprep.subr.mxu0 0.0
        %2188 = vmatpush1.msra.mxu0 0.0
        %2189 = vmatprep.subr.mxu0 0.0
        %2190 = vmatpush1.msra.mxu0 0.0
        %2191 = vmatprep.mubr.f32.mxu0 0.0
        %2192 = vmatmul.mubr.f32.gmra.mrb[0].mxu0 %v645
        %v2193 = vpop.f32.mrb[0].mxu0
        %v2194 = vadd.f32 0.0, %v2193
        %v2195 = vpop.f32.mrb[0].mxu0
        %2196 = vdwg.mxu0
        %2197 = vmatprep.subr.mxu0 0.0
        %2198 = vmatpush1.msra.mxu0 %v2094
        %2199 = vmatprep.subr.mxu0 0.0
        %2200 = vmatpush1.msra.mxu0 %v2095
        %2201 = vmatprep.subr.mxu0 0.0
        %2202 = vmatpush1.msra.mxu0 %v2096
        %2203 = vmatprep.subr.mxu0 0.0
        %2204 = vmatpush1.msra.mxu0 %v2097
        %2205 = vmatprep.subr.mxu0 0.0
        %2206 = vmatpush1.msra.mxu0 %v2098
        %2207 = vmatprep.subr.mxu0 0.0
        %2208 = vmatpush1.msra.mxu0 %v2099
        %2209 = vmatprep.subr.mxu0 0.0
        %2210 = vmatpush1.msra.mxu0 %v2100
        %2211 = vmatprep.subr.mxu0 0.0
        %2212 = vmatpush1.msra.mxu0 %v2101
        %2213 = vmatprep.subr.mxu0 0.0
        %2214 = vmatpush1.msra.mxu0 %v2102
        %2215 = vmatprep.subr.mxu0 0.0
        %2216 = vmatpush1.msra.mxu0 %v2103
        %2217 = vmatprep.subr.mxu0 0.0
        %2218 = vmatpush1.msra.mxu0 %v2104
        %2219 = vmatprep.subr.mxu0 0.0
        %2220 = vmatpush1.msra.mxu0 %v2105
        %2221 = vmatprep.subr.mxu0 0.0
        %2222 = vmatpush1.msra.mxu0 %v2106
        %2223 = vmatprep.subr.mxu0 0.0
        %2224 = vmatpush1.msra.mxu0 %v2107
        %2225 = vmatprep.subr.mxu0 0.0
        %2226 = vmatpush1.msra.mxu0 %v2108
        %2227 = vmatprep.subr.mxu0 0.0
        %2228 = vmatpush1.msra.mxu0 %v2109
        %2229 = vmatprep.subr.mxu0 0.0
        %2230 = vmatpush1.msra.mxu0 0.0
        %2231 = vmatprep.subr.mxu0 0.0
        %2232 = vmatpush1.msra.mxu0 0.0
        %2233 = vmatprep.subr.mxu0 0.0
        %2234 = vmatpush1.msra.mxu0 0.0
        %2235 = vmatprep.subr.mxu0 0.0
        %2236 = vmatpush1.msra.mxu0 0.0
        %2237 = vmatprep.subr.mxu0 0.0
        %2238 = vmatpush1.msra.mxu0 0.0
        %2239 = vmatprep.subr.mxu0 0.0
        %2240 = vmatpush1.msra.mxu0 0.0
        %2241 = vmatprep.subr.mxu0 0.0
        %2242 = vmatpush1.msra.mxu0 0.0
        %2243 = vmatprep.subr.mxu0 0.0
        %2244 = vmatpush1.msra.mxu0 0.0
        %2245 = vmatprep.subr.mxu0 0.0
        %2246 = vmatpush1.msra.mxu0 0.0
        %2247 = vmatprep.subr.mxu0 0.0
        %2248 = vmatpush1.msra.mxu0 0.0
        %2249 = vmatprep.subr.mxu0 0.0
        %2250 = vmatpush1.msra.mxu0 0.0
        %2251 = vmatprep.subr.mxu0 0.0
        %2252 = vmatpush1.msra.mxu0 0.0
        %2253 = vmatprep.subr.mxu0 0.0
        %2254 = vmatpush1.msra.mxu0 0.0
        %2255 = vmatprep.subr.mxu0 0.0
        %2256 = vmatpush1.msra.mxu0 0.0
        %2257 = vmatprep.subr.mxu0 0.0
        %2258 = vmatpush1.msra.mxu0 0.0
        %2259 = vmatprep.subr.mxu0 0.0
        %2260 = vmatpush1.msra.mxu0 0.0
        %2261 = vmatprep.mubr.f32.mxu0 0.0
        %2262 = vmatmul.mubr.f32.gmra.mrb[0].mxu0 %v647
        %v2263 = vpop.f32.mrb[0].mxu0
        %v2264 = vadd.f32 %v2194, %v2263
        %v2265 = vpop.f32.mrb[0].mxu0
        %2266 = vdwg.mxu0
        %s2267 = scalar_lea.vmem [#allocation10], 256
        %v2268 = vld [vmem:[%s2267] sm:$0xff]
        %v2269 = vld [vmem:[%s2267 + $0x8] sm:$0xff]
        %v2270 = vld [vmem:[%s2267 + $0x10] sm:$0xff]
        %v2271 = vld [vmem:[%s2267 + $0x18] sm:$0xff]
        %v2272 = vld [vmem:[%s2267 + $0x20] sm:$0xff]
        %v2273 = vld [vmem:[%s2267 + $0x28] sm:$0xff]
        %v2274 = vld [vmem:[%s2267 + $0x30] sm:$0xff]
        %v2275 = vld [vmem:[%s2267 + $0x38] sm:$0xff]
        %v2276 = vld [vmem:[%s2267 + $0x40] sm:$0xff]
        %v2277 = vld [vmem:[%s2267 + $0x48] sm:$0xff]
        %v2278 = vld [vmem:[%s2267 + $0x50] sm:$0xff]
        %v2279 = vld [vmem:[%s2267 + $0x58] sm:$0xff]
        %v2280 = vld [vmem:[%s2267 + $0x60] sm:$0xff]
        %v2281 = vld [vmem:[%s2267 + $0x68] sm:$0xff]
        %v2282 = vld [vmem:[%s2267 + $0x70] sm:$0xff]
        %v2283 = vld [vmem:[%s2267 + $0x78] sm:$0xff]
        %2284 = vmatprep.subr.mxu0 0.0
        %2285 = vmatpush1.msra.mxu0 %v2268
        %2286 = vmatprep.subr.mxu0 0.0
        %2287 = vmatpush1.msra.mxu0 %v2269
        %2288 = vmatprep.subr.mxu0 0.0
        %2289 = vmatpush1.msra.mxu0 %v2270
        %2290 = vmatprep.subr.mxu0 0.0
        %2291 = vmatpush1.msra.mxu0 %v2271
        %2292 = vmatprep.subr.mxu0 0.0
        %2293 = vmatpush1.msra.mxu0 %v2272
        %2294 = vmatprep.subr.mxu0 0.0
        %2295 = vmatpush1.msra.mxu0 %v2273
        %2296 = vmatprep.subr.mxu0 0.0
        %2297 = vmatpush1.msra.mxu0 %v2274
        %2298 = vmatprep.subr.mxu0 0.0
        %2299 = vmatpush1.msra.mxu0 %v2275
        %2300 = vmatprep.subr.mxu0 0.0
        %2301 = vmatpush1.msra.mxu0 %v2276
        %2302 = vmatprep.subr.mxu0 0.0
        %2303 = vmatpush1.msra.mxu0 %v2277
        %2304 = vmatprep.subr.mxu0 0.0
        %2305 = vmatpush1.msra.mxu0 %v2278
        %2306 = vmatprep.subr.mxu0 0.0
        %2307 = vmatpush1.msra.mxu0 %v2279
        %2308 = vmatprep.subr.mxu0 0.0
        %2309 = vmatpush1.msra.mxu0 %v2280
        %2310 = vmatprep.subr.mxu0 0.0
        %2311 = vmatpush1.msra.mxu0 %v2281
        %2312 = vmatprep.subr.mxu0 0.0
        %2313 = vmatpush1.msra.mxu0 %v2282
        %2314 = vmatprep.subr.mxu0 0.0
        %2315 = vmatpush1.msra.mxu0 %v2283
        %2316 = vmatprep.subr.mxu0 0.0
        %2317 = vmatpush1.msra.mxu0 0.0
        %2318 = vmatprep.subr.mxu0 0.0
        %2319 = vmatpush1.msra.mxu0 0.0
        %2320 = vmatprep.subr.mxu0 0.0
        %2321 = vmatpush1.msra.mxu0 0.0
        %2322 = vmatprep.subr.mxu0 0.0
        %2323 = vmatpush1.msra.mxu0 0.0
        %2324 = vmatprep.subr.mxu0 0.0
        %2325 = vmatpush1.msra.mxu0 0.0
        %2326 = vmatprep.subr.mxu0 0.0
        %2327 = vmatpush1.msra.mxu0 0.0
        %2328 = vmatprep.subr.mxu0 0.0
        %2329 = vmatpush1.msra.mxu0 0.0
        %2330 = vmatprep.subr.mxu0 0.0
        %2331 = vmatpush1.msra.mxu0 0.0
        %2332 = vmatprep.subr.mxu0 0.0
        %2333 = vmatpush1.msra.mxu0 0.0
        %2334 = vmatprep.subr.mxu0 0.0
        %2335 = vmatpush1.msra.mxu0 0.0
        %2336 = vmatprep.subr.mxu0 0.0
        %2337 = vmatpush1.msra.mxu0 0.0
        %2338 = vmatprep.subr.mxu0 0.0
        %2339 = vmatpush1.msra.mxu0 0.0
        %2340 = vmatprep.subr.mxu0 0.0
        %2341 = vmatpush1.msra.mxu0 0.0
        %2342 = vmatprep.subr.mxu0 0.0
        %2343 = vmatpush1.msra.mxu0 0.0
        %2344 = vmatprep.subr.mxu0 0.0
        %2345 = vmatpush1.msra.mxu0 0.0
        %2346 = vmatprep.subr.mxu0 0.0
        %2347 = vmatpush1.msra.mxu0 0.0
        %2348 = vmatprep.mubr.f32.mxu0 0.0
        %2349 = vmatmul.mubr.f32.gmra.mrb[0].mxu0 %v649
        %v2350 = vpop.f32.mrb[0].mxu0
        %v2351 = vadd.f32 0.0, %v2350
        %v2352 = vpop.f32.mrb[0].mxu0
        %2353 = vdwg.mxu0
        %v2354 = vadd.f32 %v2264, %v2351
        %v2355 = vld [vmem:[#allocation11] sm:$0xff]
        %v2356 = vld [vmem:[#allocation11 + $0x8] sm:$0xff]
        %v2357 = vld [vmem:[#allocation11 + $0x10] sm:$0xff]
        %v2358 = vld [vmem:[#allocation11 + $0x18] sm:$0xff]
        %v2359 = vld [vmem:[#allocation11 + $0x20] sm:$0xff]
        %v2360 = vld [vmem:[#allocation11 + $0x28] sm:$0xff]
        %v2361 = vld [vmem:[#allocation11 + $0x30] sm:$0xff]
        %v2362 = vld [vmem:[#allocation11 + $0x38] sm:$0xff]
        %v2363 = vld [vmem:[#allocation11 + $0x40] sm:$0xff]
        %v2364 = vld [vmem:[#allocation11 + $0x48] sm:$0xff]
        %v2365 = vld [vmem:[#allocation11 + $0x50] sm:$0xff]
        %v2366 = vld [vmem:[#allocation11 + $0x58] sm:$0xff]
        %v2367 = vld [vmem:[#allocation11 + $0x60] sm:$0xff]
        %v2368 = vld [vmem:[#allocation11 + $0x68] sm:$0xff]
        %v2369 = vld [vmem:[#allocation11 + $0x70] sm:$0xff]
        %v2370 = vld [vmem:[#allocation11 + $0x78] sm:$0xff]
        %2371 = vmatprep.subr.mxu0 0.0
        %2372 = vmatpush1.msra.mxu0 %v2355
        %2373 = vmatprep.subr.mxu0 0.0
        %2374 = vmatpush1.msra.mxu0 %v2356
        %2375 = vmatprep.subr.mxu0 0.0
        %2376 = vmatpush1.msra.mxu0 %v2357
        %2377 = vmatprep.subr.mxu0 0.0
        %2378 = vmatpush1.msra.mxu0 %v2358
        %2379 = vmatprep.subr.mxu0 0.0
        %2380 = vmatpush1.msra.mxu0 %v2359
        %2381 = vmatprep.subr.mxu0 0.0
        %2382 = vmatpush1.msra.mxu0 %v2360
        %2383 = vmatprep.subr.mxu0 0.0
        %2384 = vmatpush1.msra.mxu0 %v2361
        %2385 = vmatprep.subr.mxu0 0.0
        %2386 = vmatpush1.msra.mxu0 %v2362
        %2387 = vmatprep.subr.mxu0 0.0
        %2388 = vmatpush1.msra.mxu0 %v2363
        %2389 = vmatprep.subr.mxu0 0.0
        %2390 = vmatpush1.msra.mxu0 %v2364
        %2391 = vmatprep.subr.mxu0 0.0
        %2392 = vmatpush1.msra.mxu0 %v2365
        %2393 = vmatprep.subr.mxu0 0.0
        %2394 = vmatpush1.msra.mxu0 %v2366
        %2395 = vmatprep.subr.mxu0 0.0
        %2396 = vmatpush1.msra.mxu0 %v2367
        %2397 = vmatprep.subr.mxu0 0.0
        %2398 = vmatpush1.msra.mxu0 %v2368
        %2399 = vmatprep.subr.mxu0 0.0
        %2400 = vmatpush1.msra.mxu0 %v2369
        %2401 = vmatprep.subr.mxu0 0.0
        %2402 = vmatpush1.msra.mxu0 %v2370
        %2403 = vmatprep.subr.mxu0 0.0
        %2404 = vmatpush1.msra.mxu0 0.0
        %2405 = vmatprep.subr.mxu0 0.0
        %2406 = vmatpush1.msra.mxu0 0.0
        %2407 = vmatprep.subr.mxu0 0.0
        %2408 = vmatpush1.msra.mxu0 0.0
        %2409 = vmatprep.subr.mxu0 0.0
        %2410 = vmatpush1.msra.mxu0 0.0
        %2411 = vmatprep.subr.mxu0 0.0
        %2412 = vmatpush1.msra.mxu0 0.0
        %2413 = vmatprep.subr.mxu0 0.0
        %2414 = vmatpush1.msra.mxu0 0.0
        %2415 = vmatprep.subr.mxu0 0.0
        %2416 = vmatpush1.msra.mxu0 0.0
        %2417 = vmatprep.subr.mxu0 0.0
        %2418 = vmatpush1.msra.mxu0 0.0
        %2419 = vmatprep.subr.mxu0 0.0
        %2420 = vmatpush1.msra.mxu0 0.0
        %2421 = vmatprep.subr.mxu0 0.0
        %2422 = vmatpush1.msra.mxu0 0.0
        %2423 = vmatprep.subr.mxu0 0.0
        %2424 = vmatpush1.msra.mxu0 0.0
        %2425 = vmatprep.subr.mxu0 0.0
        %2426 = vmatpush1.msra.mxu0 0.0
        %2427 = vmatprep.subr.mxu0 0.0
        %2428 = vmatpush1.msra.mxu0 0.0
        %2429 = vmatprep.subr.mxu0 0.0
        %2430 = vmatpush1.msra.mxu0 0.0
        %2431 = vmatprep.subr.mxu0 0.0
        %2432 = vmatpush1.msra.mxu0 0.0
        %2433 = vmatprep.subr.mxu0 0.0
        %2434 = vmatpush1.msra.mxu0 0.0
        %2435 = vmatprep.mubr.f32.mxu0 0.0
        %2436 = vmatmul.mubr.f32.gmra.mrb[0].mxu0 %v2091
        %v2437 = vpop.f32.mrb[0].mxu0
        %v2438 = vadd.f32 0.0, %v2437
        %v2439 = vpop.f32.mrb[0].mxu0
        %2440 = vdwg.mxu0
        %v2441 = vadd.f32 %v2354, %v2438
        %s2442 = scalar_lea.vmem [#allocation11], 128
        %v2443 = vld [vmem:[%s2442] sm:$0xff]
        %v2444 = vld [vmem:[%s2442 + $0x8] sm:$0xff]
        %v2445 = vld [vmem:[%s2442 + $0x10] sm:$0xff]
        %v2446 = vld [vmem:[%s2442 + $0x18] sm:$0xff]
        %v2447 = vld [vmem:[%s2442 + $0x20] sm:$0xff]
        %v2448 = vld [vmem:[%s2442 + $0x28] sm:$0xff]
        %v2449 = vld [vmem:[%s2442 + $0x30] sm:$0xff]
        %v2450 = vld [vmem:[%s2442 + $0x38] sm:$0xff]
        %v2451 = vld [vmem:[%s2442 + $0x40] sm:$0xff]
        %v2452 = vld [vmem:[%s2442 + $0x48] sm:$0xff]
        %v2453 = vld [vmem:[%s2442 + $0x50] sm:$0xff]
        %v2454 = vld [vmem:[%s2442 + $0x58] sm:$0xff]
        %v2455 = vld [vmem:[%s2442 + $0x60] sm:$0xff]
        %v2456 = vld [vmem:[%s2442 + $0x68] sm:$0xff]
        %v2457 = vld [vmem:[%s2442 + $0x70] sm:$0xff]
        %v2458 = vld [vmem:[%s2442 + $0x78] sm:$0xff]
        %2459 = vmatprep.subr.mxu0 0.0
        %2460 = vmatpush1.msra.mxu0 %v2443
        %2461 = vmatprep.subr.mxu0 0.0
        %2462 = vmatpush1.msra.mxu0 %v2444
        %2463 = vmatprep.subr.mxu0 0.0
        %2464 = vmatpush1.msra.mxu0 %v2445
        %2465 = vmatprep.subr.mxu0 0.0
        %2466 = vmatpush1.msra.mxu0 %v2446
        %2467 = vmatprep.subr.mxu0 0.0
        %2468 = vmatpush1.msra.mxu0 %v2447
        %2469 = vmatprep.subr.mxu0 0.0
        %2470 = vmatpush1.msra.mxu0 %v2448
        %2471 = vmatprep.subr.mxu0 0.0
        %2472 = vmatpush1.msra.mxu0 %v2449
        %2473 = vmatprep.subr.mxu0 0.0
        %2474 = vmatpush1.msra.mxu0 %v2450
        %2475 = vmatprep.subr.mxu0 0.0
        %2476 = vmatpush1.msra.mxu0 %v2451
        %2477 = vmatprep.subr.mxu0 0.0
        %2478 = vmatpush1.msra.mxu0 %v2452
        %2479 = vmatprep.subr.mxu0 0.0
        %2480 = vmatpush1.msra.mxu0 %v2453
        %2481 = vmatprep.subr.mxu0 0.0
        %2482 = vmatpush1.msra.mxu0 %v2454
        %2483 = vmatprep.subr.mxu0 0.0
        %2484 = vmatpush1.msra.mxu0 %v2455
        %2485 = vmatprep.subr.mxu0 0.0
        %2486 = vmatpush1.msra.mxu0 %v2456
        %2487 = vmatprep.subr.mxu0 0.0
        %2488 = vmatpush1.msra.mxu0 %v2457
        %2489 = vmatprep.subr.mxu0 0.0
        %2490 = vmatpush1.msra.mxu0 %v2458
        %2491 = vmatprep.subr.mxu0 0.0
        %2492 = vmatpush1.msra.mxu0 0.0
        %2493 = vmatprep.subr.mxu0 0.0
        %2494 = vmatpush1.msra.mxu0 0.0
        %2495 = vmatprep.subr.mxu0 0.0
        %2496 = vmatpush1.msra.mxu0 0.0
        %2497 = vmatprep.subr.mxu0 0.0
        %2498 = vmatpush1.msra.mxu0 0.0
        %2499 = vmatprep.subr.mxu0 0.0
        %2500 = vmatpush1.msra.mxu0 0.0
        %2501 = vmatprep.subr.mxu0 0.0
        %2502 = vmatpush1.msra.mxu0 0.0
        %2503 = vmatprep.subr.mxu0 0.0
        %2504 = vmatpush1.msra.mxu0 0.0
        %2505 = vmatprep.subr.mxu0 0.0
        %2506 = vmatpush1.msra.mxu0 0.0
        %2507 = vmatprep.subr.mxu0 0.0
        %2508 = vmatpush1.msra.mxu0 0.0
        %2509 = vmatprep.subr.mxu0 0.0
        %2510 = vmatpush1.msra.mxu0 0.0
        %2511 = vmatprep.subr.mxu0 0.0
        %2512 = vmatpush1.msra.mxu0 0.0
        %2513 = vmatprep.subr.mxu0 0.0
        %2514 = vmatpush1.msra.mxu0 0.0
        %2515 = vmatprep.subr.mxu0 0.0
        %2516 = vmatpush1.msra.mxu0 0.0
        %2517 = vmatprep.subr.mxu0 0.0
        %2518 = vmatpush1.msra.mxu0 0.0
        %2519 = vmatprep.subr.mxu0 0.0
        %2520 = vmatpush1.msra.mxu0 0.0
        %2521 = vmatprep.subr.mxu0 0.0
        %2522 = vmatpush1.msra.mxu0 0.0
        %2523 = vmatprep.mubr.f32.mxu0 0.0
        %2524 = vmatmul.mubr.f32.gmra.mrb[0].mxu0 %v2089
        %v2525 = vpop.f32.mrb[0].mxu0
        %v2526 = vadd.f32 0.0, %v2525
        %v2527 = vpop.f32.mrb[0].mxu0
        %2528 = vdwg.mxu0
        %v2529 = vadd.f32 %v2441, %v2526
        %s2530 = scalar_lea.vmem [#allocation11], 256
        %v2531 = vld [vmem:[%s2530] sm:$0xff]
        %v2532 = vld [vmem:[%s2530 + $0x8] sm:$0xff]
        %v2533 = vld [vmem:[%s2530 + $0x10] sm:$0xff]
        %v2534 = vld [vmem:[%s2530 + $0x18] sm:$0xff]
        %v2535 = vld [vmem:[%s2530 + $0x20] sm:$0xff]
        %v2536 = vld [vmem:[%s2530 + $0x28] sm:$0xff]
        %v2537 = vld [vmem:[%s2530 + $0x30] sm:$0xff]
        %v2538 = vld [vmem:[%s2530 + $0x38] sm:$0xff]
        %v2539 = vld [vmem:[%s2530 + $0x40] sm:$0xff]
        %v2540 = vld [vmem:[%s2530 + $0x48] sm:$0xff]
        %v2541 = vld [vmem:[%s2530 + $0x50] sm:$0xff]
        %v2542 = vld [vmem:[%s2530 + $0x58] sm:$0xff]
        %v2543 = vld [vmem:[%s2530 + $0x60] sm:$0xff]
        %v2544 = vld [vmem:[%s2530 + $0x68] sm:$0xff]
        %v2545 = vld [vmem:[%s2530 + $0x70] sm:$0xff]
        %v2546 = vld [vmem:[%s2530 + $0x78] sm:$0xff]
        %2547 = vmatprep.subr.mxu0 0.0
        %2548 = vmatpush1.msra.mxu0 %v2531
        %2549 = vmatprep.subr.mxu0 0.0
        %2550 = vmatpush1.msra.mxu0 %v2532
        %2551 = vmatprep.subr.mxu0 0.0
        %2552 = vmatpush1.msra.mxu0 %v2533
        %2553 = vmatprep.subr.mxu0 0.0
        %2554 = vmatpush1.msra.mxu0 %v2534
        %2555 = vmatprep.subr.mxu0 0.0
        %2556 = vmatpush1.msra.mxu0 %v2535
        %2557 = vmatprep.subr.mxu0 0.0
        %2558 = vmatpush1.msra.mxu0 %v2536
        %2559 = vmatprep.subr.mxu0 0.0
        %2560 = vmatpush1.msra.mxu0 %v2537
        %2561 = vmatprep.subr.mxu0 0.0
        %2562 = vmatpush1.msra.mxu0 %v2538
        %2563 = vmatprep.subr.mxu0 0.0
        %2564 = vmatpush1.msra.mxu0 %v2539
        %2565 = vmatprep.subr.mxu0 0.0
        %2566 = vmatpush1.msra.mxu0 %v2540
        %2567 = vmatprep.subr.mxu0 0.0
        %2568 = vmatpush1.msra.mxu0 %v2541
        %2569 = vmatprep.subr.mxu0 0.0
        %2570 = vmatpush1.msra.mxu0 %v2542
        %2571 = vmatprep.subr.mxu0 0.0
        %2572 = vmatpush1.msra.mxu0 %v2543
        %2573 = vmatprep.subr.mxu0 0.0
        %2574 = vmatpush1.msra.mxu0 %v2544
        %2575 = vmatprep.subr.mxu0 0.0
        %2576 = vmatpush1.msra.mxu0 %v2545
        %2577 = vmatprep.subr.mxu0 0.0
        %2578 = vmatpush1.msra.mxu0 %v2546
        %2579 = vmatprep.subr.mxu0 0.0
        %2580 = vmatpush1.msra.mxu0 0.0
        %2581 = vmatprep.subr.mxu0 0.0
        %2582 = vmatpush1.msra.mxu0 0.0
        %2583 = vmatprep.subr.mxu0 0.0
        %2584 = vmatpush1.msra.mxu0 0.0
        %2585 = vmatprep.subr.mxu0 0.0
        %2586 = vmatpush1.msra.mxu0 0.0
        %2587 = vmatprep.subr.mxu0 0.0
        %2588 = vmatpush1.msra.mxu0 0.0
        %2589 = vmatprep.subr.mxu0 0.0
        %2590 = vmatpush1.msra.mxu0 0.0
        %2591 = vmatprep.subr.mxu0 0.0
        %2592 = vmatpush1.msra.mxu0 0.0
        %2593 = vmatprep.subr.mxu0 0.0
        %2594 = vmatpush1.msra.mxu0 0.0
        %2595 = vmatprep.subr.mxu0 0.0
        %2596 = vmatpush1.msra.mxu0 0.0
        %2597 = vmatprep.subr.mxu0 0.0
        %2598 = vmatpush1.msra.mxu0 0.0
        %2599 = vmatprep.subr.mxu0 0.0
        %2600 = vmatpush1.msra.mxu0 0.0
        %2601 = vmatprep.subr.mxu0 0.0
        %2602 = vmatpush1.msra.mxu0 0.0
        %2603 = vmatprep.subr.mxu0 0.0
        %2604 = vmatpush1.msra.mxu0 0.0
        %2605 = vmatprep.subr.mxu0 0.0
        %2606 = vmatpush1.msra.mxu0 0.0
        %2607 = vmatprep.subr.mxu0 0.0
        %2608 = vmatpush1.msra.mxu0 0.0
        %2609 = vmatprep.subr.mxu0 0.0
        %2610 = vmatpush1.msra.mxu0 0.0
        %2611 = vmatprep.mubr.f32.mxu0 0.0
        %2612 = vmatmul.mubr.f32.gmra.mrb[0].mxu0 %v2093
        %v2613 = vpop.f32.mrb[0].mxu0
        %v2614 = vadd.f32 0.0, %v2613
        %v2615 = vpop.f32.mrb[0].mxu0
        %2616 = vdwg.mxu0
        %v2617 = vadd.f32 %v2529, %v2614
        %v2618 = vld [vmem:[%s14] sm:$0x1]
        %v2620 = vlaneseq
        %v2621 = vshrl.u32 %v2620, 7
        %v2622 = vsub.s32 0, %v2621
        %v2623 = vrot.slane %v2618, %v2622
        %v2625 = vadd.f32 %v2617, %v2623
        %v2626 = vrot.slane %v2625, 4
        %v2627 = vadd.f32 %v2625, %v2626
        %v2628 = vrot.slane %v2627, 2
        %v2629 = vadd.f32 %v2627, %v2628
        %v2630 = vrot.slane %v2629, 1
        %v2631 = vadd.f32 %v2629, %v2630
        %v2632 = vld [vmem:[%s15] sm:$0xff]
        %v2633 = vld [vmem:[%s15 + $0x8] sm:$0xff]
        %v2634 = vld [vmem:[%s15 + $0x10] sm:$0xff]
        %v2635 = vld [vmem:[%s15 + $0x18] sm:$0xff]
        %v2636 = vld [vmem:[%s15 + $0x20] sm:$0xff]
        %v2637 = vld [vmem:[%s15 + $0x28] sm:$0xff]
        %v2638 = vld [vmem:[%s15 + $0x30] sm:$0xff]
        %v2639 = vld [vmem:[%s15 + $0x38] sm:$0xff]
        %v2640 = vld [vmem:[%s15 + $0x40] sm:$0xff]
        %v2641 = vld [vmem:[%s15 + $0x48] sm:$0xff]
        %v2642 = vld [vmem:[%s15 + $0x50] sm:$0xff]
        %v2643 = vld [vmem:[%s15 + $0x58] sm:$0xff]
        %v2644 = vld [vmem:[%s15 + $0x60] sm:$0xff]
        %v2645 = vld [vmem:[%s15 + $0x68] sm:$0xff]
        %v2646 = vld [vmem:[%s15 + $0x70] sm:$0xff]
        %v2647 = vld [vmem:[%s15 + $0x78] sm:$0xff]
        %2648 = vmatprep.subr.mxu0 0.0
        %2649 = vmatpush1.msra.mxu0 %v2632
        %2650 = vmatprep.subr.mxu0 0.0
        %2651 = vmatpush1.msra.mxu0 %v2633
        %2652 = vmatprep.subr.mxu0 0.0
        %2653 = vmatpush1.msra.mxu0 %v2634
        %2654 = vmatprep.subr.mxu0 0.0
        %2655 = vmatpush1.msra.mxu0 %v2635
        %2656 = vmatprep.subr.mxu0 0.0
        %2657 = vmatpush1.msra.mxu0 %v2636
        %2658 = vmatprep.subr.mxu0 0.0
        %2659 = vmatpush1.msra.mxu0 %v2637
        %2660 = vmatprep.subr.mxu0 0.0
        %2661 = vmatpush1.msra.mxu0 %v2638
        %2662 = vmatprep.subr.mxu0 0.0
        %2663 = vmatpush1.msra.mxu0 %v2639
        %2664 = vmatprep.subr.mxu0 0.0
        %2665 = vmatpush1.msra.mxu0 %v2640
        %2666 = vmatprep.subr.mxu0 0.0
        %2667 = vmatpush1.msra.mxu0 %v2641
        %2668 = vmatprep.subr.mxu0 0.0
        %2669 = vmatpush1.msra.mxu0 %v2642
        %2670 = vmatprep.subr.mxu0 0.0
        %2671 = vmatpush1.msra.mxu0 %v2643
        %2672 = vmatprep.subr.mxu0 0.0
        %2673 = vmatpush1.msra.mxu0 %v2644
        %2674 = vmatprep.subr.mxu0 0.0
        %2675 = vmatpush1.msra.mxu0 %v2645
        %2676 = vmatprep.subr.mxu0 0.0
        %2677 = vmatpush1.msra.mxu0 %v2646
        %2678 = vmatprep.subr.mxu0 0.0
        %2679 = vmatpush1.msra.mxu0 %v2647
        %2680 = vmatprep.subr.mxu0 0.0
        %2681 = vmatpush1.msra.mxu0 0.0
        %2682 = vmatprep.subr.mxu0 0.0
        %2683 = vmatpush1.msra.mxu0 0.0
        %2684 = vmatprep.subr.mxu0 0.0
        %2685 = vmatpush1.msra.mxu0 0.0
        %2686 = vmatprep.subr.mxu0 0.0
        %2687 = vmatpush1.msra.mxu0 0.0
        %2688 = vmatprep.subr.mxu0 0.0
        %2689 = vmatpush1.msra.mxu0 0.0
        %2690 = vmatprep.subr.mxu0 0.0
        %2691 = vmatpush1.msra.mxu0 0.0
        %2692 = vmatprep.subr.mxu0 0.0
        %2693 = vmatpush1.msra.mxu0 0.0
        %2694 = vmatprep.subr.mxu0 0.0
        %2695 = vmatpush1.msra.mxu0 0.0
        %2696 = vmatprep.subr.mxu0 0.0
        %2697 = vmatpush1.msra.mxu0 0.0
        %2698 = vmatprep.subr.mxu0 0.0
        %2699 = vmatpush1.msra.mxu0 0.0
        %2700 = vmatprep.subr.mxu0 0.0
        %2701 = vmatpush1.msra.mxu0 0.0
        %2702 = vmatprep.subr.mxu0 0.0
        %2703 = vmatpush1.msra.mxu0 0.0
        %2704 = vmatprep.subr.mxu0 0.0
        %2705 = vmatpush1.msra.mxu0 0.0
        %2706 = vmatprep.subr.mxu0 0.0
        %2707 = vmatpush1.msra.mxu0 0.0
        %2708 = vmatprep.subr.mxu0 0.0
        %2709 = vmatpush1.msra.mxu0 0.0
        %2710 = vmatprep.subr.mxu0 0.0
        %2711 = vmatpush1.msra.mxu0 0.0
        %2712 = vmatprep.mubr.f32.mxu0 0.0
        %2713 = vmatmul.mubr.f32.gmra.mrb[0].mxu0 %v2631
        %v2714 = vpop.f32.mrb[0].mxu0
        %v2715 = vadd.f32 0.0, %v2714
        %v2716 = vpop.f32.mrb[0].mxu0
        %2717 = vdwg.mxu0
        %v2718 = vmax.f32 %v2715, 0.0
        %v2719 = vld [vmem:[%s16] sm:$0xf]
        %v2721 = vsel %vm1287, %v2718, 0
        %v2724 = vsel %vm1291, %v2719, 0
        %2726 = vmatprep.subr.mxu0 0.0
        %2727 = vmatpush1.msra.mxu0 %v2724
        %2728 = vmatprep.subr.mxu0 0.0
        %2729 = vmatpush1.msra.mxu0 0.0
        %2730 = vmatprep.subr.mxu0 0.0
        %2731 = vmatpush1.msra.mxu0 0.0
        %2732 = vmatprep.subr.mxu0 0.0
        %2733 = vmatpush1.msra.mxu0 0.0
        %2734 = vmatprep.subr.mxu0 0.0
        %2735 = vmatpush1.msra.mxu0 0.0
        %2736 = vmatprep.subr.mxu0 0.0
        %2737 = vmatpush1.msra.mxu0 0.0
        %2738 = vmatprep.subr.mxu0 0.0
        %2739 = vmatpush1.msra.mxu0 0.0
        %2740 = vmatprep.subr.mxu0 0.0
        %2741 = vmatpush1.msra.mxu0 0.0
        %2742 = vmatprep.subr.mxu0 0.0
        %2743 = vmatpush1.msra.mxu0 0.0
        %2744 = vmatprep.subr.mxu0 0.0
        %2745 = vmatpush1.msra.mxu0 0.0
        %2746 = vmatprep.subr.mxu0 0.0
        %2747 = vmatpush1.msra.mxu0 0.0
        %2748 = vmatprep.subr.mxu0 0.0
        %2749 = vmatpush1.msra.mxu0 0.0
        %2750 = vmatprep.subr.mxu0 0.0
        %2751 = vmatpush1.msra.mxu0 0.0
        %2752 = vmatprep.subr.mxu0 0.0
        %2753 = vmatpush1.msra.mxu0 0.0
        %2754 = vmatprep.subr.mxu0 0.0
        %2755 = vmatpush1.msra.mxu0 0.0
        %2756 = vmatprep.subr.mxu0 0.0
        %2757 = vmatpush1.msra.mxu0 0.0
        %2758 = vmatprep.subr.mxu0 0.0
        %2759 = vmatpush1.msra.mxu0 0.0
        %2760 = vmatprep.subr.mxu0 0.0
        %2761 = vmatpush1.msra.mxu0 0.0
        %2762 = vmatprep.subr.mxu0 0.0
        %2763 = vmatpush1.msra.mxu0 0.0
        %2764 = vmatprep.subr.mxu0 0.0
        %2765 = vmatpush1.msra.mxu0 0.0
        %2766 = vmatprep.subr.mxu0 0.0
        %2767 = vmatpush1.msra.mxu0 0.0
        %2768 = vmatprep.subr.mxu0 0.0
        %2769 = vmatpush1.msra.mxu0 0.0
        %2770 = vmatprep.subr.mxu0 0.0
        %2771 = vmatpush1.msra.mxu0 0.0
        %2772 = vmatprep.subr.mxu0 0.0
        %2773 = vmatpush1.msra.mxu0 0.0
        %2774 = vmatprep.subr.mxu0 0.0
        %2775 = vmatpush1.msra.mxu0 0.0
        %2776 = vmatprep.subr.mxu0 0.0
        %2777 = vmatpush1.msra.mxu0 0.0
        %2778 = vmatprep.subr.mxu0 0.0
        %2779 = vmatpush1.msra.mxu0 0.0
        %2780 = vmatprep.subr.mxu0 0.0
        %2781 = vmatpush1.msra.mxu0 0.0
        %2782 = vmatprep.subr.mxu0 0.0
        %2783 = vmatpush1.msra.mxu0 0.0
        %2784 = vmatprep.subr.mxu0 0.0
        %2785 = vmatpush1.msra.mxu0 0.0
        %2786 = vmatprep.subr.mxu0 0.0
        %2787 = vmatpush1.msra.mxu0 0.0
        %2788 = vmatprep.subr.mxu0 0.0
        %2789 = vmatpush1.msra.mxu0 0.0
        %2790 = vmatprep.mubr.f32.mxu0 0.0
        %2791 = vmatmul.mubr.f32.gmra.mrb[0].mxu0 %v2721
        %v2792 = vpop.f32.mrb[0].mxu0
        %v2793 = vadd.f32 0.0, %v2792
        %v2794 = vpop.f32.mrb[0].mxu0
        %2795 = vdwg.mxu0
        %v2796 = vmul.f32 %v2793, 0.5
        %v2797 = vtanh.pop %v2796
        %v2798 = vadd.f32 %v2797, 1.0
        %v2799 = vmul.f32 %v2798, 0.5
        %v2800 = vlaneseq
        %v2801 = vshrl.u32 %v2800, 7
        %v2802 = vsub.s32 0, %v2801
        %v2803 = vrot.slane %v2799, %v2802
        %v2804 = vmul.f32 %v2625, %v2803
        %v2805 = vadd.f32 %v2804, %v645
        %2806 = vst [vmem:[%s636] sm:$0xff] %v2805
        %s2807 = sand.u32 %s407, 1
        %s2808 = scalar_lea.sflag [#allocation4], %s2807
        %s2809 = sand.u32 %s407, 1
        %s2810 = smul.addr %s2809, 8
        %s2811 = scalar_lea.vmem [#allocation13], %s2810
        // Predicated region
        $region113: #{tpu_custom_call.1} parent=87 // pred_check
          %p2812 = pneg %p417
        $region114: #{tpu_custom_call.1} parent=87 // pred_check_branch
          %2814 = sbr.rel (%p2812) target = $region116
        $region115: #{tpu_custom_call.1} parent=87 // pred_region
          %s2816 = ssub.s32 128, 128
          %2817 = vsyncadd %s2808, %s2816
          %s2818 = smul.addr %s37, 128
          %s2819 = scalar_lea.hbm %s17, %s2818
          %s2821 = sshll.u32 %s2811, 4
          %s2822 = int_to_ptr.vmem [resolvable:$true] %s2821
          %2824 = dma.vmem_to_hbm [thread:$0]  %s2822, 128, %s2819, %s2808
        $region116: #{tpu_custom_call.1} parent=87 // pred_fallthru
          _
      $region88: #{tpu_custom_call.1} parent=5 // pred_fallthru
        _
      %p2825 = scmp.le.s32.totalorder 2, %s32
      // Predicated region
      $region117: #{tpu_custom_call.1} parent=5 // pred_check
        %p2826 = pneg %p2825
      $region118: #{tpu_custom_call.1} parent=5 // pred_check_branch
        %2828 = sbr.rel (%p2826) target = $region120
      $region119: #{tpu_custom_call.1} parent=5 // pred_region
        %s2829 = ssub.s32 %s32, 2
        // Predicated region
        $region121: #{tpu_custom_call.1} parent=119 // pred_check
          %p2830 = pneg %p423
        $region122: #{tpu_custom_call.1} parent=119 // pred_check_branch
          %2832 = sbr.rel (%p2830) target = $region124
        $region123: #{tpu_custom_call.1} parent=119 // pred_region
          %s2833 = sand.u32 %s408, 1
          %s2834 = scalar_lea.sflag [#allocation4], %s2833
          %s2835 = sand.u32 %s408, 1
          %s2836 = smul.addr %s2835, 8
          %s2837 = scalar_lea.vmem [#allocation13], %s2836
          %2838 = dma.done %s2834, 128
        $region124: #{tpu_custom_call.1} parent=119 // pred_fallthru
          _
      $region120: #{tpu_custom_call.1} parent=5 // pred_fallthru
        _
    $region6: #{tpu_custom_call.1} parent=1 // loop_footer
      %s36 = sadd.s32 1, %s32
    $region7: #{tpu_custom_call.1} parent=1 // loop_footer_branch
      %31 = sbr.rel target = $region3
    $region8: #{tpu_custom_call.1} parent=1 // loop_exit
      _
    %2839 = vsyncpa [#allocation3], 1
    %s2840 = scalar_lea.sflag [#allocation3], 1
    %2841 = vsyncpa %s2840, 1
    %2842 = vsyncpa [#allocation6], 1
    %2843 = vsyncpa [#allocation9], 1
    %2844 = vsyncpa [#allocation12], 1
    %2845 = vsyncpa [#allocation4], 1
    %s2846 = scalar_lea.sflag [#allocation4], 1
    %2847 = vsyncpa %s2846, 1

</llo_original>
